<compile_context>
chip_gen: v6e
topology: v6e:2x2x1
jax: 0.10.0
libtpu: 0.0.40
codegen_flags: <defaults>
</compile_context>

<pallas_src>
import functools

import jax
import jax.numpy as jnp
from jax import lax
from jax.experimental import pallas as pl
from jax.experimental.pallas import tpu as pltpu


# ----------------------------------------------------------------------------
# Tunables
# ----------------------------------------------------------------------------
LANE = 128                    # TPU lane width: hidden/effect feature dims padded to this
OUT_LANES = 8                 # predictor output lanes (3 real) -> narrow HBM write
MXU_DTYPE = jnp.float32       # bf16 for more MXU throughput on v5e/v6e/v7x (numerics change)
ACT_DTYPE = jnp.float32       # bf16 halves encoder->MP activation HBM traffic (numerics change)


def _round_up(x, m):
    return (x + m - 1) // m * m


def _tpu_budget():
    """Generation-aware tiling budget (v5e/v6e: 128 MiB VMEM, v7x: 64 MiB per TensorCore)."""
    vmem_phys = 128 * 1024 * 1024
    try:
        vmem_phys = getattr(pltpu.get_tpu_info(), "vmem_capacity_bytes", vmem_phys)
    except Exception:
        pass
    if vmem_phys <= 96 * 1024 * 1024:                  # v7x
        return 512, 256, 48 * 1024 * 1024
    return 1024, 512, 64 * 1024 * 1024                 # v5e / v6e


TILE_ROWS, REL_TILE, VMEM_LIMIT_BYTES = _tpu_budget()


def _pick_tile(rows, max_tile):
    """Pick a tile (multiple of 8) so total padding stays within a few vreg rows."""
    rows8 = _round_up(max(rows, 1), 8)
    if rows8 <= max_tile:
        return rows8, rows8
    n_tiles = -(-rows8 // max_tile)
    tile = _round_up(-(-rows8 // n_tiles), 8)
    return tile, tile * n_tiles


def _mm(a, b):
    """MXU matmul with f32 accumulation; MXU_DTYPE controls operand precision."""
    return jnp.dot(a.astype(MXU_DTYPE), b.astype(MXU_DTYPE),
                   preferred_element_type=jnp.float32)


# ----------------------------------------------------------------------------
# Pallas kernels
# ----------------------------------------------------------------------------
def _mlp3_kernel(x_ref, w0_ref, b0_ref, w1_ref, b1_ref, w2_ref, b2_ref, o_ref, *, final_relu):
    """Fused 3-layer MLP over one row tile (particle / relation Encoder)."""
    h = jnp.maximum(_mm(x_ref[...], w0_ref[...]) + b0_ref[...], 0.0)
    h = jnp.maximum(_mm(h, w1_ref[...]) + b1_ref[...], 0.0)
    y = _mm(h, w2_ref[...]) + b2_ref[...]
    if final_relu:
        y = jnp.maximum(y, 0.0)
    o_ref[...] = y.astype(o_ref.dtype)


def _fused_mp_kernel(pe_ref, re_ref, ridx_ref, rw_ref, sidx_ref, sw_ref,
                     wr_ref, br_ref, wp_ref, bp_ref,
                     pw0_ref, pb0_ref, pw1_ref, pb1_ref, pw2_ref, pb2_ref,
                     o_ref, effect_ref, agg_ref):
    """Message passing + fused predictor tail.  grid = (batch, pstep, relation_tiles).

    Per relation tile: rebuild a bounded (tile, N) weighted one-hot, gather sender/receiver
    effects, relation propagator (single K=3*EF matmul), scatter-add into a VMEM accumulator.
    At the last tile: particle propagator (K=2*EF) with residual + ReLU into the carried
    effect scratch.  At the last pstep: fused non-rigid predictor writes an 8-lane output.
    """
    p = pl.program_id(1)
    t = pl.program_id(2)
    n_steps = pl.num_programs(1)
    n_tiles = pl.num_programs(2)
    n_nodes = pe_ref.shape[0]
    tr = re_ref.shape[0]

    @pl.when(jnp.logical_and(p == 0, t == 0))
    def _():
        effect_ref[...] = pe_ref[...].astype(jnp.float32)

    @pl.when(t == 0)
    def _():
        agg_ref[...] = jnp.zeros_like(agg_ref)      # explicit zero-init per pstep

    # Weighted one-hot incidence operators for THIS relation tile only (bounded VMEM slab).
    # TODO(synk): replace with an index-driven DMA gather / scatter-add at production sizes.
    col = lax.broadcasted_iota(jnp.int32, (tr, n_nodes), 1)
    oh_r = jnp.where(col == ridx_ref[...], rw_ref[...], 0.0).astype(MXU_DTYPE)
    oh_s = jnp.where(col == sidx_ref[...], sw_ref[...], 0.0).astype(MXU_DTYPE)

    effect = effect_ref[...]
    e_r = _mm(oh_r, effect)                         # Rr_tile @ effect   (tr, EF)
    e_s = _mm(oh_s, effect)                         # Rs_tile @ effect   (tr, EF)

    # relation propagator: single K = 3*EF matmul (full MXU depth on v6e/v7x)
    rel_in = jnp.concatenate([re_ref[...].astype(jnp.float32), e_r, e_s], axis=1)
    rel = jnp.maximum(_mm(rel_in, wr_ref[...]) + br_ref[...], 0.0)

    # scatter-add to receivers: agg += Rr_tile^T @ rel (contract dim 0, no transposed copy/DMA)
    agg_ref[...] += lax.dot_general(oh_r, rel.astype(MXU_DTYPE),
                                    (((0,), (0,)), ((), ())),
                                    preferred_element_type=jnp.float32)

    @pl.when(t == n_tiles - 1)
    def _():
        # particle propagator: single K = 2*EF matmul, residual + ReLU
        part_in = jnp.concatenate([pe_ref[...].astype(jnp.float32), agg_ref[...]], axis=1)
        new_eff = jnp.maximum(_mm(part_in, wp_ref[...]) + bp_ref[...] + effect_ref[...], 0.0)
        effect_ref[...] = new_eff

        # fused non-rigid predictor tail: avoids an HBM round trip of (B, N, 128) effects
        @pl.when(p == n_steps - 1)
        def _():
            h = jnp.maximum(_mm(new_eff, pw0_ref[...]) + pb0_ref[...], 0.0)
            h = jnp.maximum(_mm(h, pw1_ref[...]) + pb1_ref[...], 0.0)
            o_ref[...] = _mm(h, pw2_ref[...]) + pb2_ref[...]


# ----------------------------------------------------------------------------
# Pallas wrappers
# ----------------------------------------------------------------------------
def mlp3(x2d, layers, final_relu, out_dtype=jnp.float32):
    """Row-tiled fused 3-layer MLP.  layers = [(w0,b0),(w1,b1),(w2,b2)] (lane-padded, b 2D)."""
    (w0, b0), (w1, b1), (w2, b2) = layers
    rows = x2d.shape[0]
    in_dim, out_dim = w0.shape[0], w2.shape[1]
    if x2d.shape[1] != in_dim:                       # zero-pad layer-0 K dim (sublane aligned)
        x2d = jnp.pad(x2d, ((0, 0), (0, in_dim - x2d.shape[1])))
    tr, rows_p = _pick_tile(rows, TILE_ROWS)
    if rows_p != rows:
        x2d = jnp.pad(x2d, ((0, rows_p - rows), (0, 0)))

    full = lambda arr: pl.BlockSpec(arr.shape, lambda i: (0, 0))
    y = pl.pallas_call(
        functools.partial(_mlp3_kernel, final_relu=final_relu),
        out_shape=jax.ShapeDtypeStruct((rows_p, out_dim), out_dtype),
        grid=(rows_p // tr,),
        in_specs=[pl.BlockSpec((tr, in_dim), lambda i: (i, 0)),
                  full(w0), full(b0), full(w1), full(b1), full(w2), full(b2)],
        out_specs=pl.BlockSpec((tr, out_dim), lambda i: (i, 0)),
        compiler_params=pltpu.CompilerParams(
            dimension_semantics=("parallel",),
            vmem_limit_bytes=VMEM_LIMIT_BYTES),
    )(x2d, w0, b0, w1, b1, w2, b2)
    return y[:rows]


def fused_propagation(particle_encode, relation_encode, recv_idx, recv_w, send_idx, send_w,
                      params_p, pstep):
    """All pstep iterations + predictor tail in one pallas_call, relation dim tiled on the grid."""
    B, N, EF = particle_encode.shape
    n_rel = relation_encode.shape[1]

    # Bound the two (tile, N) one-hot slabs to a fraction of the VMEM budget.
    oh_budget = VMEM_LIMIT_BYTES // 4
    bytes_per_rel = 2 * N * jnp.dtype(MXU_DTYPE).itemsize
    max_tr = max(8, min(REL_TILE, (oh_budget // max(bytes_per_rel, 1)) // 8 * 8))
    tr, n_rel_pad = _pick_tile(n_rel, max_tr)
    n_tiles = n_rel_pad // tr

    if n_rel_pad != n_rel:
        padr = n_rel_pad - n_rel
        relation_encode = jnp.pad(relation_encode, ((0, 0), (0, padr), (0, 0)))
        recv_idx = jnp.pad(recv_idx, ((0, 0), (0, padr)))
        send_idx = jnp.pad(send_idx, ((0, 0), (0, padr)))
        recv_w = jnp.pad(recv_w, ((0, 0), (0, padr), (0, 0)))   # zero weight -> no contribution
        send_w = jnp.pad(send_w, ((0, 0), (0, padr), (0, 0)))

    rp = params_p["relation_propagator"]
    pp = params_p["particle_propagator"]
    (pw0, pb0), (pw1, pb1), (pw2, pb2) = params_p["non_rigid_predictor"]
    out_lanes = pw2.shape[1]

    node_map = lambda b, p, t: (b, 0, 0)
    rel_map = lambda b, p, t: (b, t, 0)
    full = lambda arr: pl.BlockSpec(arr.shape, lambda b, p, t: (0, 0))

    motion = pl.pallas_call(
        _fused_mp_kernel,
        out_shape=jax.ShapeDtypeStruct((B, N, out_lanes), jnp.float32),
        grid=(B, pstep, n_tiles),
        in_specs=[
            pl.BlockSpec((None, N, EF), node_map),       # particle_encode (resident per batch)
            pl.BlockSpec((None, tr, EF), rel_map),       # relation_encode tile
            pl.BlockSpec((None, tr, 1), rel_map),        # receiver index tile (int32)
            pl.BlockSpec((None, tr, 1), rel_map),        # receiver weight tile
            pl.BlockSpec((None, tr, 1), rel_map),        # sender index tile (int32)
            pl.BlockSpec((None, tr, 1), rel_map),        # sender weight tile
            full(rp["w"]), full(rp["b"]),
            full(pp["w"]), full(pp["b"]),
            full(pw0), full(pb0), full(pw1), full(pb1), full(pw2), full(pb2),
        ],
        out_specs=pl.BlockSpec((None, N, out_lanes), node_map),
        scratch_shapes=[pltpu.VMEM((N, EF), jnp.float32),   # particle effect (carried over pstep)
                        pltpu.VMEM((N, EF), jnp.float32)],  # Rr^T aggregation accumulator
        compiler_params=pltpu.CompilerParams(
            dimension_semantics=("parallel", "arbitrary", "arbitrary"),
            vmem_limit_bytes=VMEM_LIMIT_BYTES),
    )(particle_encode, relation_encode,
      recv_idx[..., None], recv_w, send_idx[..., None], send_w,
      rp["w"], rp["b"], pp["w"], pp["b"],
      pw0, pb0, pw1, pb1, pw2, pb2)
    return motion


# ----------------------------------------------------------------------------
# Parameters (PyTorch nn.Linear-style init) + lane padding
# ----------------------------------------------------------------------------
def init_linear(key, in_dim, out_dim):
    kw, kb = jax.random.split(key)
    bound = 1.0 / float(in_dim) ** 0.5
    w = jax.random.uniform(kw, (in_dim, out_dim), jnp.float32, -bound, bound)
    b = jax.random.uniform(kb, (out_dim,), jnp.float32, -bound, bound)
    return w, b


def build_params(key, input_dim, rel_input_dim, nf_particle, nf_relation, nf_effect):
    keys = jax.random.split(key, 11)
    return {
        "particle_encoder": [
            init_linear(keys[0], input_dim, nf_particle),
            init_linear(keys[1], nf_particle, nf_particle),
            init_linear(keys[2], nf_particle, nf_effect),
        ],
        "relation_encoder": [
            init_linear(keys[3], rel_input_dim, nf_relation),
            init_linear(keys[4], nf_relation, nf_relation),
            init_linear(keys[5], nf_relation, nf_effect),
        ],
        "particle_propagator": init_linear(keys[6], nf_effect * 2, nf_effect),
        "relation_propagator": init_linear(keys[7], nf_effect * 3, nf_effect),
        "non_rigid_predictor": [
            init_linear(keys[8], nf_effect, nf_effect),
            init_linear(keys[9], nf_effect, nf_effect),
            init_linear(keys[10], nf_effect, 3),
        ],
    }


def _pad2(w, rows, cols):
    return jnp.pad(w, ((0, rows - w.shape[0]), (0, cols - w.shape[1])))


def _pad1(b, n):
    return jnp.pad(b, (0, n - b.shape[0]))


def pad_params(params, input_dim, rel_input_dim, nf_particle, nf_relation, nf_effect):
    """Zero-pad feature dims to LANE (hidden/effect) / 8 (layer-0 K) / OUT_LANES (predictor out).
    Padded rows/cols + zero biases keep padded lanes exactly zero, so results match unpadded."""
    npp = _round_up(nf_particle, LANE)
    nrp = _round_up(nf_relation, LANE)
    efp = _round_up(nf_effect, LANE)
    in_p = _round_up(input_dim, 8)
    rin_p = _round_up(rel_input_dim, 8)
    nf = nf_effect

    def pad_layer(layer, rows, cols):
        w, b = layer
        return _pad2(w, rows, cols), _pad1(b, cols).reshape(1, -1)

    def pad_stacked(w, b, chunks, chunk_rows, cols):
        # block-pad each row group so the in-kernel lane concat lines up with the weight rows
        parts = [_pad2(w[i * chunk_rows:(i + 1) * chunk_rows], cols, cols) for i in range(chunks)]
        return jnp.concatenate(parts, axis=0), _pad1(b, cols).reshape(1, -1)

    pe = params["particle_encoder"]
    re = params["relation_encoder"]
    nr = params["non_rigid_predictor"]
    wr, br = params["relation_propagator"]
    wp, bp = params["particle_propagator"]
    wr_p, br_p = pad_stacked(wr, br, 3, nf, efp)
    wp_p, bp_p = pad_stacked(wp, bp, 2, nf, efp)

    return {
        "EF": efp,
        "particle_encoder": [pad_layer(pe[0], in_p, npp),
                             pad_layer(pe[1], npp, npp),
                             pad_layer(pe[2], npp, efp)],
        "relation_encoder": [pad_layer(re[0], rin_p, nrp),
                             pad_layer(re[1], nrp, nrp),
                             pad_layer(re[2], nrp, efp)],
        "relation_propagator": {"w": wr_p, "b": br_p},
        "particle_propagator": {"w": wp_p, "b": bp_p},
        "non_rigid_predictor": [pad_layer(nr[0], efp, efp),
                                pad_layer(nr[1], efp, efp),
                                pad_layer(nr[2], efp, OUT_LANES)],
    }


# ----------------------------------------------------------------------------
# DynamicsPredictor forward pass (Pallas path)
# ----------------------------------------------------------------------------
def dynamics_predictor_forward(params_p, config, state, attrs, Rr, Rs, p_instance,
                               material_encoding, physics_param,
                               action=None, particle_den=None):
    n_his = config["n_his"]
    B, N = attrs.shape[0], attrs.shape[1]
    n_instance = p_instance.shape[2]
    n_p = p_instance.shape[1]
    n_s = N - n_p
    state_dim = state.shape[3]
    EF = params_p["EF"]
    motion_clamp = 100.0

    # state_normalize is False by default in the module -> identity normalization path
    state_res = state[:, 1:] - state[:, :-1]
    state_cur = state[:, -1:]
    state_norm = jnp.concatenate([state_res, state_cur], axis=1)
    state_norm_t = jnp.transpose(state_norm, (0, 2, 1, 3)).reshape(B, N, n_his * state_dim)

    p_inputs = attrs
    if config["state_dim"] > 0:
        p_inputs = jnp.concatenate([attrs, state_norm_t], axis=2)

    # NOTE: the reference computes `instance_center` here and never uses it -> dead work removed.

    mat = jnp.tile(material_encoding[:, None, :], (1, n_p, 1))
    mat = jnp.concatenate([mat, jnp.zeros((B, n_s, mat.shape[-1]), jnp.float32)], axis=1)
    phys = jnp.tile(physics_param[:, None, :], (1, n_p, 1))
    phys = jnp.concatenate([phys, jnp.zeros((B, n_s, phys.shape[-1]), jnp.float32)], axis=1)
    p_inputs = jnp.concatenate([p_inputs, mat, phys], axis=2)

    if config["action_dim"] > 0:
        p_inputs = jnp.concatenate([p_inputs, action], axis=2)

    pden_full = None
    if config["density_dim"] > 0:
        pden_full = jnp.tile(particle_den[:, None, None], (1, n_p, 1))
        pden_full = jnp.concatenate([pden_full, jnp.zeros((B, n_s, 1), jnp.float32)], axis=1)
        p_inputs = jnp.concatenate([p_inputs, pden_full], axis=2)

    # Rr / Rs are (possibly zero-padded) one-hot incidence matrices -> index gathers replace bmm.
    # NOTE: valid only for non-negative rows with <= 1 nonzero (one-hot / all-zero padding rows).
    recv_idx = jnp.argmax(Rr, axis=2).astype(jnp.int32)
    send_idx = jnp.argmax(Rs, axis=2).astype(jnp.int32)
    recv_w = jnp.max(Rr, axis=2)[..., None]
    send_w = jnp.max(Rs, axis=2)[..., None]
    bidx = jnp.arange(B)[:, None]

    def gather_r(x):          # == Rr.bmm(x) for one-hot / zero rows
        return x[bidx, recv_idx] * recv_w

    def gather_s(x):          # == Rs.bmm(x)
        return x[bidx, send_idx] * send_w

    rel_list = []
    if config["rel_particle_dim"] > 0:
        rel_list += [gather_r(p_inputs), gather_s(p_inputs)]
    if config["rel_attr_dim"] > 0:
        rel_list += [gather_r(attrs), gather_s(attrs)]
    if config["rel_group_dim"] > 0:
        g = jnp.concatenate([p_instance, jnp.zeros((B, n_s, n_instance), jnp.float32)], axis=1)
        rel_list.append(jnp.sum(jnp.abs(gather_r(g) - gather_s(g)), axis=2, keepdims=True))
    if config["rel_distance_dim"] > 0:
        rel_list.append(gather_r(state_norm_t) - gather_s(state_norm_t))
    if config["rel_density_dim"] > 0:
        rel_list.append(gather_r(pden_full) - gather_s(pden_full))
    rel_inputs = jnp.concatenate(rel_list, axis=2)
    n_rel = rel_inputs.shape[1]

    # Encoders (fused, row-tiled 3-layer MLP kernels; outputs lane-padded to EF=128)
    particle_encode = mlp3(p_inputs.reshape(-1, p_inputs.shape[-1]),
                           params_p["particle_encoder"], final_relu=True,
                           out_dtype=ACT_DTYPE).reshape(B, N, EF)
    relation_encode = mlp3(rel_inputs.reshape(-1, rel_inputs.shape[-1]),
                           params_p["relation_encoder"], final_relu=True,
                           out_dtype=ACT_DTYPE).reshape(B, n_rel, EF)

    # Message passing (all pstep iterations, relation-tiled) + fused predictor tail
    motion = fused_propagation(particle_encode, relation_encode,
                               recv_idx, recv_w, send_idx, send_w,
                               params_p, pstep=config["pstep"])

    pred_motion = motion[:, :n_p, :3]
    pred_pos = state[:, -1, :n_p] + jnp.clip(pred_motion, -motion_clamp, motion_clamp)
    return pred_pos, pred_motion


# ----------------------------------------------------------------------------
# Pure-JAX reference (mirrors the PyTorch module for the toy config) for validation
# ----------------------------------------------------------------------------
def reference_forward(params, config, state, attrs, Rr, Rs, p_instance,
                      material_encoding, physics_param):
    n_his = config["n_his"]
    B, N = attrs.shape[0], attrs.shape[1]
    n_p = p_instance.shape[1]
    n_s = N - n_p
    state_dim = state.shape[3]

    def mlp(x, layers, final_relu):
        (w0, b0), (w1, b1), (w2, b2) = layers
        h = jax.nn.relu(x @ w0 + b0)
        h = jax.nn.relu(h @ w1 + b1)
        y = h @ w2 + b2
        return jax.nn.relu(y) if final_relu else y

    state_res = state[:, 1:] - state[:, :-1]
    state_cur = state[:, -1:]
    state_norm = jnp.concatenate([state_res, state_cur], axis=1)
    state_norm_t = jnp.transpose(state_norm, (0, 2, 1, 3)).reshape(B, N, n_his * state_dim)

    p_inputs = jnp.concatenate([attrs, state_norm_t], axis=2)
    mat = jnp.tile(material_encoding[:, None, :], (1, n_p, 1))
    mat = jnp.concatenate([mat, jnp.zeros((B, n_s, mat.shape[-1]))], axis=1)
    phys = jnp.tile(physics_param[:, None, :], (1, n_p, 1))
    phys = jnp.concatenate([phys, jnp.zeros((B, n_s, phys.shape[-1]))], axis=1)
    p_inputs = jnp.concatenate([p_inputs, mat, phys], axis=2)

    bmm = lambda a, b: jnp.einsum("brn,bnf->brf", a, b)
    rel = [bmm(Rr, p_inputs), bmm(Rs, p_inputs), bmm(Rr, attrs), bmm(Rs, attrs)]
    g = jnp.concatenate([p_instance, jnp.zeros((B, n_s, p_instance.shape[2]))], axis=1)
    rel.append(jnp.sum(jnp.abs(bmm(Rr, g) - bmm(Rs, g)), axis=2, keepdims=True))
    rel.append(bmm(Rr, state_norm_t) - bmm(Rs, state_norm_t))
    rel_inputs = jnp.concatenate(rel, axis=2)

    pe = mlp(p_inputs, params["particle_encoder"], True)
    re = mlp(rel_inputs, params["relation_encoder"], True)
    wr, br = params["relation_propagator"]
    wp, bp = params["particle_propagator"]
    Rr_t = jnp.swapaxes(Rr, 1, 2)
    effect = pe
    for _ in range(config["pstep"]):
        e_r = bmm(Rr, effect)
        e_s = bmm(Rs, effect)
        relv = jax.nn.relu(jnp.concatenate([re, e_r, e_s], axis=2) @ wr + br)
        agg = bmm(Rr_t, relv)
        effect = jax.nn.relu(jnp.concatenate([pe, agg], axis=2) @ wp + bp + effect)
    motion = mlp(effect[:, :n_p], params["non_rigid_predictor"], False)
    pred_pos = state[:, -1, :n_p] + jnp.clip(motion, -100.0, 100.0)
    return pred_pos, motion


# ----------------------------------------------------------------------------
# Main
# ----------------------------------------------------------------------------
if __name__ == "__main__":
    key = jax.random.PRNGKey(0)

    B, n_p, n_s = 2, 12, 4
    N = n_p + n_s
    n_rel = 24
    n_instance = 3

    model_config = dict(
        n_his=2, state_dim=3, offset_dim=0, attr_dim=2, action_dim=0,
        density_dim=0, rel_particle_dim=-1, rel_attr_dim=2, rel_group_dim=1,
        rel_distance_dim=3, rel_density_dim=0,
        nf_particle=32, nf_relation=32, nf_effect=32, nf_physics=8,
        pstep=2, verbose=False,
    )
    material_config = dict(material_index=[0, 1])
    material_dim = len(material_config["material_index"])
    physics_dim = 1

    input_dim = (model_config["n_his"] * model_config["state_dim"]
                 + model_config["n_his"] * model_config["offset_dim"]
                 + model_config["attr_dim"] + model_config["action_dim"]
                 + model_config["density_dim"] + material_dim + physics_dim)
    if model_config["rel_particle_dim"] == -1:
        model_config["rel_particle_dim"] = input_dim
    rel_input_dim = (model_config["rel_particle_dim"] * 2
                     + model_config["rel_attr_dim"] * 2
                     + model_config["rel_group_dim"]
                     + model_config["rel_distance_dim"] * model_config["n_his"]
                     + model_config["rel_density_dim"])

    kp, kin = jax.random.split(key)
    params = build_params(kp, input_dim, rel_input_dim,
                          model_config["nf_particle"], model_config["nf_relation"],
                          model_config["nf_effect"])
    params_p = pad_params(params, input_dim, rel_input_dim,
                          model_config["nf_particle"], model_config["nf_relation"],
                          model_config["nf_effect"])

    ks = jax.random.split(kin, 4)
    state = jax.random.normal(ks[0], (B, model_config["n_his"], N, model_config["state_dim"]),
                              jnp.float32)
    attrs = jax.random.normal(ks[1], (B, N, model_config["attr_dim"]), jnp.float32)

    recv = jnp.arange(n_rel) % N
    send = (jnp.arange(n_rel) + 1) % N
    Rr = jnp.tile(jax.nn.one_hot(recv, N, dtype=jnp.float32)[None], (B, 1, 1))
    Rs = jnp.tile(jax.nn.one_hot(send, N, dtype=jnp.float32)[None], (B, 1, 1))

    inst_idx = jnp.arange(n_p) % n_instance
    p_instance = jnp.tile(jax.nn.one_hot(inst_idx, n_instance, dtype=jnp.float32)[None],
                          (B, 1, 1))

    material_encoding = jax.random.normal(ks[2], (B, material_dim), jnp.float32)
    physics_param = jax.random.normal(ks[3], (B, physics_dim), jnp.float32)

    fwd = jax.jit(functools.partial(dynamics_predictor_forward, params_p, model_config))
    pred_pos, pred_motion = fwd(state, attrs, Rr, Rs, p_instance,
                                material_encoding, physics_param)
    pred_pos = jax.block_until_ready(pred_pos)
    pred_motion = jax.block_until_ready(pred_motion)
    assert pred_pos.shape == (B, n_p, 3) and pred_motion.shape == (B, n_p, 3)

    ref_pos, ref_motion = reference_forward(params, model_config, state, attrs, Rr, Rs,
                                            p_instance, material_encoding, physics_param)
    assert jnp.allclose(pred_motion, ref_motion, atol=2e-3, rtol=2e-3), \
        float(jnp.max(jnp.abs(pred_motion - ref_motion)))
    assert jnp.allclose(pred_pos, ref_pos, atol=2e-3, rtol=2e-3), \
        float(jnp.max(jnp.abs(pred_pos - ref_pos)))

    print("KERNEL_OK")
</pallas_src>

<mosaic_0001>
module attributes {stable_mosaic.version = 11 : i64} {
  func.func @_mlp3_kernel(%arg0: i32, %arg1: memref<32x16xf32, #tpu.memory_space<vmem>>, %arg2: memref<16x128xf32, #tpu.memory_space<vmem>>, %arg3: memref<1x128xf32, #tpu.memory_space<vmem>>, %arg4: memref<128x128xf32, #tpu.memory_space<vmem>>, %arg5: memref<1x128xf32, #tpu.memory_space<vmem>>, %arg6: memref<128x128xf32, #tpu.memory_space<vmem>>, %arg7: memref<1x128xf32, #tpu.memory_space<vmem>>, %arg8: memref<32x128xf32, #tpu.memory_space<vmem>>) attributes {dimension_semantics = [#tpu.dimension_semantics<parallel>], iteration_bounds = array<i64: 1>, scalar_prefetch = 0 : i64, scratch_operands = 0 : i64, tpu.core_type = #tpu.core_type<tc>, window_params = [{transform_indices = @transform_0, window_bounds = array<i64: 32, 16>}, {pipeline_mode = #tpu.pipeline_mode<synchronous>, transform_indices = @transform_1, window_bounds = array<i64: 16, 128>}, {pipeline_mode = #tpu.pipeline_mode<synchronous>, transform_indices = @transform_2, window_bounds = array<i64: 1, 128>}, {pipeline_mode = #tpu.pipeline_mode<synchronous>, transform_indices = @transform_3, window_bounds = array<i64: 128, 128>}, {pipeline_mode = #tpu.pipeline_mode<synchronous>, transform_indices = @transform_4, window_bounds = array<i64: 1, 128>}, {pipeline_mode = #tpu.pipeline_mode<synchronous>, transform_indices = @transform_5, window_bounds = array<i64: 128, 128>}, {pipeline_mode = #tpu.pipeline_mode<synchronous>, transform_indices = @transform_6, window_bounds = array<i64: 1, 128>}, {transform_indices = @transform_7, window_bounds = array<i64: 32, 128>}]} {
    %c0 = arith.constant 0 : index
    %c0_0 = arith.constant 0 : index
    %0 = vector.load %arg1[%c0, %c0_0] : memref<32x16xf32, #tpu.memory_space<vmem>>, vector<32x16xf32>
    %c0_1 = arith.constant 0 : index
    %c0_2 = arith.constant 0 : index
    %1 = vector.load %arg2[%c0_1, %c0_2] : memref<16x128xf32, #tpu.memory_space<vmem>>, vector<16x128xf32>
    %cst = arith.constant dense<0.000000e+00> : vector<32x128xf32>
    %2 = tpu.matmul %0, %1, %cst {dimension_numbers = #tpu.dot_dimension_numbers<[1], [0], [0], [1], [0, 0, 1, 1], [], []>} : vector<32x16xf32>, vector<16x128xf32>, vector<32x128xf32> -> vector<32x128xf32>
    %c0_3 = arith.constant 0 : index
    %c0_4 = arith.constant 0 : index
    %3 = vector.load %arg3[%c0_3, %c0_4] : memref<1x128xf32, #tpu.memory_space<vmem>>, vector<1x128xf32>
    %4 = vector.broadcast %3 : vector<1x128xf32> to vector<32x128xf32>
    %5 = arith.addf %2, %4 : vector<32x128xf32>
    %cst_5 = arith.constant 0.000000e+00 : f32
    %6 = vector.broadcast %cst_5 : f32 to vector<32x128xf32>
    %7 = arith.maximumf %5, %6 : vector<32x128xf32>
    %c0_6 = arith.constant 0 : index
    %c0_7 = arith.constant 0 : index
    %8 = vector.load %arg4[%c0_6, %c0_7] : memref<128x128xf32, #tpu.memory_space<vmem>>, vector<128x128xf32>
    %cst_8 = arith.constant dense<0.000000e+00> : vector<32x128xf32>
    %9 = tpu.matmul %7, %8, %cst_8 {dimension_numbers = #tpu.dot_dimension_numbers<[1], [0], [0], [1], [0, 0, 1, 1], [], []>} : vector<32x128xf32>, vector<128x128xf32>, vector<32x128xf32> -> vector<32x128xf32>
    %c0_9 = arith.constant 0 : index
    %c0_10 = arith.constant 0 : index
    %10 = vector.load %arg5[%c0_9, %c0_10] : memref<1x128xf32, #tpu.memory_space<vmem>>, vector<1x128xf32>
    %11 = vector.broadcast %10 : vector<1x128xf32> to vector<32x128xf32>
    %12 = arith.addf %9, %11 : vector<32x128xf32>
    %cst_11 = arith.constant 0.000000e+00 : f32
    %13 = vector.broadcast %cst_11 : f32 to vector<32x128xf32>
    %14 = arith.maximumf %12, %13 : vector<32x128xf32>
    %c0_12 = arith.constant 0 : index
    %c0_13 = arith.constant 0 : index
    %15 = vector.load %arg6[%c0_12, %c0_13] : memref<128x128xf32, #tpu.memory_space<vmem>>, vector<128x128xf32>
    %cst_14 = arith.constant dense<0.000000e+00> : vector<32x128xf32>
    %16 = tpu.matmul %14, %15, %cst_14 {dimension_numbers = #tpu.dot_dimension_numbers<[1], [0], [0], [1], [0, 0, 1, 1], [], []>} : vector<32x128xf32>, vector<128x128xf32>, vector<32x128xf32> -> vector<32x128xf32>
    %c0_15 = arith.constant 0 : index
    %c0_16 = arith.constant 0 : index
    %17 = vector.load %arg7[%c0_15, %c0_16] : memref<1x128xf32, #tpu.memory_space<vmem>>, vector<1x128xf32>
    %18 = vector.broadcast %17 : vector<1x128xf32> to vector<32x128xf32>
    %19 = arith.addf %16, %18 : vector<32x128xf32>
    %cst_17 = arith.constant 0.000000e+00 : f32
    %20 = vector.broadcast %cst_17 : f32 to vector<32x128xf32>
    %21 = arith.maximumf %19, %20 : vector<32x128xf32>
    %c0_18 = arith.constant 0 : index
    %c0_19 = arith.constant 0 : index
    %22 = vector.load %arg8[%c0_18, %c0_19] : memref<32x128xf32, #tpu.memory_space<vmem>>, vector<32x128xf32>
    tpu.vector_store %arg8[%c0_18, %c0_19], %21 {strides = array<i32>} : memref<32x128xf32, #tpu.memory_space<vmem>>, vector<32x128xf32>,
    return
  }
  func.func @transform_0(%arg0: i32) -> (i32, i32) {
    %c0_i32 = arith.constant 0 : i32
    %c0_i32_0 = arith.constant 0 : i32
    return %arg0, %c0_i32 : i32, i32
  }
  func.func @transform_1(%arg0: i32) -> (i32, i32) {
    %c0_i32 = arith.constant 0 : i32
    %c0_i32_0 = arith.constant 0 : i32
    %c0_i32_1 = arith.constant 0 : i32
    return %c0_i32, %c0_i32_0 : i32, i32
  }
  func.func @transform_2(%arg0: i32) -> (i32, i32) {
    %c0_i32 = arith.constant 0 : i32
    %c0_i32_0 = arith.constant 0 : i32
    %c0_i32_1 = arith.constant 0 : i32
    return %c0_i32, %c0_i32_0 : i32, i32
  }
  func.func @transform_3(%arg0: i32) -> (i32, i32) {
    %c0_i32 = arith.constant 0 : i32
    %c0_i32_0 = arith.constant 0 : i32
    %c0_i32_1 = arith.constant 0 : i32
    return %c0_i32, %c0_i32_0 : i32, i32
  }
  func.func @transform_4(%arg0: i32) -> (i32, i32) {
    %c0_i32 = arith.constant 0 : i32
    %c0_i32_0 = arith.constant 0 : i32
    %c0_i32_1 = arith.constant 0 : i32
    return %c0_i32, %c0_i32_0 : i32, i32
  }
  func.func @transform_5(%arg0: i32) -> (i32, i32) {
    %c0_i32 = arith.constant 0 : i32
    %c0_i32_0 = arith.constant 0 : i32
    %c0_i32_1 = arith.constant 0 : i32
    return %c0_i32, %c0_i32_0 : i32, i32
  }
  func.func @transform_6(%arg0: i32) -> (i32, i32) {
    %c0_i32 = arith.constant 0 : i32
    %c0_i32_0 = arith.constant 0 : i32
    %c0_i32_1 = arith.constant 0 : i32
    return %c0_i32, %c0_i32_0 : i32, i32
  }
  func.func @transform_7(%arg0: i32) -> (i32, i32) {
    %c0_i32 = arith.constant 0 : i32
    %c0_i32_0 = arith.constant 0 : i32
    return %arg0, %c0_i32 : i32, i32
  }
}

module attributes {stable_mosaic.version = 11 : i64} {
  func.func @_mlp3_kernel(%arg0: i32, %arg1: memref<48x40xf32, #tpu.memory_space<vmem>>, %arg2: memref<40x128xf32, #tpu.memory_space<vmem>>, %arg3: memref<1x128xf32, #tpu.memory_space<vmem>>, %arg4: memref<128x128xf32, #tpu.memory_space<vmem>>, %arg5: memref<1x128xf32, #tpu.memory_space<vmem>>, %arg6: memref<128x128xf32, #tpu.memory_space<vmem>>, %arg7: memref<1x128xf32, #tpu.memory_space<vmem>>, %arg8: memref<48x128xf32, #tpu.memory_space<vmem>>) attributes {dimension_semantics = [#tpu.dimension_semantics<parallel>], iteration_bounds = array<i64: 1>, scalar_prefetch = 0 : i64, scratch_operands = 0 : i64, tpu.core_type = #tpu.core_type<tc>, window_params = [{transform_indices = @transform_0, window_bounds = array<i64: 48, 40>}, {pipeline_mode = #tpu.pipeline_mode<synchronous>, transform_indices = @transform_1, window_bounds = array<i64: 40, 128>}, {pipeline_mode = #tpu.pipeline_mode<synchronous>, transform_indices = @transform_2, window_bounds = array<i64: 1, 128>}, {pipeline_mode = #tpu.pipeline_mode<synchronous>, transform_indices = @transform_3, window_bounds = array<i64: 128, 128>}, {pipeline_mode = #tpu.pipeline_mode<synchronous>, transform_indices = @transform_4, window_bounds = array<i64: 1, 128>}, {pipeline_mode = #tpu.pipeline_mode<synchronous>, transform_indices = @transform_5, window_bounds = array<i64: 128, 128>}, {pipeline_mode = #tpu.pipeline_mode<synchronous>, transform_indices = @transform_6, window_bounds = array<i64: 1, 128>}, {transform_indices = @transform_7, window_bounds = array<i64: 48, 128>}]} {
    %c0 = arith.constant 0 : index
    %c0_0 = arith.constant 0 : index
    %0 = vector.load %arg1[%c0, %c0_0] : memref<48x40xf32, #tpu.memory_space<vmem>>, vector<48x40xf32>
    %c0_1 = arith.constant 0 : index
    %c0_2 = arith.constant 0 : index
    %1 = vector.load %arg2[%c0_1, %c0_2] : memref<40x128xf32, #tpu.memory_space<vmem>>, vector<40x128xf32>
    %cst = arith.constant dense<0.000000e+00> : vector<48x128xf32>
    %2 = tpu.matmul %0, %1, %cst {dimension_numbers = #tpu.dot_dimension_numbers<[1], [0], [0], [1], [0, 0, 1, 1], [], []>} : vector<48x40xf32>, vector<40x128xf32>, vector<48x128xf32> -> vector<48x128xf32>
    %c0_3 = arith.constant 0 : index
    %c0_4 = arith.constant 0 : index
    %3 = vector.load %arg3[%c0_3, %c0_4] : memref<1x128xf32, #tpu.memory_space<vmem>>, vector<1x128xf32>
    %4 = vector.broadcast %3 : vector<1x128xf32> to vector<48x128xf32>
    %5 = arith.addf %2, %4 : vector<48x128xf32>
    %cst_5 = arith.constant 0.000000e+00 : f32
    %6 = vector.broadcast %cst_5 : f32 to vector<48x128xf32>
    %7 = arith.maximumf %5, %6 : vector<48x128xf32>
    %c0_6 = arith.constant 0 : index
    %c0_7 = arith.constant 0 : index
    %8 = vector.load %arg4[%c0_6, %c0_7] : memref<128x128xf32, #tpu.memory_space<vmem>>, vector<128x128xf32>
    %cst_8 = arith.constant dense<0.000000e+00> : vector<48x128xf32>
    %9 = tpu.matmul %7, %8, %cst_8 {dimension_numbers = #tpu.dot_dimension_numbers<[1], [0], [0], [1], [0, 0, 1, 1], [], []>} : vector<48x128xf32>, vector<128x128xf32>, vector<48x128xf32> -> vector<48x128xf32>
    %c0_9 = arith.constant 0 : index
    %c0_10 = arith.constant 0 : index
    %10 = vector.load %arg5[%c0_9, %c0_10] : memref<1x128xf32, #tpu.memory_space<vmem>>, vector<1x128xf32>
    %11 = vector.broadcast %10 : vector<1x128xf32> to vector<48x128xf32>
    %12 = arith.addf %9, %11 : vector<48x128xf32>
    %cst_11 = arith.constant 0.000000e+00 : f32
    %13 = vector.broadcast %cst_11 : f32 to vector<48x128xf32>
    %14 = arith.maximumf %12, %13 : vector<48x128xf32>
    %c0_12 = arith.constant 0 : index
    %c0_13 = arith.constant 0 : index
    %15 = vector.load %arg6[%c0_12, %c0_13] : memref<128x128xf32, #tpu.memory_space<vmem>>, vector<128x128xf32>
    %cst_14 = arith.constant dense<0.000000e+00> : vector<48x128xf32>
    %16 = tpu.matmul %14, %15, %cst_14 {dimension_numbers = #tpu.dot_dimension_numbers<[1], [0], [0], [1], [0, 0, 1, 1], [], []>} : vector<48x128xf32>, vector<128x128xf32>, vector<48x128xf32> -> vector<48x128xf32>
    %c0_15 = arith.constant 0 : index
    %c0_16 = arith.constant 0 : index
    %17 = vector.load %arg7[%c0_15, %c0_16] : memref<1x128xf32, #tpu.memory_space<vmem>>, vector<1x128xf32>
    %18 = vector.broadcast %17 : vector<1x128xf32> to vector<48x128xf32>
    %19 = arith.addf %16, %18 : vector<48x128xf32>
    %cst_17 = arith.constant 0.000000e+00 : f32
    %20 = vector.broadcast %cst_17 : f32 to vector<48x128xf32>
    %21 = arith.maximumf %19, %20 : vector<48x128xf32>
    %c0_18 = arith.constant 0 : index
    %c0_19 = arith.constant 0 : index
    %22 = vector.load %arg8[%c0_18, %c0_19] : memref<48x128xf32, #tpu.memory_space<vmem>>, vector<48x128xf32>
    tpu.vector_store %arg8[%c0_18, %c0_19], %21 {strides = array<i32>} : memref<48x128xf32, #tpu.memory_space<vmem>>, vector<48x128xf32>,
    return
  }
  func.func @transform_0(%arg0: i32) -> (i32, i32) {
    %c0_i32 = arith.constant 0 : i32
    %c0_i32_0 = arith.constant 0 : i32
    return %arg0, %c0_i32 : i32, i32
  }
  func.func @transform_1(%arg0: i32) -> (i32, i32) {
    %c0_i32 = arith.constant 0 : i32
    %c0_i32_0 = arith.constant 0 : i32
    %c0_i32_1 = arith.constant 0 : i32
    return %c0_i32, %c0_i32_0 : i32, i32
  }
  func.func @transform_2(%arg0: i32) -> (i32, i32) {
    %c0_i32 = arith.constant 0 : i32
    %c0_i32_0 = arith.constant 0 : i32
    %c0_i32_1 = arith.constant 0 : i32
    return %c0_i32, %c0_i32_0 : i32, i32
  }
  func.func @transform_3(%arg0: i32) -> (i32, i32) {
    %c0_i32 = arith.constant 0 : i32
    %c0_i32_0 = arith.constant 0 : i32
    %c0_i32_1 = arith.constant 0 : i32
    return %c0_i32, %c0_i32_0 : i32, i32
  }
  func.func @transform_4(%arg0: i32) -> (i32, i32) {
    %c0_i32 = arith.constant 0 : i32
    %c0_i32_0 = arith.constant 0 : i32
    %c0_i32_1 = arith.constant 0 : i32
    return %c0_i32, %c0_i32_0 : i32, i32
  }
  func.func @transform_5(%arg0: i32) -> (i32, i32) {
    %c0_i32 = arith.constant 0 : i32
    %c0_i32_0 = arith.constant 0 : i32
    %c0_i32_1 = arith.constant 0 : i32
    return %c0_i32, %c0_i32_0 : i32, i32
  }
  func.func @transform_6(%arg0: i32) -> (i32, i32) {
    %c0_i32 = arith.constant 0 : i32
    %c0_i32_0 = arith.constant 0 : i32
    %c0_i32_1 = arith.constant 0 : i32
    return %c0_i32, %c0_i32_0 : i32, i32
  }
  func.func @transform_7(%arg0: i32) -> (i32, i32) {
    %c0_i32 = arith.constant 0 : i32
    %c0_i32_0 = arith.constant 0 : i32
    return %arg0, %c0_i32 : i32, i32
  }
}

module attributes {stable_mosaic.version = 11 : i64} {
  func.func @_fused_mp_kernel(%arg0: i32, %arg1: i32, %arg2: i32, %arg3: memref<1x16x128xf32, #tpu.memory_space<vmem>>, %arg4: memref<1x24x128xf32, #tpu.memory_space<vmem>>, %arg5: memref<1x24x1xi32, #tpu.memory_space<vmem>>, %arg6: memref<1x24x1xf32, #tpu.memory_space<vmem>>, %arg7: memref<1x24x1xi32, #tpu.memory_space<vmem>>, %arg8: memref<1x24x1xf32, #tpu.memory_space<vmem>>, %arg9: memref<384x128xf32, #tpu.memory_space<vmem>>, %arg10: memref<1x128xf32, #tpu.memory_space<vmem>>, %arg11: memref<256x128xf32, #tpu.memory_space<vmem>>, %arg12: memref<1x128xf32, #tpu.memory_space<vmem>>, %arg13: memref<128x128xf32, #tpu.memory_space<vmem>>, %arg14: memref<1x128xf32, #tpu.memory_space<vmem>>, %arg15: memref<128x128xf32, #tpu.memory_space<vmem>>, %arg16: memref<1x128xf32, #tpu.memory_space<vmem>>, %arg17: memref<128x8xf32, #tpu.memory_space<vmem>>, %arg18: memref<1x8xf32, #tpu.memory_space<vmem>>, %arg19: memref<1x16x8xf32, #tpu.memory_space<vmem>>, %arg20: memref<16x128xf32, #tpu.memory_space<vmem>>, %arg21: memref<16x128xf32, #tpu.memory_space<vmem>>) attributes {dimension_semantics = [#tpu.dimension_semantics<parallel>, #tpu.dimension_semantics<arbitrary>, #tpu.dimension_semantics<arbitrary>], iteration_bounds = array<i64: 2, 2, 1>, scalar_prefetch = 0 : i64, scratch_operands = 2 : i64, tpu.core_type = #tpu.core_type<tc>, window_params = [{transform_indices = @transform_0, window_bounds = array<i64: 1, 16, 128>}, {transform_indices = @transform_1, window_bounds = array<i64: 1, 24, 128>}, {transform_indices = @transform_2, window_bounds = array<i64: 1, 24, 1>}, {transform_indices = @transform_3, window_bounds = array<i64: 1, 24, 1>}, {transform_indices = @transform_4, window_bounds = array<i64: 1, 24, 1>}, {transform_indices = @transform_5, window_bounds = array<i64: 1, 24, 1>}, {pipeline_mode = #tpu.pipeline_mode<synchronous>, transform_indices = @transform_6, window_bounds = array<i64: 384, 128>}, {pipeline_mode = #tpu.pipeline_mode<synchronous>, transform_indices = @transform_7, window_bounds = array<i64: 1, 128>}, {pipeline_mode = #tpu.pipeline_mode<synchronous>, transform_indices = @transform_8, window_bounds = array<i64: 256, 128>}, {pipeline_mode = #tpu.pipeline_mode<synchronous>, transform_indices = @transform_9, window_bounds = array<i64: 1, 128>}, {pipeline_mode = #tpu.pipeline_mode<synchronous>, transform_indices = @transform_10, window_bounds = array<i64: 128, 128>}, {pipeline_mode = #tpu.pipeline_mode<synchronous>, transform_indices = @transform_11, window_bounds = array<i64: 1, 128>}, {pipeline_mode = #tpu.pipeline_mode<synchronous>, transform_indices = @transform_12, window_bounds = array<i64: 128, 128>}, {pipeline_mode = #tpu.pipeline_mode<synchronous>, transform_indices = @transform_13, window_bounds = array<i64: 1, 128>}, {pipeline_mode = #tpu.pipeline_mode<synchronous>, transform_indices = @transform_14, window_bounds = array<i64: 128, 8>}, {pipeline_mode = #tpu.pipeline_mode<synchronous>, transform_indices = @transform_15, window_bounds = array<i64: 1, 8>}, {transform_indices = @transform_16, window_bounds = array<i64: 1, 16, 8>}]} {
    %c0_i32 = arith.constant 0 : i32
    %0 = arith.cmpi eq, %arg1, %c0_i32 : i32
    %c0_i32_0 = arith.constant 0 : i32
    %1 = arith.cmpi eq, %arg2, %c0_i32_0 : i32
    %2 = arith.andi %0, %1 : i1
    %3 = arith.extui %2 : i1 to i32
    %c0_i32_1 = arith.constant 0 : i32
    %4 = arith.cmpi ne, %3, %c0_i32_1 : i32
    scf.if %4 {
      %c0_36 = arith.constant 0 : index
      %c0_37 = arith.constant 0 : index
      %c0_38 = arith.constant 0 : index
      %49 = vector.load %arg3[%c0_36, %c0_37, %c0_38] : memref<1x16x128xf32, #tpu.memory_space<vmem>>, vector<1x16x128xf32>
      %50 = vector.shape_cast %49 : vector<1x16x128xf32> to vector<16x128xf32>
      %c0_39 = arith.constant 0 : index
      %c0_40 = arith.constant 0 : index
      %51 = vector.load %arg20[%c0_39, %c0_40] : memref<16x128xf32, #tpu.memory_space<vmem>>, vector<16x128xf32>
      tpu.vector_store %arg20[%c0_39, %c0_40], %50 {strides = array<i32>} : memref<16x128xf32, #tpu.memory_space<vmem>>, vector<16x128xf32>,
    } else {
    }
    %c0_i32_2 = arith.constant 0 : i32
    %5 = arith.cmpi eq, %arg2, %c0_i32_2 : i32
    %6 = arith.extui %5 : i1 to i32
    %c0_i32_3 = arith.constant 0 : i32
    %7 = arith.cmpi ne, %6, %c0_i32_3 : i32
    scf.if %7 {
      %cst_36 = arith.constant 0.000000e+00 : f32
      %49 = vector.broadcast %cst_36 : f32 to vector<16x128xf32>
      %c0_37 = arith.constant 0 : index
      %c0_38 = arith.constant 0 : index
      %50 = vector.load %arg21[%c0_37, %c0_38] : memref<16x128xf32, #tpu.memory_space<vmem>>, vector<16x128xf32>
      tpu.vector_store %arg21[%c0_37, %c0_38], %49 {strides = array<i32>} : memref<16x128xf32, #tpu.memory_space<vmem>>, vector<16x128xf32>,
    } else {
    }
    %8 = tpu.iota {dimensions = array<i32: 1>} : vector<24x16xi32>
    %c0 = arith.constant 0 : index
    %c0_4 = arith.constant 0 : index
    %c0_5 = arith.constant 0 : index
    %9 = vector.load %arg5[%c0, %c0_4, %c0_5] : memref<1x24x1xi32, #tpu.memory_space<vmem>>, vector<1x24x1xi32>
    %10 = vector.shape_cast %9 : vector<1x24x1xi32> to vector<24x1xi32>
    %11 = vector.broadcast %10 : vector<24x1xi32> to vector<24x16xi32>
    %12 = arith.cmpi eq, %8, %11 : vector<24x16xi32>
    %c0_6 = arith.constant 0 : index
    %c0_7 = arith.constant 0 : index
    %c0_8 = arith.constant 0 : index
    %13 = vector.load %arg6[%c0_6, %c0_7, %c0_8] : memref<1x24x1xf32, #tpu.memory_space<vmem>>, vector<1x24x1xf32>
    %14 = vector.shape_cast %13 : vector<1x24x1xf32> to vector<24x1xf32>
    %cst = arith.constant 0.000000e+00 : f32
    %15 = vector.shape_cast %14 : vector<24x1xf32> to vector<24x1xf32>
    %16 = vector.broadcast %15 : vector<24x1xf32> to vector<24x16xf32>
    %17 = vector.broadcast %cst : f32 to vector<24x16xf32>
    %18 = arith.select %12, %16, %17 : vector<24x16xi1>, vector<24x16xf32>
    %c0_9 = arith.constant 0 : index
    %c0_10 = arith.constant 0 : index
    %c0_11 = arith.constant 0 : index
    %19 = vector.load %arg7[%c0_9, %c0_10, %c0_11] : memref<1x24x1xi32, #tpu.memory_space<vmem>>, vector<1x24x1xi32>
    %20 = vector.shape_cast %19 : vector<1x24x1xi32> to vector<24x1xi32>
    %21 = vector.broadcast %20 : vector<24x1xi32> to vector<24x16xi32>
    %22 = arith.cmpi eq, %8, %21 : vector<24x16xi32>
    %c0_12 = arith.constant 0 : index
    %c0_13 = arith.constant 0 : index
    %c0_14 = arith.constant 0 : index
    %23 = vector.load %arg8[%c0_12, %c0_13, %c0_14] : memref<1x24x1xf32, #tpu.memory_space<vmem>>, vector<1x24x1xf32>
    %24 = vector.shape_cast %23 : vector<1x24x1xf32> to vector<24x1xf32>
    %cst_15 = arith.constant 0.000000e+00 : f32
    %25 = vector.shape_cast %24 : vector<24x1xf32> to vector<24x1xf32>
    %26 = vector.broadcast %25 : vector<24x1xf32> to vector<24x16xf32>
    %27 = vector.broadcast %cst_15 : f32 to vector<24x16xf32>
    %28 = arith.select %22, %26, %27 : vector<24x16xi1>, vector<24x16xf32>
    %c0_16 = arith.constant 0 : index
    %c0_17 = arith.constant 0 : index
    %29 = vector.load %arg20[%c0_16, %c0_17] : memref<16x128xf32, #tpu.memory_space<vmem>>, vector<16x128xf32>
    %cst_18 = arith.constant dense<0.000000e+00> : vector<24x128xf32>
    %30 = tpu.matmul %18, %29, %cst_18 {dimension_numbers = #tpu.dot_dimension_numbers<[1], [0], [0], [1], [0, 0, 1, 1], [], []>} : vector<24x16xf32>, vector<16x128xf32>, vector<24x128xf32> -> vector<24x128xf32>
    %cst_19 = arith.constant dense<0.000000e+00> : vector<24x128xf32>
    %31 = tpu.matmul %28, %29, %cst_19 {dimension_numbers = #tpu.dot_dimension_numbers<[1], [0], [0], [1], [0, 0, 1, 1], [], []>} : vector<24x16xf32>, vector<16x128xf32>, vector<24x128xf32> -> vector<24x128xf32>
    %c0_20 = arith.constant 0 : index
    %c0_21 = arith.constant 0 : index
    %c0_22 = arith.constant 0 : index
    %32 = vector.load %arg4[%c0_20, %c0_21, %c0_22] : memref<1x24x128xf32, #tpu.memory_space<vmem>>, vector<1x24x128xf32>
    %33 = vector.shape_cast %32 : vector<1x24x128xf32> to vector<24x128xf32>
    %34 = tpu.concatenate %33, %30, %31 in 1 : vector<24x128xf32>, vector<24x128xf32>, vector<24x128xf32> -> vector<24x384xf32>
    %c0_23 = arith.constant 0 : index
    %c0_24 = arith.constant 0 : index
    %35 = vector.load %arg9[%c0_23, %c0_24] : memref<384x128xf32, #tpu.memory_space<vmem>>, vector<384x128xf32>
    %cst_25 = arith.constant dense<0.000000e+00> : vector<24x128xf32>
    %36 = tpu.matmul %34, %35, %cst_25 {dimension_numbers = #tpu.dot_dimension_numbers<[1], [0], [0], [1], [0, 0, 1, 1], [], []>} : vector<24x384xf32>, vector<384x128xf32>, vector<24x128xf32> -> vector<24x128xf32>
    %c0_26 = arith.constant 0 : index
    %c0_27 = arith.constant 0 : index
    %37 = vector.load %arg10[%c0_26, %c0_27] : memref<1x128xf32, #tpu.memory_space<vmem>>, vector<1x128xf32>
    %38 = vector.broadcast %37 : vector<1x128xf32> to vector<24x128xf32>
    %39 = arith.addf %36, %38 : vector<24x128xf32>
    %cst_28 = arith.constant 0.000000e+00 : f32
    %40 = vector.broadcast %cst_28 : f32 to vector<24x128xf32>
    %41 = arith.maximumf %39, %40 : vector<24x128xf32>
    %c0_29 = arith.constant 0 : index
    %c0_30 = arith.constant 0 : index
    %42 = vector.load %arg21[%c0_29, %c0_30] : memref<16x128xf32, #tpu.memory_space<vmem>>, vector<16x128xf32>
    %cst_31 = arith.constant dense<0.000000e+00> : vector<16x128xf32>
    %43 = tpu.matmul %18, %41, %cst_31 {dimension_numbers = #tpu.dot_dimension_numbers<[0], [0], [1], [1], [0, 1, 1, 1], [], []>} : vector<24x16xf32>, vector<24x128xf32>, vector<16x128xf32> -> vector<16x128xf32>
    %44 = arith.addf %42, %43 : vector<16x128xf32>
    %c0_32 = arith.constant 0 : index
    %c0_33 = arith.constant 0 : index
    %45 = vector.load %arg21[%c0_32, %c0_33] : memref<16x128xf32, #tpu.memory_space<vmem>>, vector<16x128xf32>
    tpu.vector_store %arg21[%c0_32, %c0_33], %44 {strides = array<i32>} : memref<16x128xf32, #tpu.memory_space<vmem>>, vector<16x128xf32>,
    %c0_i32_34 = arith.constant 0 : i32
    %46 = arith.cmpi eq, %arg2, %c0_i32_34 : i32
    %47 = arith.extui %46 : i1 to i32
    %c0_i32_35 = arith.constant 0 : i32
    %48 = arith.cmpi ne, %47, %c0_i32_35 : i32
    scf.if %48 {
      %c0_36 = arith.constant 0 : index
      %c0_37 = arith.constant 0 : index
      %c0_38 = arith.constant 0 : index
      %49 = vector.load %arg3[%c0_36, %c0_37, %c0_38] : memref<1x16x128xf32, #tpu.memory_space<vmem>>, vector<1x16x128xf32>
      %50 = vector.shape_cast %49 : vector<1x16x128xf32> to vector<16x128xf32>
      %c0_39 = arith.constant 0 : index
      %c0_40 = arith.constant 0 : index
      %51 = vector.load %arg21[%c0_39, %c0_40] : memref<16x128xf32, #tpu.memory_space<vmem>>, vector<16x128xf32>
      %52 = tpu.concatenate %50, %51 in 1 : vector<16x128xf32>, vector<16x128xf32> -> vector<16x256xf32>
      %c0_41 = arith.constant 0 : index
      %c0_42 = arith.constant 0 : index
      %53 = vector.load %arg11[%c0_41, %c0_42] : memref<256x128xf32, #tpu.memory_space<vmem>>, vector<256x128xf32>
      %cst_43 = arith.constant dense<0.000000e+00> : vector<16x128xf32>
      %54 = tpu.matmul %52, %53, %cst_43 {dimension_numbers = #tpu.dot_dimension_numbers<[1], [0], [0], [1], [0, 0, 1, 1], [], []>} : vector<16x256xf32>, vector<256x128xf32>, vector<16x128xf32> -> vector<16x128xf32>
      %c0_44 = arith.constant 0 : index
      %c0_45 = arith.constant 0 : index
      %55 = vector.load %arg12[%c0_44, %c0_45] : memref<1x128xf32, #tpu.memory_space<vmem>>, vector<1x128xf32>
      %56 = vector.broadcast %55 : vector<1x128xf32> to vector<16x128xf32>
      %57 = arith.addf %54, %56 : vector<16x128xf32>
      %c0_46 = arith.constant 0 : index
      %c0_47 = arith.constant 0 : index
      %58 = vector.load %arg20[%c0_46, %c0_47] : memref<16x128xf32, #tpu.memory_space<vmem>>, vector<16x128xf32>
      %59 = arith.addf %57, %58 : vector<16x128xf32>
      %cst_48 = arith.constant 0.000000e+00 : f32
      %60 = vector.broadcast %cst_48 : f32 to vector<16x128xf32>
      %61 = arith.maximumf %59, %60 : vector<16x128xf32>
      %c0_49 = arith.constant 0 : index
      %c0_50 = arith.constant 0 : index
      %62 = vector.load %arg20[%c0_49, %c0_50] : memref<16x128xf32, #tpu.memory_space<vmem>>, vector<16x128xf32>
      tpu.vector_store %arg20[%c0_49, %c0_50], %61 {strides = array<i32>} : memref<16x128xf32, #tpu.memory_space<vmem>>, vector<16x128xf32>,
      %c1_i32 = arith.constant 1 : i32
      %63 = arith.cmpi eq, %arg1, %c1_i32 : i32
      %64 = arith.extui %63 : i1 to i32
      %c0_i32_51 = arith.constant 0 : i32
      %65 = arith.cmpi ne, %64, %c0_i32_51 : i32
      scf.if %65 {
        %c0_52 = arith.constant 0 : index
        %c0_53 = arith.constant 0 : index
        %66 = vector.load %arg13[%c0_52, %c0_53] : memref<128x128xf32, #tpu.memory_space<vmem>>, vector<128x128xf32>
        %cst_54 = arith.constant dense<0.000000e+00> : vector<16x128xf32>
        %67 = tpu.matmul %61, %66, %cst_54 {dimension_numbers = #tpu.dot_dimension_numbers<[1], [0], [0], [1], [0, 0, 1, 1], [], []>} : vector<16x128xf32>, vector<128x128xf32>, vector<16x128xf32> -> vector<16x128xf32>
        %c0_55 = arith.constant 0 : index
        %c0_56 = arith.constant 0 : index
        %68 = vector.load %arg14[%c0_55, %c0_56] : memref<1x128xf32, #tpu.memory_space<vmem>>, vector<1x128xf32>
        %69 = vector.broadcast %68 : vector<1x128xf32> to vector<16x128xf32>
        %70 = arith.addf %67, %69 : vector<16x128xf32>
        %cst_57 = arith.constant 0.000000e+00 : f32
        %71 = vector.broadcast %cst_57 : f32 to vector<16x128xf32>
        %72 = arith.maximumf %70, %71 : vector<16x128xf32>
        %c0_58 = arith.constant 0 : index
        %c0_59 = arith.constant 0 : index
        %73 = vector.load %arg15[%c0_58, %c0_59] : memref<128x128xf32, #tpu.memory_space<vmem>>, vector<128x128xf32>
        %cst_60 = arith.constant dense<0.000000e+00> : vector<16x128xf32>
        %74 = tpu.matmul %72, %73, %cst_60 {dimension_numbers = #tpu.dot_dimension_numbers<[1], [0], [0], [1], [0, 0, 1, 1], [], []>} : vector<16x128xf32>, vector<128x128xf32>, vector<16x128xf32> -> vector<16x128xf32>
        %c0_61 = arith.constant 0 : index
        %c0_62 = arith.constant 0 : index
        %75 = vector.load %arg16[%c0_61, %c0_62] : memref<1x128xf32, #tpu.memory_space<vmem>>, vector<1x128xf32>
        %76 = vector.broadcast %75 : vector<1x128xf32> to vector<16x128xf32>
        %77 = arith.addf %74, %76 : vector<16x128xf32>
        %cst_63 = arith.constant 0.000000e+00 : f32
        %78 = vector.broadcast %cst_63 : f32 to vector<16x128xf32>
        %79 = arith.maximumf %77, %78 : vector<16x128xf32>
        %c0_64 = arith.constant 0 : index
        %c0_65 = arith.constant 0 : index
        %80 = vector.load %arg17[%c0_64, %c0_65] : memref<128x8xf32, #tpu.memory_space<vmem>>, vector<128x8xf32>
        %cst_66 = arith.constant dense<0.000000e+00> : vector<16x8xf32>
        %81 = tpu.matmul %79, %80, %cst_66 {dimension_numbers = #tpu.dot_dimension_numbers<[1], [0], [0], [1], [0, 0, 1, 1], [], []>} : vector<16x128xf32>, vector<128x8xf32>, vector<16x8xf32> -> vector<16x8xf32>
        %c0_67 = arith.constant 0 : index
        %c0_68 = arith.constant 0 : index
        %82 = vector.load %arg18[%c0_67, %c0_68] : memref<1x8xf32, #tpu.memory_space<vmem>>, vector<1x8xf32>
        %83 = vector.broadcast %82 : vector<1x8xf32> to vector<16x8xf32>
        %84 = arith.addf %81, %83 : vector<16x8xf32>
        %c0_69 = arith.constant 0 : index
        %c0_70 = arith.constant 0 : index
        %c0_71 = arith.constant 0 : index
        %85 = vector.load %arg19[%c0_69, %c0_70, %c0_71] : memref<1x16x8xf32, #tpu.memory_space<vmem>>, vector<1x16x8xf32>
        %86 = vector.shape_cast %85 : vector<1x16x8xf32> to vector<16x8xf32>
        %87 = vector.shape_cast %84 : vector<16x8xf32> to vector<1x16x8xf32>
        tpu.vector_store %arg19[%c0_69, %c0_70, %c0_71], %87 {strides = array<i32>} : memref<1x16x8xf32, #tpu.memory_space<vmem>>, vector<1x16x8xf32>,
      } else {
      }
    } else {
    }
    return
  }
  func.func @transform_0(%arg0: i32, %arg1: i32, %arg2: i32) -> (i32, i32, i32) {
    %c0_i32 = arith.constant 0 : i32
    %c0_i32_0 = arith.constant 0 : i32
    %c0_i32_1 = arith.constant 0 : i32
    return %arg0, %c0_i32, %c0_i32_0 : i32, i32, i32
  }
  func.func @transform_1(%arg0: i32, %arg1: i32, %arg2: i32) -> (i32, i32, i32) {
    %c0_i32 = arith.constant 0 : i32
    %c0_i32_0 = arith.constant 0 : i32
    return %arg0, %arg2, %c0_i32 : i32, i32, i32
  }
  func.func @transform_2(%arg0: i32, %arg1: i32, %arg2: i32) -> (i32, i32, i32) {
    %c0_i32 = arith.constant 0 : i32
    %c0_i32_0 = arith.constant 0 : i32
    return %arg0, %arg2, %c0_i32 : i32, i32, i32
  }
  func.func @transform_3(%arg0: i32, %arg1: i32, %arg2: i32) -> (i32, i32, i32) {
    %c0_i32 = arith.constant 0 : i32
    %c0_i32_0 = arith.constant 0 : i32
    return %arg0, %arg2, %c0_i32 : i32, i32, i32
  }
  func.func @transform_4(%arg0: i32, %arg1: i32, %arg2: i32) -> (i32, i32, i32) {
    %c0_i32 = arith.constant 0 : i32
    %c0_i32_0 = arith.constant 0 : i32
    return %arg0, %arg2, %c0_i32 : i32, i32, i32
  }
  func.func @transform_5(%arg0: i32, %arg1: i32, %arg2: i32) -> (i32, i32, i32) {
    %c0_i32 = arith.constant 0 : i32
    %c0_i32_0 = arith.constant 0 : i32
    return %arg0, %arg2, %c0_i32 : i32, i32, i32
  }
  func.func @transform_6(%arg0: i32, %arg1: i32, %arg2: i32) -> (i32, i32) {
    %c0_i32 = arith.constant 0 : i32
    %c0_i32_0 = arith.constant 0 : i32
    %c0_i32_1 = arith.constant 0 : i32
    return %c0_i32, %c0_i32_0 : i32, i32
  }
  func.func @transform_7(%arg0: i32, %arg1: i32, %arg2: i32) -> (i32, i32) {
    %c0_i32 = arith.constant 0 : i32
    %c0_i32_0 = arith.constant 0 : i32
    %c0_i32_1 = arith.constant 0 : i32
    return %c0_i32, %c0_i32_0 : i32, i32
  }
  func.func @transform_8(%arg0: i32, %arg1: i32, %arg2: i32) -> (i32, i32) {
    %c0_i32 = arith.constant 0 : i32
    %c0_i32_0 = arith.constant 0 : i32
    %c0_i32_1 = arith.constant 0 : i32
    return %c0_i32, %c0_i32_0 : i32, i32
  }
  func.func @transform_9(%arg0: i32, %arg1: i32, %arg2: i32) -> (i32, i32) {
    %c0_i32 = arith.constant 0 : i32
    %c0_i32_0 = arith.constant 0 : i32
    %c0_i32_1 = arith.constant 0 : i32
    return %c0_i32, %c0_i32_0 : i32, i32
  }
  func.func @transform_10(%arg0: i32, %arg1: i32, %arg2: i32) -> (i32, i32) {
    %c0_i32 = arith.constant 0 : i32
    %c0_i32_0 = arith.constant 0 : i32
    %c0_i32_1 = arith.constant 0 : i32
    return %c0_i32, %c0_i32_0 : i32, i32
  }
  func.func @transform_11(%arg0: i32, %arg1: i32, %arg2: i32) -> (i32, i32) {
    %c0_i32 = arith.constant 0 : i32
    %c0_i32_0 = arith.constant 0 : i32
    %c0_i32_1 = arith.constant 0 : i32
    return %c0_i32, %c0_i32_0 : i32, i32
  }
  func.func @transform_12(%arg0: i32, %arg1: i32, %arg2: i32) -> (i32, i32) {
    %c0_i32 = arith.constant 0 : i32
    %c0_i32_0 = arith.constant 0 : i32
    %c0_i32_1 = arith.constant 0 : i32
    return %c0_i32, %c0_i32_0 : i32, i32
  }
  func.func @transform_13(%arg0: i32, %arg1: i32, %arg2: i32) -> (i32, i32) {
    %c0_i32 = arith.constant 0 : i32
    %c0_i32_0 = arith.constant 0 : i32
    %c0_i32_1 = arith.constant 0 : i32
    return %c0_i32, %c0_i32_0 : i32, i32
  }
  func.func @transform_14(%arg0: i32, %arg1: i32, %arg2: i32) -> (i32, i32) {
    %c0_i32 = arith.constant 0 : i32
    %c0_i32_0 = arith.constant 0 : i32
    %c0_i32_1 = arith.constant 0 : i32
    return %c0_i32, %c0_i32_0 : i32, i32
  }
  func.func @transform_15(%arg0: i32, %arg1: i32, %arg2: i32) -> (i32, i32) {
    %c0_i32 = arith.constant 0 : i32
    %c0_i32_0 = arith.constant 0 : i32
    %c0_i32_1 = arith.constant 0 : i32
    return %c0_i32, %c0_i32_0 : i32, i32
  }
  func.func @transform_16(%arg0: i32, %arg1: i32, %arg2: i32) -> (i32, i32, i32) {
    %c0_i32 = arith.constant 0 : i32
    %c0_i32_0 = arith.constant 0 : i32
    %c0_i32_1 = arith.constant 0 : i32
    return %arg0, %c0_i32, %c0_i32_0 : i32, i32, i32
  }
}

</mosaic_0001>

<llo_original>
// kernel: dynamics_predictor_forward.3
$region0: #{dynamics_predictor_forward.3}
  #allocation0 [shape = 'u32[]', space=smem, size = 0x4, offset = 0x4, fixed_abs, tag = 'smem constant byte address 0x4 - core index']
  #allocation1 [shape = 'u32[144,128]{1,0:T(1,128)}', space=vmem, size = 0x12000, scoped, tag = 'internal scratch']
  %s0 = inlined_call_operand.vmem [shape: f32[32,16], index: 0, kind: input, shape index: {}]
  %s1 = inlined_call_operand.vmem [shape: f32[16,128], index: 1, kind: input, shape index: {}]
  %s2 = inlined_call_operand.vmem [shape: f32[1,128], index: 2, kind: input, shape index: {}]
  %s3 = inlined_call_operand.vmem [shape: f32[128,128], index: 3, kind: input, shape index: {}]
  %s4 = inlined_call_operand.vmem [shape: f32[1,128], index: 4, kind: input, shape index: {}]
  %s5 = inlined_call_operand.vmem [shape: f32[128,128], index: 5, kind: input, shape index: {}]
  %s6 = inlined_call_operand.vmem [shape: f32[1,128], index: 6, kind: input, shape index: {}]
  %s7 = inlined_call_operand.vmem [shape: f32[32,128], index: 7, kind: output, shape index: {}]
  %s8 = sld [smem:[#allocation0]]
  $region38: #{dynamics_predictor_forward.3} parent=0
    _
  %s10 = ssub.s32 1, %s8
  %s11 = scalar_select 0, %s10, %s8
  // Predicated region
  $region2: #{dynamics_predictor_forward.3} parent=0 // pred_check
    _
  $region3: #{dynamics_predictor_forward.3} parent=0 // pred_check_branch
    %13 = sbr.rel (0) target = $region5
  $region4: #{dynamics_predictor_forward.3} parent=0 // pred_region
    _
  $region5: #{dynamics_predictor_forward.3} parent=0 // pred_fallthru
    _
  // Predicated region
  $region6: #{dynamics_predictor_forward.3} parent=0 // pred_check
    _
  $region7: #{dynamics_predictor_forward.3} parent=0 // pred_check_branch
    %15 = sbr.rel (0) target = $region9
  $region8: #{dynamics_predictor_forward.3} parent=0 // pred_region
    _
  $region9: #{dynamics_predictor_forward.3} parent=0 // pred_fallthru
    _
  // Predicated region
  $region10: #{dynamics_predictor_forward.3} parent=0 // pred_check
    _
  $region11: #{dynamics_predictor_forward.3} parent=0 // pred_check_branch
    %17 = sbr.rel (0) target = $region13
  $region12: #{dynamics_predictor_forward.3} parent=0 // pred_region
    _
  $region13: #{dynamics_predictor_forward.3} parent=0 // pred_fallthru
    _
  // Predicated region
  $region14: #{dynamics_predictor_forward.3} parent=0 // pred_check
    _
  $region15: #{dynamics_predictor_forward.3} parent=0 // pred_check_branch
    %19 = sbr.rel (0) target = $region17
  $region16: #{dynamics_predictor_forward.3} parent=0 // pred_region
    _
  $region17: #{dynamics_predictor_forward.3} parent=0 // pred_fallthru
    _
  // Predicated region
  $region18: #{dynamics_predictor_forward.3} parent=0 // pred_check
    _
  $region19: #{dynamics_predictor_forward.3} parent=0 // pred_check_branch
    %21 = sbr.rel (0) target = $region21
  $region20: #{dynamics_predictor_forward.3} parent=0 // pred_region
    _
  $region21: #{dynamics_predictor_forward.3} parent=0 // pred_fallthru
    _
  // Predicated region
  $region22: #{dynamics_predictor_forward.3} parent=0 // pred_check
    _
  $region23: #{dynamics_predictor_forward.3} parent=0 // pred_check_branch
    %23 = sbr.rel (0) target = $region25
  $region24: #{dynamics_predictor_forward.3} parent=0 // pred_region
    _
  $region25: #{dynamics_predictor_forward.3} parent=0 // pred_fallthru
    _
  // Predicated region
  $region26: #{dynamics_predictor_forward.3} parent=0 // pred_check
    _
  $region27: #{dynamics_predictor_forward.3} parent=0 // pred_check_branch
    %25 = sbr.rel (0) target = $region29
  $region28: #{dynamics_predictor_forward.3} parent=0 // pred_region
    _
  $region29: #{dynamics_predictor_forward.3} parent=0 // pred_fallthru
    _
  %v26 = vld [vmem:[%s0] sm:$0xff]
  %v27 = vld [vmem:[%s0 + $0x8] sm:$0xff]
  %v28 = vld [vmem:[%s0 + $0x10] sm:$0xff]
  %v29 = vld [vmem:[%s0 + $0x18] sm:$0xff]
  %v30 = vld [vmem:[%s1] sm:$0xff]
  %v31 = vld [vmem:[%s1 + $0x8] sm:$0xff]
  %v32 = vld [vmem:[%s2] sm:$0x1]
  %v34 = vlaneseq
  %v35 = vshrl.u32 %v34, 7
  %v36 = vsub.s32 0, %v35
  %v37 = vrot.slane %v32, %v36
  %vm39 = vcmask 130048
  %v41 = vsel %vm39, %v26, 0
  %v44 = vsel %vm39, %v27, 0
  %v47 = vsel %vm39, %v28, 0
  %v50 = vsel %vm39, %v29, 0
  %52 = vmatprep.subr.mxu0 0.0
  %53 = vmatpush1.msra.mxu0 0.0
  %54 = vmatprep.subr.mxu0 0.0
  %55 = vmatpush1.msra.mxu0 0.0
  %56 = vmatprep.subr.mxu0 0.0
  %57 = vmatpush1.msra.mxu0 0.0
  %58 = vmatprep.subr.mxu0 0.0
  %59 = vmatpush1.msra.mxu0 0.0
  %60 = vmatprep.subr.mxu0 0.0
  %61 = vmatpush1.msra.mxu0 0.0
  %62 = vmatprep.subr.mxu0 0.0
  %63 = vmatpush1.msra.mxu0 0.0
  %64 = vmatprep.subr.mxu0 0.0
  %65 = vmatpush1.msra.mxu0 0.0
  %66 = vmatprep.subr.mxu0 0.0
  %67 = vmatpush1.msra.mxu0 0.0
  %68 = vmatprep.subr.mxu0 0.0
  %69 = vmatpush1.msra.mxu0 0.0
  %70 = vmatprep.subr.mxu0 0.0
  %71 = vmatpush1.msra.mxu0 0.0
  %72 = vmatprep.subr.mxu0 0.0
  %73 = vmatpush1.msra.mxu0 0.0
  %74 = vmatprep.subr.mxu0 0.0
  %75 = vmatpush1.msra.mxu0 0.0
  %76 = vmatprep.subr.mxu0 0.0
  %77 = vmatpush1.msra.mxu0 0.0
  %78 = vmatprep.subr.mxu0 0.0
  %79 = vmatpush1.msra.mxu0 0.0
  %80 = vmatprep.subr.mxu0 0.0
  %81 = vmatpush1.msra.mxu0 %v31
  %82 = vmatprep.subr.mxu0 0.0
  %83 = vmatpush1.msra.mxu0 %v30
  %84 = vmatprep.subr.mxu0 0.0
  %85 = vmatpush2.msra.mxu0 0.0
  %86 = vmatprep.subr.mxu0 0.0
  %87 = vmatpush2.msra.mxu0 0.0
  %88 = vmatprep.subr.mxu0 0.0
  %89 = vmatpush2.msra.mxu0 0.0
  %90 = vmatprep.subr.mxu0 0.0
  %91 = vmatpush2.msra.mxu0 0.0
  %92 = vmatprep.subr.mxu0 0.0
  %93 = vmatpush2.msra.mxu0 0.0
  %94 = vmatprep.subr.mxu0 0.0
  %95 = vmatpush2.msra.mxu0 0.0
  %96 = vmatprep.subr.mxu0 0.0
  %97 = vmatpush2.msra.mxu0 0.0
  %98 = vmatprep.subr.mxu0 0.0
  %99 = vmatpush2.msra.mxu0 0.0
  %100 = vmatprep.subr.mxu0 0.0
  %101 = vmatpush2.msra.mxu0 0.0
  %102 = vmatprep.subr.mxu0 0.0
  %103 = vmatpush2.msra.mxu0 0.0
  %104 = vmatprep.subr.mxu0 0.0
  %105 = vmatpush2.msra.mxu0 0.0
  %106 = vmatprep.subr.mxu0 0.0
  %107 = vmatpush2.msra.mxu0 0.0
  %108 = vmatprep.subr.mxu0 0.0
  %109 = vmatpush2.msra.mxu0 0.0
  %110 = vmatprep.subr.mxu0 0.0
  %111 = vmatpush2.msra.mxu0 0.0
  %112 = vmatprep.subr.mxu0 0.0
  %113 = vmatpush2.msra.mxu0 0.0
  %114 = vmatprep.subr.mxu0 0.0
  %115 = vmatpush2.msra.mxu0 0.0
  %116 = vmatprep.mubr.f32.mxu0 0.0
  %117 = vmatmul.mubr.f32.gmra.mxu0 %v41
  %v118 = vpop.f32.mrf.mxu0
  %v119 = vadd.f32 %v37, %v118
  %v120 = vpop.f32.mrf.mxu0
  %121 = vmatprep.mubr.f32.mxu0 0.0
  %122 = vmatmul.mubr.f32.gmra.mxu0 %v44
  %v123 = vpop.f32.mrf.mxu0
  %v124 = vadd.f32 %v37, %v123
  %v125 = vpop.f32.mrf.mxu0
  %126 = vmatprep.mubr.f32.mxu0 0.0
  %127 = vmatmul.mubr.f32.gmra.mxu0 %v47
  %v128 = vpop.f32.mrf.mxu0
  %v129 = vadd.f32 %v37, %v128
  %v130 = vpop.f32.mrf.mxu0
  %131 = vmatprep.mubr.f32.mxu0 0.0
  %132 = vmatmul.mubr.f32.gmra.mxu0 %v50
  %v133 = vpop.f32.mrf.mxu0
  %v134 = vadd.f32 %v37, %v133
  %v135 = vpop.f32.mrf.mxu0
  %136 = vdwg.mxu0
  %v137 = vmax.f32 %v119, 0.0
  %v138 = vmax.f32 %v124, 0.0
  %v139 = vmax.f32 %v129, 0.0
  %v140 = vmax.f32 %v134, 0.0
  %v141 = vld [vmem:[%s3] sm:$0xff]
  %v142 = vld [vmem:[%s3 + $0x8] sm:$0xff]
  %v143 = vld [vmem:[%s3 + $0x10] sm:$0xff]
  %v144 = vld [vmem:[%s3 + $0x18] sm:$0xff]
  %v145 = vld [vmem:[%s3 + $0x20] sm:$0xff]
  %v146 = vld [vmem:[%s3 + $0x28] sm:$0xff]
  %v147 = vld [vmem:[%s3 + $0x30] sm:$0xff]
  %v148 = vld [vmem:[%s3 + $0x38] sm:$0xff]
  %v149 = vld [vmem:[%s3 + $0x40] sm:$0xff]
  %v150 = vld [vmem:[%s3 + $0x48] sm:$0xff]
  %v151 = vld [vmem:[%s3 + $0x50] sm:$0xff]
  %v152 = vld [vmem:[%s3 + $0x58] sm:$0xff]
  %v153 = vld [vmem:[%s3 + $0x60] sm:$0xff]
  %v154 = vld [vmem:[%s3 + $0x68] sm:$0xff]
  %v155 = vld [vmem:[%s3 + $0x70] sm:$0xff]
  %v156 = vld [vmem:[%s3 + $0x78] sm:$0xff]
  %v157 = vld [vmem:[%s4] sm:$0x1]
  %v159 = vlaneseq
  %v160 = vshrl.u32 %v159, 7
  %v161 = vsub.s32 0, %v160
  %v162 = vrot.slane %v157, %v161
  %164 = vmatprep.subr.mxu0 0.0
  %165 = vmatpush1.msra.mxu0 %v156
  %166 = vmatprep.subr.mxu0 0.0
  %167 = vmatpush1.msra.mxu0 %v155
  %168 = vmatprep.subr.mxu0 0.0
  %169 = vmatpush1.msra.mxu0 %v154
  %170 = vmatprep.subr.mxu0 0.0
  %171 = vmatpush1.msra.mxu0 %v153
  %172 = vmatprep.subr.mxu0 0.0
  %173 = vmatpush1.msra.mxu0 %v152
  %174 = vmatprep.subr.mxu0 0.0
  %175 = vmatpush1.msra.mxu0 %v151
  %176 = vmatprep.subr.mxu0 0.0
  %177 = vmatpush1.msra.mxu0 %v150
  %178 = vmatprep.subr.mxu0 0.0
  %179 = vmatpush1.msra.mxu0 %v149
  %180 = vmatprep.subr.mxu0 0.0
  %181 = vmatpush1.msra.mxu0 %v148
  %182 = vmatprep.subr.mxu0 0.0
  %183 = vmatpush1.msra.mxu0 %v147
  %184 = vmatprep.subr.mxu0 0.0
  %185 = vmatpush1.msra.mxu0 %v146
  %186 = vmatprep.subr.mxu0 0.0
  %187 = vmatpush1.msra.mxu0 %v145
  %188 = vmatprep.subr.mxu0 0.0
  %189 = vmatpush1.msra.mxu0 %v144
  %190 = vmatprep.subr.mxu0 0.0
  %191 = vmatpush1.msra.mxu0 %v143
  %192 = vmatprep.subr.mxu0 0.0
  %193 = vmatpush1.msra.mxu0 %v142
  %194 = vmatprep.subr.mxu0 0.0
  %195 = vmatpush1.msra.mxu0 %v141
  %196 = vmatprep.subr.mxu0 0.0
  %197 = vmatpush2.msra.mxu0 0.0
  %198 = vmatprep.subr.mxu0 0.0
  %199 = vmatpush2.msra.mxu0 0.0
  %200 = vmatprep.subr.mxu0 0.0
  %201 = vmatpush2.msra.mxu0 0.0
  %202 = vmatprep.subr.mxu0 0.0
  %203 = vmatpush2.msra.mxu0 0.0
  %204 = vmatprep.subr.mxu0 0.0
  %205 = vmatpush2.msra.mxu0 0.0
  %206 = vmatprep.subr.mxu0 0.0
  %207 = vmatpush2.msra.mxu0 0.0
  %208 = vmatprep.subr.mxu0 0.0
  %209 = vmatpush2.msra.mxu0 0.0
  %210 = vmatprep.subr.mxu0 0.0
  %211 = vmatpush2.msra.mxu0 0.0
  %212 = vmatprep.subr.mxu0 0.0
  %213 = vmatpush2.msra.mxu0 0.0
  %214 = vmatprep.subr.mxu0 0.0
  %215 = vmatpush2.msra.mxu0 0.0
  %216 = vmatprep.subr.mxu0 0.0
  %217 = vmatpush2.msra.mxu0 0.0
  %218 = vmatprep.subr.mxu0 0.0
  %219 = vmatpush2.msra.mxu0 0.0
  %220 = vmatprep.subr.mxu0 0.0
  %221 = vmatpush2.msra.mxu0 0.0
  %222 = vmatprep.subr.mxu0 0.0
  %223 = vmatpush2.msra.mxu0 0.0
  %224 = vmatprep.subr.mxu0 0.0
  %225 = vmatpush2.msra.mxu0 0.0
  %226 = vmatprep.subr.mxu0 0.0
  %227 = vmatpush2.msra.mxu0 0.0
  %228 = vmatprep.mubr.f32.mxu0 0.0
  %229 = vmatmul.mubr.f32.gmra.mxu0 %v137
  %v230 = vpop.f32.mrf.mxu0
  %v231 = vadd.f32 %v162, %v230
  %v232 = vpop.f32.mrf.mxu0
  %233 = vmatprep.mubr.f32.mxu0 0.0
  %234 = vmatmul.mubr.f32.gmra.mxu0 %v138
  %v235 = vpop.f32.mrf.mxu0
  %v236 = vadd.f32 %v162, %v235
  %v237 = vpop.f32.mrf.mxu0
  %238 = vmatprep.mubr.f32.mxu0 0.0
  %239 = vmatmul.mubr.f32.gmra.mxu0 %v139
  %v240 = vpop.f32.mrf.mxu0
  %v241 = vadd.f32 %v162, %v240
  %v242 = vpop.f32.mrf.mxu0
  %243 = vmatprep.mubr.f32.mxu0 0.0
  %244 = vmatmul.mubr.f32.gmra.mxu0 %v140
  %v245 = vpop.f32.mrf.mxu0
  %v246 = vadd.f32 %v162, %v245
  %v247 = vpop.f32.mrf.mxu0
  %248 = vdwg.mxu0
  %v249 = vmax.f32 %v231, 0.0
  %v250 = vmax.f32 %v236, 0.0
  %v251 = vmax.f32 %v241, 0.0
  %v252 = vmax.f32 %v246, 0.0
  %v253 = vld [vmem:[%s5] sm:$0xff]
  %v254 = vld [vmem:[%s5 + $0x8] sm:$0xff]
  %v255 = vld [vmem:[%s5 + $0x10] sm:$0xff]
  %v256 = vld [vmem:[%s5 + $0x18] sm:$0xff]
  %v257 = vld [vmem:[%s5 + $0x20] sm:$0xff]
  %v258 = vld [vmem:[%s5 + $0x28] sm:$0xff]
  %v259 = vld [vmem:[%s5 + $0x30] sm:$0xff]
  %v260 = vld [vmem:[%s5 + $0x38] sm:$0xff]
  %v261 = vld [vmem:[%s5 + $0x40] sm:$0xff]
  %v262 = vld [vmem:[%s5 + $0x48] sm:$0xff]
  %v263 = vld [vmem:[%s5 + $0x50] sm:$0xff]
  %v264 = vld [vmem:[%s5 + $0x58] sm:$0xff]
  %v265 = vld [vmem:[%s5 + $0x60] sm:$0xff]
  %v266 = vld [vmem:[%s5 + $0x68] sm:$0xff]
  %v267 = vld [vmem:[%s5 + $0x70] sm:$0xff]
  %v268 = vld [vmem:[%s5 + $0x78] sm:$0xff]
  %v269 = vld [vmem:[%s6] sm:$0x1]
  %v271 = vlaneseq
  %v272 = vshrl.u32 %v271, 7
  %v273 = vsub.s32 0, %v272
  %v274 = vrot.slane %v269, %v273
  %276 = vmatprep.subr.mxu0 0.0
  %277 = vmatpush1.msra.mxu0 %v268
  %278 = vmatprep.subr.mxu0 0.0
  %279 = vmatpush1.msra.mxu0 %v267
  %280 = vmatprep.subr.mxu0 0.0
  %281 = vmatpush1.msra.mxu0 %v266
  %282 = vmatprep.subr.mxu0 0.0
  %283 = vmatpush1.msra.mxu0 %v265
  %284 = vmatprep.subr.mxu0 0.0
  %285 = vmatpush1.msra.mxu0 %v264
  %286 = vmatprep.subr.mxu0 0.0
  %287 = vmatpush1.msra.mxu0 %v263
  %288 = vmatprep.subr.mxu0 0.0
  %289 = vmatpush1.msra.mxu0 %v262
  %290 = vmatprep.subr.mxu0 0.0
  %291 = vmatpush1.msra.mxu0 %v261
  %292 = vmatprep.subr.mxu0 0.0
  %293 = vmatpush1.msra.mxu0 %v260
  %294 = vmatprep.subr.mxu0 0.0
  %295 = vmatpush1.msra.mxu0 %v259
  %296 = vmatprep.subr.mxu0 0.0
  %297 = vmatpush1.msra.mxu0 %v258
  %298 = vmatprep.subr.mxu0 0.0
  %299 = vmatpush1.msra.mxu0 %v257
  %300 = vmatprep.subr.mxu0 0.0
  %301 = vmatpush1.msra.mxu0 %v256
  %302 = vmatprep.subr.mxu0 0.0
  %303 = vmatpush1.msra.mxu0 %v255
  %304 = vmatprep.subr.mxu0 0.0
  %305 = vmatpush1.msra.mxu0 %v254
  %306 = vmatprep.subr.mxu0 0.0
  %307 = vmatpush1.msra.mxu0 %v253
  %308 = vmatprep.subr.mxu0 0.0
  %309 = vmatpush2.msra.mxu0 0.0
  %310 = vmatprep.subr.mxu0 0.0
  %311 = vmatpush2.msra.mxu0 0.0
  %312 = vmatprep.subr.mxu0 0.0
  %313 = vmatpush2.msra.mxu0 0.0
  %314 = vmatprep.subr.mxu0 0.0
  %315 = vmatpush2.msra.mxu0 0.0
  %316 = vmatprep.subr.mxu0 0.0
  %317 = vmatpush2.msra.mxu0 0.0
  %318 = vmatprep.subr.mxu0 0.0
  %319 = vmatpush2.msra.mxu0 0.0
  %320 = vmatprep.subr.mxu0 0.0
  %321 = vmatpush2.msra.mxu0 0.0
  %322 = vmatprep.subr.mxu0 0.0
  %323 = vmatpush2.msra.mxu0 0.0
  %324 = vmatprep.subr.mxu0 0.0
  %325 = vmatpush2.msra.mxu0 0.0
  %326 = vmatprep.subr.mxu0 0.0
  %327 = vmatpush2.msra.mxu0 0.0
  %328 = vmatprep.subr.mxu0 0.0
  %329 = vmatpush2.msra.mxu0 0.0
  %330 = vmatprep.subr.mxu0 0.0
  %331 = vmatpush2.msra.mxu0 0.0
  %332 = vmatprep.subr.mxu0 0.0
  %333 = vmatpush2.msra.mxu0 0.0
  %334 = vmatprep.subr.mxu0 0.0
  %335 = vmatpush2.msra.mxu0 0.0
  %336 = vmatprep.subr.mxu0 0.0
  %337 = vmatpush2.msra.mxu0 0.0
  %338 = vmatprep.subr.mxu0 0.0
  %339 = vmatpush2.msra.mxu0 0.0
  %340 = vmatprep.mubr.f32.mxu0 0.0
  %341 = vmatmul.mubr.f32.gmra.mxu0 %v249
  %v342 = vpop.f32.mrf.mxu0
  %v343 = vadd.f32 %v274, %v342
  %v344 = vpop.f32.mrf.mxu0
  %345 = vmatprep.mubr.f32.mxu0 0.0
  %346 = vmatmul.mubr.f32.gmra.mxu0 %v250
  %v347 = vpop.f32.mrf.mxu0
  %v348 = vadd.f32 %v274, %v347
  %v349 = vpop.f32.mrf.mxu0
  %350 = vmatprep.mubr.f32.mxu0 0.0
  %351 = vmatmul.mubr.f32.gmra.mxu0 %v251
  %v352 = vpop.f32.mrf.mxu0
  %v353 = vadd.f32 %v274, %v352
  %v354 = vpop.f32.mrf.mxu0
  %355 = vmatprep.mubr.f32.mxu0 0.0
  %356 = vmatmul.mubr.f32.gmra.mxu0 %v252
  %v357 = vpop.f32.mrf.mxu0
  %v358 = vadd.f32 %v274, %v357
  %v359 = vpop.f32.mrf.mxu0
  %360 = vdwg.mxu0
  %v361 = vmax.f32 %v343, 0.0
  %v362 = vmax.f32 %v348, 0.0
  %v363 = vmax.f32 %v353, 0.0
  %v364 = vmax.f32 %v358, 0.0
  %365 = vst [vmem:[%s7] sm:$0xff] %v361
  %366 = vst [vmem:[%s7 + $0x8] sm:$0xff] %v362
  %367 = vst [vmem:[%s7 + $0x10] sm:$0xff] %v363
  %368 = vst [vmem:[%s7 + $0x18] sm:$0xff] %v364
  // Predicated region
  $region30: #{dynamics_predictor_forward.3} parent=0 // pred_check
    _
  $region31: #{dynamics_predictor_forward.3} parent=0 // pred_check_branch
    %370 = sbr.rel (0) target = $region33
  $region32: #{dynamics_predictor_forward.3} parent=0 // pred_region
    _
  $region33: #{dynamics_predictor_forward.3} parent=0 // pred_fallthru
    _
  // Predicated region
  $region34: #{dynamics_predictor_forward.3} parent=0 // pred_check
    _
  $region35: #{dynamics_predictor_forward.3} parent=0 // pred_check_branch
    %372 = sbr.rel (0) target = $region37
  $region36: #{dynamics_predictor_forward.3} parent=0 // pred_region
    _
  $region37: #{dynamics_predictor_forward.3} parent=0 // pred_fallthru
    _

// kernel: dynamics_predictor_forward.4
$region0: #{dynamics_predictor_forward.4}
  #allocation0 [shape = 'u32[]', space=smem, size = 0x4, offset = 0x4, fixed_abs, tag = 'smem constant byte address 0x4 - core index']
  #allocation1 [shape = 'u32[144,128]{1,0:T(1,128)}', space=vmem, size = 0x12000, scoped, tag = 'internal scratch']
  %s0 = inlined_call_operand.vmem [shape: f32[48,40], index: 0, kind: input, shape index: {}]
  %s1 = inlined_call_operand.vmem [shape: f32[40,128], index: 1, kind: input, shape index: {}]
  %s2 = inlined_call_operand.vmem [shape: f32[1,128], index: 2, kind: input, shape index: {}]
  %s3 = inlined_call_operand.vmem [shape: f32[128,128], index: 3, kind: input, shape index: {}]
  %s4 = inlined_call_operand.vmem [shape: f32[1,128], index: 4, kind: input, shape index: {}]
  %s5 = inlined_call_operand.vmem [shape: f32[128,128], index: 5, kind: input, shape index: {}]
  %s6 = inlined_call_operand.vmem [shape: f32[1,128], index: 6, kind: input, shape index: {}]
  %s7 = inlined_call_operand.vmem [shape: f32[48,128], index: 7, kind: output, shape index: {}]
  %s8 = sld [smem:[#allocation0]]
  $region38: #{dynamics_predictor_forward.4} parent=0
    _
  %s10 = ssub.s32 1, %s8
  %s11 = scalar_select 0, %s10, %s8
  // Predicated region
  $region2: #{dynamics_predictor_forward.4} parent=0 // pred_check
    _
  $region3: #{dynamics_predictor_forward.4} parent=0 // pred_check_branch
    %13 = sbr.rel (0) target = $region5
  $region4: #{dynamics_predictor_forward.4} parent=0 // pred_region
    _
  $region5: #{dynamics_predictor_forward.4} parent=0 // pred_fallthru
    _
  // Predicated region
  $region6: #{dynamics_predictor_forward.4} parent=0 // pred_check
    _
  $region7: #{dynamics_predictor_forward.4} parent=0 // pred_check_branch
    %15 = sbr.rel (0) target = $region9
  $region8: #{dynamics_predictor_forward.4} parent=0 // pred_region
    _
  $region9: #{dynamics_predictor_forward.4} parent=0 // pred_fallthru
    _
  // Predicated region
  $region10: #{dynamics_predictor_forward.4} parent=0 // pred_check
    _
  $region11: #{dynamics_predictor_forward.4} parent=0 // pred_check_branch
    %17 = sbr.rel (0) target = $region13
  $region12: #{dynamics_predictor_forward.4} parent=0 // pred_region
    _
  $region13: #{dynamics_predictor_forward.4} parent=0 // pred_fallthru
    _
  // Predicated region
  $region14: #{dynamics_predictor_forward.4} parent=0 // pred_check
    _
  $region15: #{dynamics_predictor_forward.4} parent=0 // pred_check_branch
    %19 = sbr.rel (0) target = $region17
  $region16: #{dynamics_predictor_forward.4} parent=0 // pred_region
    _
  $region17: #{dynamics_predictor_forward.4} parent=0 // pred_fallthru
    _
  // Predicated region
  $region18: #{dynamics_predictor_forward.4} parent=0 // pred_check
    _
  $region19: #{dynamics_predictor_forward.4} parent=0 // pred_check_branch
    %21 = sbr.rel (0) target = $region21
  $region20: #{dynamics_predictor_forward.4} parent=0 // pred_region
    _
  $region21: #{dynamics_predictor_forward.4} parent=0 // pred_fallthru
    _
  // Predicated region
  $region22: #{dynamics_predictor_forward.4} parent=0 // pred_check
    _
  $region23: #{dynamics_predictor_forward.4} parent=0 // pred_check_branch
    %23 = sbr.rel (0) target = $region25
  $region24: #{dynamics_predictor_forward.4} parent=0 // pred_region
    _
  $region25: #{dynamics_predictor_forward.4} parent=0 // pred_fallthru
    _
  // Predicated region
  $region26: #{dynamics_predictor_forward.4} parent=0 // pred_check
    _
  $region27: #{dynamics_predictor_forward.4} parent=0 // pred_check_branch
    %25 = sbr.rel (0) target = $region29
  $region28: #{dynamics_predictor_forward.4} parent=0 // pred_region
    _
  $region29: #{dynamics_predictor_forward.4} parent=0 // pred_fallthru
    _
  %v26 = vld [vmem:[%s0] sm:$0xff]
  %v27 = vld [vmem:[%s0 + $0x8] sm:$0xff]
  %v28 = vld [vmem:[%s0 + $0x10] sm:$0xff]
  %v29 = vld [vmem:[%s0 + $0x18] sm:$0xff]
  %v30 = vld [vmem:[%s0 + $0x20] sm:$0xff]
  %v31 = vld [vmem:[%s0 + $0x28] sm:$0xff]
  %v32 = vld [vmem:[%s1] sm:$0xff]
  %v33 = vld [vmem:[%s1 + $0x8] sm:$0xff]
  %v34 = vld [vmem:[%s1 + $0x10] sm:$0xff]
  %v35 = vld [vmem:[%s1 + $0x18] sm:$0xff]
  %v36 = vld [vmem:[%s1 + $0x20] sm:$0xff]
  %v37 = vld [vmem:[%s2] sm:$0x1]
  %v39 = vlaneseq
  %v40 = vshrl.u32 %v39, 7
  %v41 = vsub.s32 0, %v40
  %v42 = vrot.slane %v37, %v41
  %vm44 = vcmask 326656
  %v46 = vsel %vm44, %v26, 0
  %v49 = vsel %vm44, %v27, 0
  %v52 = vsel %vm44, %v28, 0
  %v55 = vsel %vm44, %v29, 0
  %v58 = vsel %vm44, %v30, 0
  %v61 = vsel %vm44, %v31, 0
  %63 = vmatprep.subr.mxu0 0.0
  %64 = vmatpush1.msra.mxu0 0.0
  %65 = vmatprep.subr.mxu0 0.0
  %66 = vmatpush1.msra.mxu0 0.0
  %67 = vmatprep.subr.mxu0 0.0
  %68 = vmatpush1.msra.mxu0 0.0
  %69 = vmatprep.subr.mxu0 0.0
  %70 = vmatpush1.msra.mxu0 0.0
  %71 = vmatprep.subr.mxu0 0.0
  %72 = vmatpush1.msra.mxu0 0.0
  %73 = vmatprep.subr.mxu0 0.0
  %74 = vmatpush1.msra.mxu0 0.0
  %75 = vmatprep.subr.mxu0 0.0
  %76 = vmatpush1.msra.mxu0 0.0
  %77 = vmatprep.subr.mxu0 0.0
  %78 = vmatpush1.msra.mxu0 0.0
  %79 = vmatprep.subr.mxu0 0.0
  %80 = vmatpush1.msra.mxu0 0.0
  %81 = vmatprep.subr.mxu0 0.0
  %82 = vmatpush1.msra.mxu0 0.0
  %83 = vmatprep.subr.mxu0 0.0
  %84 = vmatpush1.msra.mxu0 0.0
  %85 = vmatprep.subr.mxu0 0.0
  %86 = vmatpush1.msra.mxu0 %v36
  %87 = vmatprep.subr.mxu0 0.0
  %88 = vmatpush1.msra.mxu0 %v35
  %89 = vmatprep.subr.mxu0 0.0
  %90 = vmatpush1.msra.mxu0 %v34
  %91 = vmatprep.subr.mxu0 0.0
  %92 = vmatpush1.msra.mxu0 %v33
  %93 = vmatprep.subr.mxu0 0.0
  %94 = vmatpush1.msra.mxu0 %v32
  %95 = vmatprep.subr.mxu0 0.0
  %96 = vmatpush2.msra.mxu0 0.0
  %97 = vmatprep.subr.mxu0 0.0
  %98 = vmatpush2.msra.mxu0 0.0
  %99 = vmatprep.subr.mxu0 0.0
  %100 = vmatpush2.msra.mxu0 0.0
  %101 = vmatprep.subr.mxu0 0.0
  %102 = vmatpush2.msra.mxu0 0.0
  %103 = vmatprep.subr.mxu0 0.0
  %104 = vmatpush2.msra.mxu0 0.0
  %105 = vmatprep.subr.mxu0 0.0
  %106 = vmatpush2.msra.mxu0 0.0
  %107 = vmatprep.subr.mxu0 0.0
  %108 = vmatpush2.msra.mxu0 0.0
  %109 = vmatprep.subr.mxu0 0.0
  %110 = vmatpush2.msra.mxu0 0.0
  %111 = vmatprep.subr.mxu0 0.0
  %112 = vmatpush2.msra.mxu0 0.0
  %113 = vmatprep.subr.mxu0 0.0
  %114 = vmatpush2.msra.mxu0 0.0
  %115 = vmatprep.subr.mxu0 0.0
  %116 = vmatpush2.msra.mxu0 0.0
  %117 = vmatprep.subr.mxu0 0.0
  %118 = vmatpush2.msra.mxu0 0.0
  %119 = vmatprep.subr.mxu0 0.0
  %120 = vmatpush2.msra.mxu0 0.0
  %121 = vmatprep.subr.mxu0 0.0
  %122 = vmatpush2.msra.mxu0 0.0
  %123 = vmatprep.subr.mxu0 0.0
  %124 = vmatpush2.msra.mxu0 0.0
  %125 = vmatprep.subr.mxu0 0.0
  %126 = vmatpush2.msra.mxu0 0.0
  %127 = vmatprep.mubr.f32.mxu0 0.0
  %128 = vmatmul.mubr.f32.gmra.mxu0 %v46
  %v129 = vpop.f32.mrf.mxu0
  %v130 = vadd.f32 %v42, %v129
  %v131 = vpop.f32.mrf.mxu0
  %132 = vmatprep.mubr.f32.mxu0 0.0
  %133 = vmatmul.mubr.f32.gmra.mxu0 %v49
  %v134 = vpop.f32.mrf.mxu0
  %v135 = vadd.f32 %v42, %v134
  %v136 = vpop.f32.mrf.mxu0
  %137 = vmatprep.mubr.f32.mxu0 0.0
  %138 = vmatmul.mubr.f32.gmra.mxu0 %v52
  %v139 = vpop.f32.mrf.mxu0
  %v140 = vadd.f32 %v42, %v139
  %v141 = vpop.f32.mrf.mxu0
  %142 = vmatprep.mubr.f32.mxu0 0.0
  %143 = vmatmul.mubr.f32.gmra.mxu0 %v55
  %v144 = vpop.f32.mrf.mxu0
  %v145 = vadd.f32 %v42, %v144
  %v146 = vpop.f32.mrf.mxu0
  %147 = vmatprep.mubr.f32.mxu0 0.0
  %148 = vmatmul.mubr.f32.gmra.mxu0 %v58
  %v149 = vpop.f32.mrf.mxu0
  %v150 = vadd.f32 %v42, %v149
  %v151 = vpop.f32.mrf.mxu0
  %152 = vmatprep.mubr.f32.mxu0 0.0
  %153 = vmatmul.mubr.f32.gmra.mxu0 %v61
  %v154 = vpop.f32.mrf.mxu0
  %v155 = vadd.f32 %v42, %v154
  %v156 = vpop.f32.mrf.mxu0
  %157 = vdwg.mxu0
  %v158 = vmax.f32 %v130, 0.0
  %v159 = vmax.f32 %v135, 0.0
  %v160 = vmax.f32 %v140, 0.0
  %v161 = vmax.f32 %v145, 0.0
  %v162 = vmax.f32 %v150, 0.0
  %v163 = vmax.f32 %v155, 0.0
  %v164 = vld [vmem:[%s3] sm:$0xff]
  %v165 = vld [vmem:[%s3 + $0x8] sm:$0xff]
  %v166 = vld [vmem:[%s3 + $0x10] sm:$0xff]
  %v167 = vld [vmem:[%s3 + $0x18] sm:$0xff]
  %v168 = vld [vmem:[%s3 + $0x20] sm:$0xff]
  %v169 = vld [vmem:[%s3 + $0x28] sm:$0xff]
  %v170 = vld [vmem:[%s3 + $0x30] sm:$0xff]
  %v171 = vld [vmem:[%s3 + $0x38] sm:$0xff]
  %v172 = vld [vmem:[%s3 + $0x40] sm:$0xff]
  %v173 = vld [vmem:[%s3 + $0x48] sm:$0xff]
  %v174 = vld [vmem:[%s3 + $0x50] sm:$0xff]
  %v175 = vld [vmem:[%s3 + $0x58] sm:$0xff]
  %v176 = vld [vmem:[%s3 + $0x60] sm:$0xff]
  %v177 = vld [vmem:[%s3 + $0x68] sm:$0xff]
  %v178 = vld [vmem:[%s3 + $0x70] sm:$0xff]
  %v179 = vld [vmem:[%s3 + $0x78] sm:$0xff]
  %v180 = vld [vmem:[%s4] sm:$0x1]
  %v182 = vlaneseq
  %v183 = vshrl.u32 %v182, 7
  %v184 = vsub.s32 0, %v183
  %v185 = vrot.slane %v180, %v184
  %187 = vmatprep.subr.mxu0 0.0
  %188 = vmatpush1.msra.mxu0 %v179
  %189 = vmatprep.subr.mxu0 0.0
  %190 = vmatpush1.msra.mxu0 %v178
  %191 = vmatprep.subr.mxu0 0.0
  %192 = vmatpush1.msra.mxu0 %v177
  %193 = vmatprep.subr.mxu0 0.0
  %194 = vmatpush1.msra.mxu0 %v176
  %195 = vmatprep.subr.mxu0 0.0
  %196 = vmatpush1.msra.mxu0 %v175
  %197 = vmatprep.subr.mxu0 0.0
  %198 = vmatpush1.msra.mxu0 %v174
  %199 = vmatprep.subr.mxu0 0.0
  %200 = vmatpush1.msra.mxu0 %v173
  %201 = vmatprep.subr.mxu0 0.0
  %202 = vmatpush1.msra.mxu0 %v172
  %203 = vmatprep.subr.mxu0 0.0
  %204 = vmatpush1.msra.mxu0 %v171
  %205 = vmatprep.subr.mxu0 0.0
  %206 = vmatpush1.msra.mxu0 %v170
  %207 = vmatprep.subr.mxu0 0.0
  %208 = vmatpush1.msra.mxu0 %v169
  %209 = vmatprep.subr.mxu0 0.0
  %210 = vmatpush1.msra.mxu0 %v168
  %211 = vmatprep.subr.mxu0 0.0
  %212 = vmatpush1.msra.mxu0 %v167
  %213 = vmatprep.subr.mxu0 0.0
  %214 = vmatpush1.msra.mxu0 %v166
  %215 = vmatprep.subr.mxu0 0.0
  %216 = vmatpush1.msra.mxu0 %v165
  %217 = vmatprep.subr.mxu0 0.0
  %218 = vmatpush1.msra.mxu0 %v164
  %219 = vmatprep.subr.mxu0 0.0
  %220 = vmatpush2.msra.mxu0 0.0
  %221 = vmatprep.subr.mxu0 0.0
  %222 = vmatpush2.msra.mxu0 0.0
  %223 = vmatprep.subr.mxu0 0.0
  %224 = vmatpush2.msra.mxu0 0.0
  %225 = vmatprep.subr.mxu0 0.0
  %226 = vmatpush2.msra.mxu0 0.0
  %227 = vmatprep.subr.mxu0 0.0
  %228 = vmatpush2.msra.mxu0 0.0
  %229 = vmatprep.subr.mxu0 0.0
  %230 = vmatpush2.msra.mxu0 0.0
  %231 = vmatprep.subr.mxu0 0.0
  %232 = vmatpush2.msra.mxu0 0.0
  %233 = vmatprep.subr.mxu0 0.0
  %234 = vmatpush2.msra.mxu0 0.0
  %235 = vmatprep.subr.mxu0 0.0
  %236 = vmatpush2.msra.mxu0 0.0
  %237 = vmatprep.subr.mxu0 0.0
  %238 = vmatpush2.msra.mxu0 0.0
  %239 = vmatprep.subr.mxu0 0.0
  %240 = vmatpush2.msra.mxu0 0.0
  %241 = vmatprep.subr.mxu0 0.0
  %242 = vmatpush2.msra.mxu0 0.0
  %243 = vmatprep.subr.mxu0 0.0
  %244 = vmatpush2.msra.mxu0 0.0
  %245 = vmatprep.subr.mxu0 0.0
  %246 = vmatpush2.msra.mxu0 0.0
  %247 = vmatprep.subr.mxu0 0.0
  %248 = vmatpush2.msra.mxu0 0.0
  %249 = vmatprep.subr.mxu0 0.0
  %250 = vmatpush2.msra.mxu0 0.0
  %251 = vmatprep.mubr.f32.mxu0 0.0
  %252 = vmatmul.mubr.f32.gmra.mxu0 %v158
  %v253 = vpop.f32.mrf.mxu0
  %v254 = vadd.f32 %v185, %v253
  %v255 = vpop.f32.mrf.mxu0
  %256 = vmatprep.mubr.f32.mxu0 0.0
  %257 = vmatmul.mubr.f32.gmra.mxu0 %v159
  %v258 = vpop.f32.mrf.mxu0
  %v259 = vadd.f32 %v185, %v258
  %v260 = vpop.f32.mrf.mxu0
  %261 = vmatprep.mubr.f32.mxu0 0.0
  %262 = vmatmul.mubr.f32.gmra.mxu0 %v160
  %v263 = vpop.f32.mrf.mxu0
  %v264 = vadd.f32 %v185, %v263
  %v265 = vpop.f32.mrf.mxu0
  %266 = vmatprep.mubr.f32.mxu0 0.0
  %267 = vmatmul.mubr.f32.gmra.mxu0 %v161
  %v268 = vpop.f32.mrf.mxu0
  %v269 = vadd.f32 %v185, %v268
  %v270 = vpop.f32.mrf.mxu0
  %271 = vmatprep.mubr.f32.mxu0 0.0
  %272 = vmatmul.mubr.f32.gmra.mxu0 %v162
  %v273 = vpop.f32.mrf.mxu0
  %v274 = vadd.f32 %v185, %v273
  %v275 = vpop.f32.mrf.mxu0
  %276 = vmatprep.mubr.f32.mxu0 0.0
  %277 = vmatmul.mubr.f32.gmra.mxu0 %v163
  %v278 = vpop.f32.mrf.mxu0
  %v279 = vadd.f32 %v185, %v278
  %v280 = vpop.f32.mrf.mxu0
  %281 = vdwg.mxu0
  %v282 = vmax.f32 %v254, 0.0
  %v283 = vmax.f32 %v259, 0.0
  %v284 = vmax.f32 %v264, 0.0
  %v285 = vmax.f32 %v269, 0.0
  %v286 = vmax.f32 %v274, 0.0
  %v287 = vmax.f32 %v279, 0.0
  %v288 = vld [vmem:[%s5] sm:$0xff]
  %v289 = vld [vmem:[%s5 + $0x8] sm:$0xff]
  %v290 = vld [vmem:[%s5 + $0x10] sm:$0xff]
  %v291 = vld [vmem:[%s5 + $0x18] sm:$0xff]
  %v292 = vld [vmem:[%s5 + $0x20] sm:$0xff]
  %v293 = vld [vmem:[%s5 + $0x28] sm:$0xff]
  %v294 = vld [vmem:[%s5 + $0x30] sm:$0xff]
  %v295 = vld [vmem:[%s5 + $0x38] sm:$0xff]
  %v296 = vld [vmem:[%s5 + $0x40] sm:$0xff]
  %v297 = vld [vmem:[%s5 + $0x48] sm:$0xff]
  %v298 = vld [vmem:[%s5 + $0x50] sm:$0xff]
  %v299 = vld [vmem:[%s5 + $0x58] sm:$0xff]
  %v300 = vld [vmem:[%s5 + $0x60] sm:$0xff]
  %v301 = vld [vmem:[%s5 + $0x68] sm:$0xff]
  %v302 = vld [vmem:[%s5 + $0x70] sm:$0xff]
  %v303 = vld [vmem:[%s5 + $0x78] sm:$0xff]
  %v304 = vld [vmem:[%s6] sm:$0x1]
  %v306 = vlaneseq
  %v307 = vshrl.u32 %v306, 7
  %v308 = vsub.s32 0, %v307
  %v309 = vrot.slane %v304, %v308
  %311 = vmatprep.subr.mxu0 0.0
  %312 = vmatpush1.msra.mxu0 %v303
  %313 = vmatprep.subr.mxu0 0.0
  %314 = vmatpush1.msra.mxu0 %v302
  %315 = vmatprep.subr.mxu0 0.0
  %316 = vmatpush1.msra.mxu0 %v301
  %317 = vmatprep.subr.mxu0 0.0
  %318 = vmatpush1.msra.mxu0 %v300
  %319 = vmatprep.subr.mxu0 0.0
  %320 = vmatpush1.msra.mxu0 %v299
  %321 = vmatprep.subr.mxu0 0.0
  %322 = vmatpush1.msra.mxu0 %v298
  %323 = vmatprep.subr.mxu0 0.0
  %324 = vmatpush1.msra.mxu0 %v297
  %325 = vmatprep.subr.mxu0 0.0
  %326 = vmatpush1.msra.mxu0 %v296
  %327 = vmatprep.subr.mxu0 0.0
  %328 = vmatpush1.msra.mxu0 %v295
  %329 = vmatprep.subr.mxu0 0.0
  %330 = vmatpush1.msra.mxu0 %v294
  %331 = vmatprep.subr.mxu0 0.0
  %332 = vmatpush1.msra.mxu0 %v293
  %333 = vmatprep.subr.mxu0 0.0
  %334 = vmatpush1.msra.mxu0 %v292
  %335 = vmatprep.subr.mxu0 0.0
  %336 = vmatpush1.msra.mxu0 %v291
  %337 = vmatprep.subr.mxu0 0.0
  %338 = vmatpush1.msra.mxu0 %v290
  %339 = vmatprep.subr.mxu0 0.0
  %340 = vmatpush1.msra.mxu0 %v289
  %341 = vmatprep.subr.mxu0 0.0
  %342 = vmatpush1.msra.mxu0 %v288
  %343 = vmatprep.subr.mxu0 0.0
  %344 = vmatpush2.msra.mxu0 0.0
  %345 = vmatprep.subr.mxu0 0.0
  %346 = vmatpush2.msra.mxu0 0.0
  %347 = vmatprep.subr.mxu0 0.0
  %348 = vmatpush2.msra.mxu0 0.0
  %349 = vmatprep.subr.mxu0 0.0
  %350 = vmatpush2.msra.mxu0 0.0
  %351 = vmatprep.subr.mxu0 0.0
  %352 = vmatpush2.msra.mxu0 0.0
  %353 = vmatprep.subr.mxu0 0.0
  %354 = vmatpush2.msra.mxu0 0.0
  %355 = vmatprep.subr.mxu0 0.0
  %356 = vmatpush2.msra.mxu0 0.0
  %357 = vmatprep.subr.mxu0 0.0
  %358 = vmatpush2.msra.mxu0 0.0
  %359 = vmatprep.subr.mxu0 0.0
  %360 = vmatpush2.msra.mxu0 0.0
  %361 = vmatprep.subr.mxu0 0.0
  %362 = vmatpush2.msra.mxu0 0.0
  %363 = vmatprep.subr.mxu0 0.0
  %364 = vmatpush2.msra.mxu0 0.0
  %365 = vmatprep.subr.mxu0 0.0
  %366 = vmatpush2.msra.mxu0 0.0
  %367 = vmatprep.subr.mxu0 0.0
  %368 = vmatpush2.msra.mxu0 0.0
  %369 = vmatprep.subr.mxu0 0.0
  %370 = vmatpush2.msra.mxu0 0.0
  %371 = vmatprep.subr.mxu0 0.0
  %372 = vmatpush2.msra.mxu0 0.0
  %373 = vmatprep.subr.mxu0 0.0
  %374 = vmatpush2.msra.mxu0 0.0
  %375 = vmatprep.mubr.f32.mxu0 0.0
  %376 = vmatmul.mubr.f32.gmra.mxu0 %v282
  %v377 = vpop.f32.mrf.mxu0
  %v378 = vadd.f32 %v309, %v377
  %v379 = vpop.f32.mrf.mxu0
  %380 = vmatprep.mubr.f32.mxu0 0.0
  %381 = vmatmul.mubr.f32.gmra.mxu0 %v283
  %v382 = vpop.f32.mrf.mxu0
  %v383 = vadd.f32 %v309, %v382
  %v384 = vpop.f32.mrf.mxu0
  %385 = vmatprep.mubr.f32.mxu0 0.0
  %386 = vmatmul.mubr.f32.gmra.mxu0 %v284
  %v387 = vpop.f32.mrf.mxu0
  %v388 = vadd.f32 %v309, %v387
  %v389 = vpop.f32.mrf.mxu0
  %390 = vmatprep.mubr.f32.mxu0 0.0
  %391 = vmatmul.mubr.f32.gmra.mxu0 %v285
  %v392 = vpop.f32.mrf.mxu0
  %v393 = vadd.f32 %v309, %v392
  %v394 = vpop.f32.mrf.mxu0
  %395 = vmatprep.mubr.f32.mxu0 0.0
  %396 = vmatmul.mubr.f32.gmra.mxu0 %v286
  %v397 = vpop.f32.mrf.mxu0
  %v398 = vadd.f32 %v309, %v397
  %v399 = vpop.f32.mrf.mxu0
  %400 = vmatprep.mubr.f32.mxu0 0.0
  %401 = vmatmul.mubr.f32.gmra.mxu0 %v287
  %v402 = vpop.f32.mrf.mxu0
  %v403 = vadd.f32 %v309, %v402
  %v404 = vpop.f32.mrf.mxu0
  %405 = vdwg.mxu0
  %v406 = vmax.f32 %v378, 0.0
  %v407 = vmax.f32 %v383, 0.0
  %v408 = vmax.f32 %v388, 0.0
  %v409 = vmax.f32 %v393, 0.0
  %v410 = vmax.f32 %v398, 0.0
  %v411 = vmax.f32 %v403, 0.0
  %412 = vst [vmem:[%s7] sm:$0xff] %v406
  %413 = vst [vmem:[%s7 + $0x8] sm:$0xff] %v407
  %414 = vst [vmem:[%s7 + $0x10] sm:$0xff] %v408
  %415 = vst [vmem:[%s7 + $0x18] sm:$0xff] %v409
  %416 = vst [vmem:[%s7 + $0x20] sm:$0xff] %v410
  %417 = vst [vmem:[%s7 + $0x28] sm:$0xff] %v411
  // Predicated region
  $region30: #{dynamics_predictor_forward.4} parent=0 // pred_check
    _
  $region31: #{dynamics_predictor_forward.4} parent=0 // pred_check_branch
    %419 = sbr.rel (0) target = $region33
  $region32: #{dynamics_predictor_forward.4} parent=0 // pred_region
    _
  $region33: #{dynamics_predictor_forward.4} parent=0 // pred_fallthru
    _
  // Predicated region
  $region34: #{dynamics_predictor_forward.4} parent=0 // pred_check
    _
  $region35: #{dynamics_predictor_forward.4} parent=0 // pred_check_branch
    %421 = sbr.rel (0) target = $region37
  $region36: #{dynamics_predictor_forward.4} parent=0 // pred_region
    _
  $region37: #{dynamics_predictor_forward.4} parent=0 // pred_fallthru
    _

// kernel: dynamics_predictor_forward.5
$region0: #{dynamics_predictor_forward.5}
  #allocation0 [shape = 'u32[]', space=smem, size = 0x4, offset = 0x4, fixed_abs, tag = 'smem constant byte address 0x4 - core index']
  #allocation1 [shape = 'u32[144,128]{1,0:T(1,128)}', space=vmem, size = 0x12000, scoped, tag = 'internal scratch']
  #allocation2 [shape = 'f32[16,128]{1,0:T(8,128)}', space=vmem, size = 0x2000, scoped, tag = 'scratch operand']
  #allocation3 [shape = 'f32[16,128]{1,0:T(8,128)}', space=vmem, size = 0x2000, scoped, tag = 'scratch operand']
  %s0 = inlined_call_operand.vmem [shape: f32[2,16,128], index: 0, kind: input, shape index: {}]
  %s1 = inlined_call_operand.vmem [shape: f32[2,24,128], index: 1, kind: input, shape index: {}]
  %s2 = inlined_call_operand.vmem [shape: s32[2,24,1], index: 2, kind: input, shape index: {}]
  %s3 = inlined_call_operand.vmem [shape: f32[2,24,1], index: 3, kind: input, shape index: {}]
  %s4 = inlined_call_operand.vmem [shape: s32[2,24,1], index: 4, kind: input, shape index: {}]
  %s5 = inlined_call_operand.vmem [shape: f32[2,24,1], index: 5, kind: input, shape index: {}]
  %s6 = inlined_call_operand.vmem [shape: f32[384,128], index: 6, kind: input, shape index: {}]
  %s7 = inlined_call_operand.vmem [shape: f32[1,128], index: 7, kind: input, shape index: {}]
  %s8 = inlined_call_operand.vmem [shape: f32[256,128], index: 8, kind: input, shape index: {}]
  %s9 = inlined_call_operand.vmem [shape: f32[1,128], index: 9, kind: input, shape index: {}]
  %s10 = inlined_call_operand.vmem [shape: f32[128,128], index: 10, kind: input, shape index: {}]
  %s11 = inlined_call_operand.vmem [shape: f32[1,128], index: 11, kind: input, shape index: {}]
  %s12 = inlined_call_operand.vmem [shape: f32[128,128], index: 12, kind: input, shape index: {}]
  %s13 = inlined_call_operand.vmem [shape: f32[1,128], index: 13, kind: input, shape index: {}]
  %s14 = inlined_call_operand.vmem [shape: f32[128,8], index: 14, kind: input, shape index: {}]
  %s15 = inlined_call_operand.vmem [shape: f32[1,8], index: 15, kind: input, shape index: {}]
  %s16 = inlined_call_operand.vmem [shape: f32[2,16,8], index: 16, kind: output, shape index: {}]
  %s17 = sld [smem:[#allocation0]]
  $region113: #{dynamics_predictor_forward.5} parent=0
    _
  %s19 = ssub.s32 1, %s17
  %s20 = scalar_select 0, %s19, %s17
  loop: start=0, step=1, limit=6
  $region2: #{dynamics_predictor_forward.5} parent=0 // loop_pre_header
    _
  $region3: #{dynamics_predictor_forward.5} parent=0 // loop_header
    %s22 = sphi 0, %s26
    %p23 = scmp.ge.s32.totalorder %s22, 6
    %s29 = sphi 0, %s48
    %s30 = sphi 0, %s44
    %s31 = sphi 0, %s40
    %s32 = sphi 0, %s29
    %s33 = sphi 0, %s30
    %s34 = sphi 0, %s31
    %s35 = sphi 0, %s32
    %s36 = sphi 0, %s33
    %s37 = sphi 0, %s34
    %s51 = sphi 0, %s53
    %s54 = sphi 0, %s51
    %s55 = sphi 0, %s54
    %s71 = sphi 0, %s55
    %s79 = sphi 0, %s81
    %s82 = sphi 0, %s79
    %s83 = sphi 0, %s82
    %s99 = sphi 0, %s83
    %s107 = sphi 0, %s109
    %s110 = sphi 0, %s107
    %s111 = sphi 0, %s110
    %s127 = sphi 0, %s111
    %s135 = sphi 0, %s137
    %s138 = sphi 0, %s135
    %s139 = sphi 0, %s138
    %s155 = sphi 0, %s139
    %s163 = sphi 0, %s165
    %s166 = sphi 0, %s163
    %s167 = sphi 0, %s166
    %s183 = sphi 0, %s167
    %s191 = sphi 0, %s193
    %s194 = sphi 0, %s191
    %s195 = sphi 0, %s194
    %s211 = sphi 0, %s195
    %s215 = sphi 0, %s215
    %s217 = sphi 0, %s215
    %s218 = sphi 0, %s217
    %s232 = sphi 0, %s218
    %s236 = sphi 0, %s236
    %s238 = sphi 0, %s236
    %s239 = sphi 0, %s238
    %s253 = sphi 0, %s239
    %s257 = sphi 0, %s257
    %s259 = sphi 0, %s257
    %s260 = sphi 0, %s259
    %s274 = sphi 0, %s260
    %s278 = sphi 0, %s278
    %s280 = sphi 0, %s278
    %s281 = sphi 0, %s280
    %s295 = sphi 0, %s281
    %s299 = sphi 0, %s299
    %s301 = sphi 0, %s299
    %s302 = sphi 0, %s301
    %s316 = sphi 0, %s302
    %s320 = sphi 0, %s320
    %s322 = sphi 0, %s320
    %s323 = sphi 0, %s322
    %s337 = sphi 0, %s323
    %s341 = sphi 0, %s341
    %s343 = sphi 0, %s341
    %s344 = sphi 0, %s343
    %s358 = sphi 0, %s344
    %s362 = sphi 0, %s362
    %s364 = sphi 0, %s362
    %s365 = sphi 0, %s364
    %s379 = sphi 0, %s365
    %s383 = sphi 0, %s383
    %s385 = sphi 0, %s383
    %s386 = sphi 0, %s385
    %s400 = sphi 0, %s386
    %s404 = sphi 0, %s404
    %s406 = sphi 0, %s404
    %s407 = sphi 0, %s406
    %s421 = sphi 0, %s407
    %s427 = sphi 0, %s429
    %s430 = sphi 0, %s427
    %s431 = sphi 0, %s430
    %s447 = sphi 0, %s431
  $region4: #{dynamics_predictor_forward.5} parent=0 // loop_header_branch
    %25 = sbr.rel (%p23) target = $region8
  $region5: #{dynamics_predictor_forward.5} parent=0 // loop_body
    %s27 = ssub.s32 %s22, 1
    %s28 = ssub.s32 %s22, 2
    %s38 = sadd.s32 1, %s31
    %p39 = scmp.ge.s32.totalorder %s38, 1
    %s40 = scalar_select %p39, 0, %s38
    %s41 = sadd.s32 1, %s30
    %s42 = scalar_select %p39, %s41, %s30
    %p43 = scmp.ge.s32.totalorder %s42, 2
    %s44 = scalar_select %p43, 0, %s42
    %s45 = sadd.s32 1, %s29
    %s46 = scalar_select %p43, %s45, %s29
    %p47 = scmp.ge.s32.totalorder %s46, 2
    %s48 = scalar_select %p47, 0, %s46
    %s49 = ssub.s32 %s29, %s48
    %p50 = scmp.eq.s32.totalorder %s49, 0
    %s52 = sadd.s32 %s51, 1
    %s53 = scalar_select %p50, %s51, %s52
    %p56 = pneg %p50
    %p57 = scmp.eq.s32.totalorder %s22, 3
    %p58 = por %p56, %p57
    %p59 = scmp.ne.s32.totalorder %s51, %s54
    %p60 = scmp.eq.s32.totalorder %s22, 0
    %p61 = por %p59, %p60
    %p62 = scmp.ne.s32.totalorder %s51, %s54
    %p63 = scmp.eq.s32.totalorder %s27, 3
    %p64 = por %p62, %p63
    %p65 = scmp.ne.s32.totalorder %s54, %s55
    %p66 = scmp.eq.s32.totalorder %s27, 0
    %p67 = por %p65, %p66
    %p68 = scmp.ne.s32.totalorder %s54, %s55
    %p69 = scmp.eq.s32.totalorder %s28, 3
    %p70 = por %p68, %p69
    %p72 = scmp.ne.s32.totalorder %s55, %s71
    %p73 = scmp.eq.s32.totalorder %s28, 0
    %p74 = por %p72, %p73
    %s75 = ssub.s32 %s29, %s48
    %s76 = ssub.s32 %s31, %s40
    %s77 = sor.u32 %s75, %s76
    %p78 = scmp.eq.s32.totalorder %s77, 0
    %s80 = sadd.s32 %s79, 1
    %s81 = scalar_select %p78, %s79, %s80
    %p84 = pneg %p78
    %p85 = scmp.eq.s32.totalorder %s22, 3
    %p86 = por %p84, %p85
    %p87 = scmp.ne.s32.totalorder %s79, %s82
    %p88 = scmp.eq.s32.totalorder %s22, 0
    %p89 = por %p87, %p88
    %p90 = scmp.ne.s32.totalorder %s79, %s82
    %p91 = scmp.eq.s32.totalorder %s27, 3
    %p92 = por %p90, %p91
    %p93 = scmp.ne.s32.totalorder %s82, %s83
    %p94 = scmp.eq.s32.totalorder %s27, 0
    %p95 = por %p93, %p94
    %p96 = scmp.ne.s32.totalorder %s82, %s83
    %p97 = scmp.eq.s32.totalorder %s28, 3
    %p98 = por %p96, %p97
    %p100 = scmp.ne.s32.totalorder %s83, %s99
    %p101 = scmp.eq.s32.totalorder %s28, 0
    %p102 = por %p100, %p101
    %s103 = ssub.s32 %s29, %s48
    %s104 = ssub.s32 %s31, %s40
    %s105 = sor.u32 %s103, %s104
    %p106 = scmp.eq.s32.totalorder %s105, 0
    %s108 = sadd.s32 %s107, 1
    %s109 = scalar_select %p106, %s107, %s108
    %p112 = pneg %p106
    %p113 = scmp.eq.s32.totalorder %s22, 3
    %p114 = por %p112, %p113
    %p115 = scmp.ne.s32.totalorder %s107, %s110
    %p116 = scmp.eq.s32.totalorder %s22, 0
    %p117 = por %p115, %p116
    %p118 = scmp.ne.s32.totalorder %s107, %s110
    %p119 = scmp.eq.s32.totalorder %s27, 3
    %p120 = por %p118, %p119
    %p121 = scmp.ne.s32.totalorder %s110, %s111
    %p122 = scmp.eq.s32.totalorder %s27, 0
    %p123 = por %p121, %p122
    %p124 = scmp.ne.s32.totalorder %s110, %s111
    %p125 = scmp.eq.s32.totalorder %s28, 3
    %p126 = por %p124, %p125
    %p128 = scmp.ne.s32.totalorder %s111, %s127
    %p129 = scmp.eq.s32.totalorder %s28, 0
    %p130 = por %p128, %p129
    %s131 = ssub.s32 %s29, %s48
    %s132 = ssub.s32 %s31, %s40
    %s133 = sor.u32 %s131, %s132
    %p134 = scmp.eq.s32.totalorder %s133, 0
    %s136 = sadd.s32 %s135, 1
    %s137 = scalar_select %p134, %s135, %s136
    %p140 = pneg %p134
    %p141 = scmp.eq.s32.totalorder %s22, 3
    %p142 = por %p140, %p141
    %p143 = scmp.ne.s32.totalorder %s135, %s138
    %p144 = scmp.eq.s32.totalorder %s22, 0
    %p145 = por %p143, %p144
    %p146 = scmp.ne.s32.totalorder %s135, %s138
    %p147 = scmp.eq.s32.totalorder %s27, 3
    %p148 = por %p146, %p147
    %p149 = scmp.ne.s32.totalorder %s138, %s139
    %p150 = scmp.eq.s32.totalorder %s27, 0
    %p151 = por %p149, %p150
    %p152 = scmp.ne.s32.totalorder %s138, %s139
    %p153 = scmp.eq.s32.totalorder %s28, 3
    %p154 = por %p152, %p153
    %p156 = scmp.ne.s32.totalorder %s139, %s155
    %p157 = scmp.eq.s32.totalorder %s28, 0
    %p158 = por %p156, %p157
    %s159 = ssub.s32 %s29, %s48
    %s160 = ssub.s32 %s31, %s40
    %s161 = sor.u32 %s159, %s160
    %p162 = scmp.eq.s32.totalorder %s161, 0
    %s164 = sadd.s32 %s163, 1
    %s165 = scalar_select %p162, %s163, %s164
    %p168 = pneg %p162
    %p169 = scmp.eq.s32.totalorder %s22, 3
    %p170 = por %p168, %p169
    %p171 = scmp.ne.s32.totalorder %s163, %s166
    %p172 = scmp.eq.s32.totalorder %s22, 0
    %p173 = por %p171, %p172
    %p174 = scmp.ne.s32.totalorder %s163, %s166
    %p175 = scmp.eq.s32.totalorder %s27, 3
    %p176 = por %p174, %p175
    %p177 = scmp.ne.s32.totalorder %s166, %s167
    %p178 = scmp.eq.s32.totalorder %s27, 0
    %p179 = por %p177, %p178
    %p180 = scmp.ne.s32.totalorder %s166, %s167
    %p181 = scmp.eq.s32.totalorder %s28, 3
    %p182 = por %p180, %p181
    %p184 = scmp.ne.s32.totalorder %s167, %s183
    %p185 = scmp.eq.s32.totalorder %s28, 0
    %p186 = por %p184, %p185
    %s187 = ssub.s32 %s29, %s48
    %s188 = ssub.s32 %s31, %s40
    %s189 = sor.u32 %s187, %s188
    %p190 = scmp.eq.s32.totalorder %s189, 0
    %s192 = sadd.s32 %s191, 1
    %s193 = scalar_select %p190, %s191, %s192
    %p196 = pneg %p190
    %p197 = scmp.eq.s32.totalorder %s22, 3
    %p198 = por %p196, %p197
    %p199 = scmp.ne.s32.totalorder %s191, %s194
    %p200 = scmp.eq.s32.totalorder %s22, 0
    %p201 = por %p199, %p200
    %p202 = scmp.ne.s32.totalorder %s191, %s194
    %p203 = scmp.eq.s32.totalorder %s27, 3
    %p204 = por %p202, %p203
    %p205 = scmp.ne.s32.totalorder %s194, %s195
    %p206 = scmp.eq.s32.totalorder %s27, 0
    %p207 = por %p205, %p206
    %p208 = scmp.ne.s32.totalorder %s194, %s195
    %p209 = scmp.eq.s32.totalorder %s28, 3
    %p210 = por %p208, %p209
    %p212 = scmp.ne.s32.totalorder %s195, %s211
    %p213 = scmp.eq.s32.totalorder %s28, 0
    %p214 = por %p212, %p213
    %s216 = sadd.s32 %s215, 1
    %p219 = scmp.eq.s32.totalorder %s22, 3
    %p220 = scmp.ne.s32.totalorder %s215, %s217
    %p221 = scmp.eq.s32.totalorder %s22, 0
    %p222 = por %p220, %p221
    %p223 = scmp.ne.s32.totalorder %s215, %s217
    %p224 = scmp.eq.s32.totalorder %s27, 3
    %p225 = por %p223, %p224
    %p226 = scmp.ne.s32.totalorder %s217, %s218
    %p227 = scmp.eq.s32.totalorder %s27, 0
    %p228 = por %p226, %p227
    %p229 = scmp.ne.s32.totalorder %s217, %s218
    %p230 = scmp.eq.s32.totalorder %s28, 3
    %p231 = por %p229, %p230
    %p233 = scmp.ne.s32.totalorder %s218, %s232
    %p234 = scmp.eq.s32.totalorder %s28, 0
    %p235 = por %p233, %p234
    %s237 = sadd.s32 %s236, 1
    %p240 = scmp.eq.s32.totalorder %s22, 3
    %p241 = scmp.ne.s32.totalorder %s236, %s238
    %p242 = scmp.eq.s32.totalorder %s22, 0
    %p243 = por %p241, %p242
    %p244 = scmp.ne.s32.totalorder %s236, %s238
    %p245 = scmp.eq.s32.totalorder %s27, 3
    %p246 = por %p244, %p245
    %p247 = scmp.ne.s32.totalorder %s238, %s239
    %p248 = scmp.eq.s32.totalorder %s27, 0
    %p249 = por %p247, %p248
    %p250 = scmp.ne.s32.totalorder %s238, %s239
    %p251 = scmp.eq.s32.totalorder %s28, 3
    %p252 = por %p250, %p251
    %p254 = scmp.ne.s32.totalorder %s239, %s253
    %p255 = scmp.eq.s32.totalorder %s28, 0
    %p256 = por %p254, %p255
    %s258 = sadd.s32 %s257, 1
    %p261 = scmp.eq.s32.totalorder %s22, 3
    %p262 = scmp.ne.s32.totalorder %s257, %s259
    %p263 = scmp.eq.s32.totalorder %s22, 0
    %p264 = por %p262, %p263
    %p265 = scmp.ne.s32.totalorder %s257, %s259
    %p266 = scmp.eq.s32.totalorder %s27, 3
    %p267 = por %p265, %p266
    %p268 = scmp.ne.s32.totalorder %s259, %s260
    %p269 = scmp.eq.s32.totalorder %s27, 0
    %p270 = por %p268, %p269
    %p271 = scmp.ne.s32.totalorder %s259, %s260
    %p272 = scmp.eq.s32.totalorder %s28, 3
    %p273 = por %p271, %p272
    %p275 = scmp.ne.s32.totalorder %s260, %s274
    %p276 = scmp.eq.s32.totalorder %s28, 0
    %p277 = por %p275, %p276
    %s279 = sadd.s32 %s278, 1
    %p282 = scmp.eq.s32.totalorder %s22, 3
    %p283 = scmp.ne.s32.totalorder %s278, %s280
    %p284 = scmp.eq.s32.totalorder %s22, 0
    %p285 = por %p283, %p284
    %p286 = scmp.ne.s32.totalorder %s278, %s280
    %p287 = scmp.eq.s32.totalorder %s27, 3
    %p288 = por %p286, %p287
    %p289 = scmp.ne.s32.totalorder %s280, %s281
    %p290 = scmp.eq.s32.totalorder %s27, 0
    %p291 = por %p289, %p290
    %p292 = scmp.ne.s32.totalorder %s280, %s281
    %p293 = scmp.eq.s32.totalorder %s28, 3
    %p294 = por %p292, %p293
    %p296 = scmp.ne.s32.totalorder %s281, %s295
    %p297 = scmp.eq.s32.totalorder %s28, 0
    %p298 = por %p296, %p297
    %s300 = sadd.s32 %s299, 1
    %p303 = scmp.eq.s32.totalorder %s22, 3
    %p304 = scmp.ne.s32.totalorder %s299, %s301
    %p305 = scmp.eq.s32.totalorder %s22, 0
    %p306 = por %p304, %p305
    %p307 = scmp.ne.s32.totalorder %s299, %s301
    %p308 = scmp.eq.s32.totalorder %s27, 3
    %p309 = por %p307, %p308
    %p310 = scmp.ne.s32.totalorder %s301, %s302
    %p311 = scmp.eq.s32.totalorder %s27, 0
    %p312 = por %p310, %p311
    %p313 = scmp.ne.s32.totalorder %s301, %s302
    %p314 = scmp.eq.s32.totalorder %s28, 3
    %p315 = por %p313, %p314
    %p317 = scmp.ne.s32.totalorder %s302, %s316
    %p318 = scmp.eq.s32.totalorder %s28, 0
    %p319 = por %p317, %p318
    %s321 = sadd.s32 %s320, 1
    %p324 = scmp.eq.s32.totalorder %s22, 3
    %p325 = scmp.ne.s32.totalorder %s320, %s322
    %p326 = scmp.eq.s32.totalorder %s22, 0
    %p327 = por %p325, %p326
    %p328 = scmp.ne.s32.totalorder %s320, %s322
    %p329 = scmp.eq.s32.totalorder %s27, 3
    %p330 = por %p328, %p329
    %p331 = scmp.ne.s32.totalorder %s322, %s323
    %p332 = scmp.eq.s32.totalorder %s27, 0
    %p333 = por %p331, %p332
    %p334 = scmp.ne.s32.totalorder %s322, %s323
    %p335 = scmp.eq.s32.totalorder %s28, 3
    %p336 = por %p334, %p335
    %p338 = scmp.ne.s32.totalorder %s323, %s337
    %p339 = scmp.eq.s32.totalorder %s28, 0
    %p340 = por %p338, %p339
    %s342 = sadd.s32 %s341, 1
    %p345 = scmp.eq.s32.totalorder %s22, 3
    %p346 = scmp.ne.s32.totalorder %s341, %s343
    %p347 = scmp.eq.s32.totalorder %s22, 0
    %p348 = por %p346, %p347
    %p349 = scmp.ne.s32.totalorder %s341, %s343
    %p350 = scmp.eq.s32.totalorder %s27, 3
    %p351 = por %p349, %p350
    %p352 = scmp.ne.s32.totalorder %s343, %s344
    %p353 = scmp.eq.s32.totalorder %s27, 0
    %p354 = por %p352, %p353
    %p355 = scmp.ne.s32.totalorder %s343, %s344
    %p356 = scmp.eq.s32.totalorder %s28, 3
    %p357 = por %p355, %p356
    %p359 = scmp.ne.s32.totalorder %s344, %s358
    %p360 = scmp.eq.s32.totalorder %s28, 0
    %p361 = por %p359, %p360
    %s363 = sadd.s32 %s362, 1
    %p366 = scmp.eq.s32.totalorder %s22, 3
    %p367 = scmp.ne.s32.totalorder %s362, %s364
    %p368 = scmp.eq.s32.totalorder %s22, 0
    %p369 = por %p367, %p368
    %p370 = scmp.ne.s32.totalorder %s362, %s364
    %p371 = scmp.eq.s32.totalorder %s27, 3
    %p372 = por %p370, %p371
    %p373 = scmp.ne.s32.totalorder %s364, %s365
    %p374 = scmp.eq.s32.totalorder %s27, 0
    %p375 = por %p373, %p374
    %p376 = scmp.ne.s32.totalorder %s364, %s365
    %p377 = scmp.eq.s32.totalorder %s28, 3
    %p378 = por %p376, %p377
    %p380 = scmp.ne.s32.totalorder %s365, %s379
    %p381 = scmp.eq.s32.totalorder %s28, 0
    %p382 = por %p380, %p381
    %s384 = sadd.s32 %s383, 1
    %p387 = scmp.eq.s32.totalorder %s22, 3
    %p388 = scmp.ne.s32.totalorder %s383, %s385
    %p389 = scmp.eq.s32.totalorder %s22, 0
    %p390 = por %p388, %p389
    %p391 = scmp.ne.s32.totalorder %s383, %s385
    %p392 = scmp.eq.s32.totalorder %s27, 3
    %p393 = por %p391, %p392
    %p394 = scmp.ne.s32.totalorder %s385, %s386
    %p395 = scmp.eq.s32.totalorder %s27, 0
    %p396 = por %p394, %p395
    %p397 = scmp.ne.s32.totalorder %s385, %s386
    %p398 = scmp.eq.s32.totalorder %s28, 3
    %p399 = por %p397, %p398
    %p401 = scmp.ne.s32.totalorder %s386, %s400
    %p402 = scmp.eq.s32.totalorder %s28, 0
    %p403 = por %p401, %p402
    %s405 = sadd.s32 %s404, 1
    %p408 = scmp.eq.s32.totalorder %s22, 3
    %p409 = scmp.ne.s32.totalorder %s404, %s406
    %p410 = scmp.eq.s32.totalorder %s22, 0
    %p411 = por %p409, %p410
    %p412 = scmp.ne.s32.totalorder %s404, %s406
    %p413 = scmp.eq.s32.totalorder %s27, 3
    %p414 = por %p412, %p413
    %p415 = scmp.ne.s32.totalorder %s406, %s407
    %p416 = scmp.eq.s32.totalorder %s27, 0
    %p417 = por %p415, %p416
    %p418 = scmp.ne.s32.totalorder %s406, %s407
    %p419 = scmp.eq.s32.totalorder %s28, 3
    %p420 = por %p418, %p419
    %p422 = scmp.ne.s32.totalorder %s407, %s421
    %p423 = scmp.eq.s32.totalorder %s28, 0
    %p424 = por %p422, %p423
    %s425 = ssub.s32 %s29, %s48
    %p426 = scmp.eq.s32.totalorder %s425, 0
    %s428 = sadd.s32 %s427, 1
    %s429 = scalar_select %p426, %s427, %s428
    %p432 = pneg %p426
    %p433 = scmp.eq.s32.totalorder %s22, 3
    %p434 = por %p432, %p433
    %p435 = scmp.ne.s32.totalorder %s427, %s430
    %p436 = scmp.eq.s32.totalorder %s22, 0
    %p437 = por %p435, %p436
    %p438 = scmp.ne.s32.totalorder %s427, %s430
    %p439 = scmp.eq.s32.totalorder %s27, 3
    %p440 = por %p438, %p439
    %p441 = scmp.ne.s32.totalorder %s430, %s431
    %p442 = scmp.eq.s32.totalorder %s27, 0
    %p443 = por %p441, %p442
    %p444 = scmp.ne.s32.totalorder %s430, %s431
    %p445 = scmp.eq.s32.totalorder %s28, 3
    %p446 = por %p444, %p445
    %p448 = scmp.ne.s32.totalorder %s431, %s447
    %p449 = scmp.eq.s32.totalorder %s28, 0
    %p450 = por %p448, %p449
    %p451 = scmp.le.s32.totalorder 1, %s22
    %p452 = scmp.lt.s32.totalorder %s22, 5
    %p453 = pnand %p451, %p452
    %p454 = pneg %p453
    // Predicated region
    $region9: #{dynamics_predictor_forward.5} parent=5 // pred_check
      _
    $region10: #{dynamics_predictor_forward.5} parent=5 // pred_check_branch
      %456 = sbr.rel (%p453) target = $region12
    $region11: #{dynamics_predictor_forward.5} parent=5 // pred_region
      %s457 = ssub.s32 %s22, 1
      // Predicated region
      $region13: #{dynamics_predictor_forward.5} parent=11 // pred_check
        %p458 = pneg %p228
      $region14: #{dynamics_predictor_forward.5} parent=11 // pred_check_branch
        %460 = sbr.rel (%p458) target = $region16
      $region15: #{dynamics_predictor_forward.5} parent=11 // pred_region
        _
      $region16: #{dynamics_predictor_forward.5} parent=11 // pred_fallthru
        _
      // Predicated region
      $region17: #{dynamics_predictor_forward.5} parent=11 // pred_check
        %p461 = pneg %p249
      $region18: #{dynamics_predictor_forward.5} parent=11 // pred_check_branch
        %463 = sbr.rel (%p461) target = $region20
      $region19: #{dynamics_predictor_forward.5} parent=11 // pred_region
        _
      $region20: #{dynamics_predictor_forward.5} parent=11 // pred_fallthru
        _
      // Predicated region
      $region21: #{dynamics_predictor_forward.5} parent=11 // pred_check
        %p464 = pneg %p270
      $region22: #{dynamics_predictor_forward.5} parent=11 // pred_check_branch
        %466 = sbr.rel (%p464) target = $region24
      $region23: #{dynamics_predictor_forward.5} parent=11 // pred_region
        _
      $region24: #{dynamics_predictor_forward.5} parent=11 // pred_fallthru
        _
      // Predicated region
      $region25: #{dynamics_predictor_forward.5} parent=11 // pred_check
        %p467 = pneg %p291
      $region26: #{dynamics_predictor_forward.5} parent=11 // pred_check_branch
        %469 = sbr.rel (%p467) target = $region28
      $region27: #{dynamics_predictor_forward.5} parent=11 // pred_region
        _
      $region28: #{dynamics_predictor_forward.5} parent=11 // pred_fallthru
        _
      // Predicated region
      $region29: #{dynamics_predictor_forward.5} parent=11 // pred_check
        %p470 = pneg %p312
      $region30: #{dynamics_predictor_forward.5} parent=11 // pred_check_branch
        %472 = sbr.rel (%p470) target = $region32
      $region31: #{dynamics_predictor_forward.5} parent=11 // pred_region
        _
      $region32: #{dynamics_predictor_forward.5} parent=11 // pred_fallthru
        _
      // Predicated region
      $region33: #{dynamics_predictor_forward.5} parent=11 // pred_check
        %p473 = pneg %p333
      $region34: #{dynamics_predictor_forward.5} parent=11 // pred_check_branch
        %475 = sbr.rel (%p473) target = $region36
      $region35: #{dynamics_predictor_forward.5} parent=11 // pred_region
        _
      $region36: #{dynamics_predictor_forward.5} parent=11 // pred_fallthru
        _
      // Predicated region
      $region37: #{dynamics_predictor_forward.5} parent=11 // pred_check
        %p476 = pneg %p354
      $region38: #{dynamics_predictor_forward.5} parent=11 // pred_check_branch
        %478 = sbr.rel (%p476) target = $region40
      $region39: #{dynamics_predictor_forward.5} parent=11 // pred_region
        _
      $region40: #{dynamics_predictor_forward.5} parent=11 // pred_fallthru
        _
      // Predicated region
      $region41: #{dynamics_predictor_forward.5} parent=11 // pred_check
        %p479 = pneg %p375
      $region42: #{dynamics_predictor_forward.5} parent=11 // pred_check_branch
        %481 = sbr.rel (%p479) target = $region44
      $region43: #{dynamics_predictor_forward.5} parent=11 // pred_region
        _
      $region44: #{dynamics_predictor_forward.5} parent=11 // pred_fallthru
        _
      // Predicated region
      $region45: #{dynamics_predictor_forward.5} parent=11 // pred_check
        %p482 = pneg %p396
      $region46: #{dynamics_predictor_forward.5} parent=11 // pred_check_branch
        %484 = sbr.rel (%p482) target = $region48
      $region47: #{dynamics_predictor_forward.5} parent=11 // pred_region
        _
      $region48: #{dynamics_predictor_forward.5} parent=11 // pred_fallthru
        _
      // Predicated region
      $region49: #{dynamics_predictor_forward.5} parent=11 // pred_check
        %p485 = pneg %p417
      $region50: #{dynamics_predictor_forward.5} parent=11 // pred_check_branch
        %487 = sbr.rel (%p485) target = $region52
      $region51: #{dynamics_predictor_forward.5} parent=11 // pred_region
        _
      $region52: #{dynamics_predictor_forward.5} parent=11 // pred_fallthru
        _
    $region12: #{dynamics_predictor_forward.5} parent=5 // pred_fallthru
      _
    %p488 = scmp.lt.s32.totalorder %s22, 4
    // Predicated region
    $region53: #{dynamics_predictor_forward.5} parent=5 // pred_check
      %p489 = pneg %p488
    $region54: #{dynamics_predictor_forward.5} parent=5 // pred_check_branch
      %491 = sbr.rel (%p489) target = $region56
    $region55: #{dynamics_predictor_forward.5} parent=5 // pred_region
      // Predicated region
      $region57: #{dynamics_predictor_forward.5} parent=55 // pred_check
        %p492 = pneg %p61
      $region58: #{dynamics_predictor_forward.5} parent=55 // pred_check_branch
        %494 = sbr.rel (%p492) target = $region60
      $region59: #{dynamics_predictor_forward.5} parent=55 // pred_region
        %p495 = scmp.lt.s32.totalorder %s29, 1
        %s496 = scalar_select %p495, %s29, 1
        %s497 = smul.addr %s496, 2
        %s498 = smul.addr %s497, 8
        %s499 = scalar_lea.vmem %s0, %s498
      $region60: #{dynamics_predictor_forward.5} parent=55 // pred_fallthru
        _
      // Predicated region
      $region61: #{dynamics_predictor_forward.5} parent=55 // pred_check
        %p500 = pneg %p89
      $region62: #{dynamics_predictor_forward.5} parent=55 // pred_check_branch
        %502 = sbr.rel (%p500) target = $region64
      $region63: #{dynamics_predictor_forward.5} parent=55 // pred_region
        %s503 = smul.u32 3, %s31
        %p504 = scmp.lt.s32.totalorder %s29, 1
        %s505 = scalar_select %p504, %s29, 1
        %p506 = scmp.lt.s32.totalorder %s503, 2
        %s507 = scalar_select %p506, %s503, 2
        %s508 = smul.addr %s505, 3
        %s509 = sadd.s32 %s507, %s508
        %s510 = smul.addr %s509, 8
        %s511 = scalar_lea.vmem %s1, %s510
        %s512 = smul.u32 3, %s31
      $region64: #{dynamics_predictor_forward.5} parent=55 // pred_fallthru
        _
      // Predicated region
      $region65: #{dynamics_predictor_forward.5} parent=55 // pred_check
        %p513 = pneg %p117
      $region66: #{dynamics_predictor_forward.5} parent=55 // pred_check_branch
        %515 = sbr.rel (%p513) target = $region68
      $region67: #{dynamics_predictor_forward.5} parent=55 // pred_region
        %s516 = smul.u32 3, %s31
        %p517 = scmp.lt.s32.totalorder %s29, 1
        %s518 = scalar_select %p517, %s29, 1
        %p519 = scmp.lt.s32.totalorder %s516, 2
        %s520 = scalar_select %p519, %s516, 2
        %s521 = smul.addr %s518, 3
        %s522 = sadd.s32 %s520, %s521
        %s523 = smul.addr %s522, 8
        %s524 = scalar_lea.vmem %s2, %s523
        %s525 = smul.u32 3, %s31
      $region68: #{dynamics_predictor_forward.5} parent=55 // pred_fallthru
        _
      // Predicated region
      $region69: #{dynamics_predictor_forward.5} parent=55 // pred_check
        %p526 = pneg %p145
      $region70: #{dynamics_predictor_forward.5} parent=55 // pred_check_branch
        %528 = sbr.rel (%p526) target = $region72
      $region71: #{dynamics_predictor_forward.5} parent=55 // pred_region
        %s529 = smul.u32 3, %s31
        %p530 = scmp.lt.s32.totalorder %s29, 1
        %s531 = scalar_select %p530, %s29, 1
        %p532 = scmp.lt.s32.totalorder %s529, 2
        %s533 = scalar_select %p532, %s529, 2
        %s534 = smul.addr %s531, 3
        %s535 = sadd.s32 %s533, %s534
        %s536 = smul.addr %s535, 8
        %s537 = scalar_lea.vmem %s3, %s536
        %s538 = smul.u32 3, %s31
      $region72: #{dynamics_predictor_forward.5} parent=55 // pred_fallthru
        _
      // Predicated region
      $region73: #{dynamics_predictor_forward.5} parent=55 // pred_check
        %p539 = pneg %p173
      $region74: #{dynamics_predictor_forward.5} parent=55 // pred_check_branch
        %541 = sbr.rel (%p539) target = $region76
      $region75: #{dynamics_predictor_forward.5} parent=55 // pred_region
        %s542 = smul.u32 3, %s31
        %p543 = scmp.lt.s32.totalorder %s29, 1
        %s544 = scalar_select %p543, %s29, 1
        %p545 = scmp.lt.s32.totalorder %s542, 2
        %s546 = scalar_select %p545, %s542, 2
        %s547 = smul.addr %s544, 3
        %s548 = sadd.s32 %s546, %s547
        %s549 = smul.addr %s548, 8
        %s550 = scalar_lea.vmem %s4, %s549
        %s551 = smul.u32 3, %s31
      $region76: #{dynamics_predictor_forward.5} parent=55 // pred_fallthru
        _
      // Predicated region
      $region77: #{dynamics_predictor_forward.5} parent=55 // pred_check
        %p552 = pneg %p201
      $region78: #{dynamics_predictor_forward.5} parent=55 // pred_check_branch
        %554 = sbr.rel (%p552) target = $region80
      $region79: #{dynamics_predictor_forward.5} parent=55 // pred_region
        %s555 = smul.u32 3, %s31
        %p556 = scmp.lt.s32.totalorder %s29, 1
        %s557 = scalar_select %p556, %s29, 1
        %p558 = scmp.lt.s32.totalorder %s555, 2
        %s559 = scalar_select %p558, %s555, 2
        %s560 = smul.addr %s557, 3
        %s561 = sadd.s32 %s559, %s560
        %s562 = smul.addr %s561, 8
        %s563 = scalar_lea.vmem %s5, %s562
        %s564 = smul.u32 3, %s31
      $region80: #{dynamics_predictor_forward.5} parent=55 // pred_fallthru
        _
    $region56: #{dynamics_predictor_forward.5} parent=5 // pred_fallthru
      _
    %p565 = scmp.le.s32.totalorder 1, %s22
    %p566 = scmp.lt.s32.totalorder %s22, 5
    %p567 = pnand %p565, %p566
    %p568 = pneg %p567
    // Predicated region
    $region81: #{dynamics_predictor_forward.5} parent=5 // pred_check
      _
    $region82: #{dynamics_predictor_forward.5} parent=5 // pred_check_branch
      %570 = sbr.rel (%p567) target = $region84
    $region83: #{dynamics_predictor_forward.5} parent=5 // pred_region
      %s571 = ssub.s32 %s22, 1
      %p572 = scmp.lt.s32.totalorder %s32, 1
      %s573 = scalar_select %p572, %s32, 1
      %s574 = smul.addr %s573, 2
      %s575 = smul.addr %s574, 8
      %s576 = scalar_lea.vmem %s0, %s575
      %p577 = pneg %p67
      %p578 = pneg %p64
      %s579 = smul.u32 3, %s34
      %p580 = scmp.lt.s32.totalorder %s32, 1
      %s581 = scalar_select %p580, %s32, 1
      %p582 = scmp.lt.s32.totalorder %s579, 2
      %s583 = scalar_select %p582, %s579, 2
      %s584 = smul.addr %s581, 3
      %s585 = sadd.s32 %s583, %s584
      %s586 = smul.addr %s585, 8
      %s587 = scalar_lea.vmem %s1, %s586
      %p588 = pneg %p95
      %p589 = pneg %p92
      %s590 = smul.u32 3, %s34
      %p591 = scmp.lt.s32.totalorder %s32, 1
      %s592 = scalar_select %p591, %s32, 1
      %p593 = scmp.lt.s32.totalorder %s590, 2
      %s594 = scalar_select %p593, %s590, 2
      %s595 = smul.addr %s592, 3
      %s596 = sadd.s32 %s594, %s595
      %s597 = smul.addr %s596, 8
      %s598 = scalar_lea.vmem %s2, %s597
      %p599 = pneg %p123
      %p600 = pneg %p120
      %s601 = smul.u32 3, %s34
      %p602 = scmp.lt.s32.totalorder %s32, 1
      %s603 = scalar_select %p602, %s32, 1
      %p604 = scmp.lt.s32.totalorder %s601, 2
      %s605 = scalar_select %p604, %s601, 2
      %s606 = smul.addr %s603, 3
      %s607 = sadd.s32 %s605, %s606
      %s608 = smul.addr %s607, 8
      %s609 = scalar_lea.vmem %s3, %s608
      %p610 = pneg %p151
      %p611 = pneg %p148
      %s612 = smul.u32 3, %s34
      %p613 = scmp.lt.s32.totalorder %s32, 1
      %s614 = scalar_select %p613, %s32, 1
      %p615 = scmp.lt.s32.totalorder %s612, 2
      %s616 = scalar_select %p615, %s612, 2
      %s617 = smul.addr %s614, 3
      %s618 = sadd.s32 %s616, %s617
      %s619 = smul.addr %s618, 8
      %s620 = scalar_lea.vmem %s4, %s619
      %p621 = pneg %p179
      %p622 = pneg %p176
      %s623 = smul.u32 3, %s34
      %p624 = scmp.lt.s32.totalorder %s32, 1
      %s625 = scalar_select %p624, %s32, 1
      %p626 = scmp.lt.s32.totalorder %s623, 2
      %s627 = scalar_select %p626, %s623, 2
      %s628 = smul.addr %s625, 3
      %s629 = sadd.s32 %s627, %s628
      %s630 = smul.addr %s629, 8
      %s631 = scalar_lea.vmem %s5, %s630
      %p632 = pneg %p207
      %p633 = pneg %p204
      %p634 = pneg %p228
      %p635 = pneg %p225
      %p636 = pneg %p249
      %p637 = pneg %p246
      %p638 = pneg %p270
      %p639 = pneg %p267
      %p640 = pneg %p291
      %p641 = pneg %p288
      %p642 = pneg %p312
      %p643 = pneg %p309
      %p644 = pneg %p333
      %p645 = pneg %p330
      %p646 = pneg %p354
      %p647 = pneg %p351
      %p648 = pneg %p375
      %p649 = pneg %p372
      %p650 = pneg %p396
      %p651 = pneg %p393
      %p652 = pneg %p417
      %p653 = pneg %p414
      %p654 = pneg %p443
      %p655 = pneg %p440
      %p656 = scmp.lt.s32.totalorder %s32, 1
      %s657 = scalar_select %p656, %s32, 1
      %s658 = smul.addr %s657, 2
      %s659 = smul.addr %s658, 8
      %s660 = scalar_lea.vmem %s16, %s659
      %p661 = scmp.lt.s32.totalorder %s32, 1
      %s662 = scalar_select %p661, %s32, 1
      %s663 = smul.addr %s662, 2
      %s664 = smul.addr %s663, 8
      %s665 = scalar_lea.vmem %s0, %s664
      %s666 = smul.u32 3, %s34
      %p667 = scmp.lt.s32.totalorder %s32, 1
      %s668 = scalar_select %p667, %s32, 1
      %p669 = scmp.lt.s32.totalorder %s666, 2
      %s670 = scalar_select %p669, %s666, 2
      %s671 = smul.addr %s668, 3
      %s672 = sadd.s32 %s670, %s671
      %s673 = smul.addr %s672, 8
      %s674 = scalar_lea.vmem %s1, %s673
      %s675 = smul.u32 3, %s34
      %s676 = smul.u32 3, %s34
      %p677 = scmp.lt.s32.totalorder %s32, 1
      %s678 = scalar_select %p677, %s32, 1
      %p679 = scmp.lt.s32.totalorder %s676, 2
      %s680 = scalar_select %p679, %s676, 2
      %s681 = smul.addr %s678, 3
      %s682 = sadd.s32 %s680, %s681
      %s683 = smul.addr %s682, 8
      %s684 = scalar_lea.vmem %s2, %s683
      %s685 = smul.u32 3, %s34
      %s686 = smul.u32 3, %s34
      %p687 = scmp.lt.s32.totalorder %s32, 1
      %s688 = scalar_select %p687, %s32, 1
      %p689 = scmp.lt.s32.totalorder %s686, 2
      %s690 = scalar_select %p689, %s686, 2
      %s691 = smul.addr %s688, 3
      %s692 = sadd.s32 %s690, %s691
      %s693 = smul.addr %s692, 8
      %s694 = scalar_lea.vmem %s3, %s693
      %s695 = smul.u32 3, %s34
      %s696 = smul.u32 3, %s34
      %p697 = scmp.lt.s32.totalorder %s32, 1
      %s698 = scalar_select %p697, %s32, 1
      %p699 = scmp.lt.s32.totalorder %s696, 2
      %s700 = scalar_select %p699, %s696, 2
      %s701 = smul.addr %s698, 3
      %s702 = sadd.s32 %s700, %s701
      %s703 = smul.addr %s702, 8
      %s704 = scalar_lea.vmem %s4, %s703
      %s705 = smul.u32 3, %s34
      %s706 = smul.u32 3, %s34
      %p707 = scmp.lt.s32.totalorder %s32, 1
      %s708 = scalar_select %p707, %s32, 1
      %p709 = scmp.lt.s32.totalorder %s706, 2
      %s710 = scalar_select %p709, %s706, 2
      %s711 = smul.addr %s708, 3
      %s712 = sadd.s32 %s710, %s711
      %s713 = smul.addr %s712, 8
      %s714 = scalar_lea.vmem %s5, %s713
      %s715 = smul.u32 3, %s34
      %p716 = scmp.lt.s32.totalorder %s32, 1
      %s717 = scalar_select %p716, %s32, 1
      %s718 = smul.addr %s717, 2
      %s719 = smul.addr %s718, 8
      %s720 = scalar_lea.vmem %s16, %s719
      %p721 = scmp.eq.s32.totalorder %s33, 0
      %p722 = scmp.eq.s32.totalorder %s34, 0
      %p723 = pnand %p721, %p722
      %p724 = pneg %p723
      // Predicated region
      $region85: #{dynamics_predictor_forward.5} parent=83 // pred_check
        _
      $region86: #{dynamics_predictor_forward.5} parent=83 // pred_check_branch
        %726 = sbr.rel (%p723) target = $region88
      $region87: #{dynamics_predictor_forward.5} parent=83 // pred_region
        %v727 = vld [vmem:[%s665] sm:$0xff]
        %v728 = vld [vmem:[%s665 + $0x8] sm:$0xff]
        %729 = vst [vmem:[#allocation2] sm:$0xff] %v727
        %730 = vst [vmem:[#allocation2 + $0x8] sm:$0xff] %v728
      $region88: #{dynamics_predictor_forward.5} parent=83 // pred_fallthru
        _
      // Predicated region
      $region89: #{dynamics_predictor_forward.5} parent=83 // pred_check
        %p731 = pneg %p722
      $region90: #{dynamics_predictor_forward.5} parent=83 // pred_check_branch
        %733 = sbr.rel (%p731) target = $region92
      $region91: #{dynamics_predictor_forward.5} parent=83 // pred_region
        %734 = vst [vmem:[#allocation3] sm:$0xff] 0.0
        %735 = vst [vmem:[#allocation3 + $0x8] sm:$0xff] 0.0
      $region92: #{dynamics_predictor_forward.5} parent=83 // pred_fallthru
        _
      %v736 = vlaneseq
      %v737 = vand.u32 %v736, 127
      %v738 = vld [vmem:[%s684] sm:$0xff]
      %v739 = vld [vmem:[%s684 + $0x8] sm:$0xff]
      %v740 = vld [vmem:[%s684 + $0x10] sm:$0xff]
      %741 = vset.pattern.permute.xlu0 0
      %742 = vperm.xlu0 %741, %v738
      %v743 = vpop.permute.xlu0 %742
      %744 = vset.pattern.permute.xlu0 0
      %745 = vperm.xlu0 %744, %v739
      %v746 = vpop.permute.xlu0 %745
      %747 = vset.pattern.permute.xlu0 0
      %748 = vperm.xlu0 %747, %v740
      %v749 = vpop.permute.xlu0 %748
      %vm750 = vcmp.eq.s32.totalorder %v737, %v743
      %vm751 = vcmp.eq.s32.totalorder %v737, %v746
      %vm752 = vcmp.eq.s32.totalorder %v737, %v749
      %v753 = vld [vmem:[%s694] sm:$0xff]
      %v754 = vld [vmem:[%s694 + $0x8] sm:$0xff]
      %v755 = vld [vmem:[%s694 + $0x10] sm:$0xff]
      %757 = vset.pattern.permute.xlu0 0
      %758 = vperm.xlu0 %757, %v753
      %v759 = vpop.permute.xlu0 %758
      %762 = vset.pattern.permute.xlu0 0
      %763 = vperm.xlu0 %762, %v754
      %v764 = vpop.permute.xlu0 %763
      %767 = vset.pattern.permute.xlu0 0
      %768 = vperm.xlu0 %767, %v755
      %v769 = vpop.permute.xlu0 %768
      %v771 = vsel %vm750, %v759, 0.0
      %v772 = vsel %vm751, %v764, 0.0
      %v773 = vsel %vm752, %v769, 0.0
      %v774 = vld [vmem:[%s704] sm:$0xff]
      %v775 = vld [vmem:[%s704 + $0x8] sm:$0xff]
      %v776 = vld [vmem:[%s704 + $0x10] sm:$0xff]
      %777 = vset.pattern.permute.xlu0 0
      %778 = vperm.xlu0 %777, %v774
      %v779 = vpop.permute.xlu0 %778
      %780 = vset.pattern.permute.xlu0 0
      %781 = vperm.xlu0 %780, %v775
      %v782 = vpop.permute.xlu0 %781
      %783 = vset.pattern.permute.xlu0 0
      %784 = vperm.xlu0 %783, %v776
      %v785 = vpop.permute.xlu0 %784
      %vm786 = vcmp.eq.s32.totalorder %v737, %v779
      %vm787 = vcmp.eq.s32.totalorder %v737, %v782
      %vm788 = vcmp.eq.s32.totalorder %v737, %v785
      %v789 = vld [vmem:[%s714] sm:$0xff]
      %v790 = vld [vmem:[%s714 + $0x8] sm:$0xff]
      %v791 = vld [vmem:[%s714 + $0x10] sm:$0xff]
      %793 = vset.pattern.permute.xlu0 0
      %794 = vperm.xlu0 %793, %v789
      %v795 = vpop.permute.xlu0 %794
      %798 = vset.pattern.permute.xlu0 0
      %799 = vperm.xlu0 %798, %v790
      %v800 = vpop.permute.xlu0 %799
      %803 = vset.pattern.permute.xlu0 0
      %804 = vperm.xlu0 %803, %v791
      %v805 = vpop.permute.xlu0 %804
      %v807 = vsel %vm786, %v795, 0.0
      %v808 = vsel %vm787, %v800, 0.0
      %v809 = vsel %vm788, %v805, 0.0
      %v810 = vld [vmem:[#allocation2] sm:$0xff]
      %v811 = vld [vmem:[#allocation2 + $0x8] sm:$0xff]
      %vm812 = vcmask 130048
      %v814 = vsel %vm812, %v771, 0
      %v817 = vsel %vm812, %v772, 0
      %v820 = vsel %vm812, %v773, 0
      %822 = vmatprep.subr.mxu0 0.0
      %823 = vmatpush1.msra.mxu0 0.0
      %824 = vmatprep.subr.mxu0 0.0
      %825 = vmatpush1.msra.mxu0 0.0
      %826 = vmatprep.subr.mxu0 0.0
      %827 = vmatpush1.msra.mxu0 0.0
      %828 = vmatprep.subr.mxu0 0.0
      %829 = vmatpush1.msra.mxu0 0.0
      %830 = vmatprep.subr.mxu0 0.0
      %831 = vmatpush1.msra.mxu0 0.0
      %832 = vmatprep.subr.mxu0 0.0
      %833 = vmatpush1.msra.mxu0 0.0
      %834 = vmatprep.subr.mxu0 0.0
      %835 = vmatpush1.msra.mxu0 0.0
      %836 = vmatprep.subr.mxu0 0.0
      %837 = vmatpush1.msra.mxu0 0.0
      %838 = vmatprep.subr.mxu0 0.0
      %839 = vmatpush1.msra.mxu0 0.0
      %840 = vmatprep.subr.mxu0 0.0
      %841 = vmatpush1.msra.mxu0 0.0
      %842 = vmatprep.subr.mxu0 0.0
      %843 = vmatpush1.msra.mxu0 0.0
      %844 = vmatprep.subr.mxu0 0.0
      %845 = vmatpush1.msra.mxu0 0.0
      %846 = vmatprep.subr.mxu0 0.0
      %847 = vmatpush1.msra.mxu0 0.0
      %848 = vmatprep.subr.mxu0 0.0
      %849 = vmatpush1.msra.mxu0 0.0
      %850 = vmatprep.subr.mxu0 0.0
      %851 = vmatpush1.msra.mxu0 %v811
      %852 = vmatprep.subr.mxu0 0.0
      %853 = vmatpush1.msra.mxu0 %v810
      %854 = vmatprep.subr.mxu0 0.0
      %855 = vmatpush2.msra.mxu0 0.0
      %856 = vmatprep.subr.mxu0 0.0
      %857 = vmatpush2.msra.mxu0 0.0
      %858 = vmatprep.subr.mxu0 0.0
      %859 = vmatpush2.msra.mxu0 0.0
      %860 = vmatprep.subr.mxu0 0.0
      %861 = vmatpush2.msra.mxu0 0.0
      %862 = vmatprep.subr.mxu0 0.0
      %863 = vmatpush2.msra.mxu0 0.0
      %864 = vmatprep.subr.mxu0 0.0
      %865 = vmatpush2.msra.mxu0 0.0
      %866 = vmatprep.subr.mxu0 0.0
      %867 = vmatpush2.msra.mxu0 0.0
      %868 = vmatprep.subr.mxu0 0.0
      %869 = vmatpush2.msra.mxu0 0.0
      %870 = vmatprep.subr.mxu0 0.0
      %871 = vmatpush2.msra.mxu0 0.0
      %872 = vmatprep.subr.mxu0 0.0
      %873 = vmatpush2.msra.mxu0 0.0
      %874 = vmatprep.subr.mxu0 0.0
      %875 = vmatpush2.msra.mxu0 0.0
      %876 = vmatprep.subr.mxu0 0.0
      %877 = vmatpush2.msra.mxu0 0.0
      %878 = vmatprep.subr.mxu0 0.0
      %879 = vmatpush2.msra.mxu0 0.0
      %880 = vmatprep.subr.mxu0 0.0
      %881 = vmatpush2.msra.mxu0 0.0
      %882 = vmatprep.subr.mxu0 0.0
      %883 = vmatpush2.msra.mxu0 0.0
      %884 = vmatprep.subr.mxu0 0.0
      %885 = vmatpush2.msra.mxu0 0.0
      %886 = vmatprep.mubr.f32.mxu0 0.0
      %887 = vmatmul.mubr.f32.gmra.mxu0 %v814
      %v888 = vpop.f32.mrf.mxu0
      %v889 = vadd.f32 0.0, %v888
      %v890 = vpop.f32.mrf.mxu0
      %891 = vmatprep.mubr.f32.mxu0 0.0
      %892 = vmatmul.mubr.f32.gmra.mxu0 %v817
      %v893 = vpop.f32.mrf.mxu0
      %v894 = vadd.f32 0.0, %v893
      %v895 = vpop.f32.mrf.mxu0
      %896 = vmatprep.mubr.f32.mxu0 0.0
      %897 = vmatmul.mubr.f32.gmra.mxu0 %v820
      %v898 = vpop.f32.mrf.mxu0
      %v899 = vadd.f32 0.0, %v898
      %v900 = vpop.f32.mrf.mxu0
      %901 = vdwg.mxu0
      %v903 = vsel %vm812, %v807, 0
      %v906 = vsel %vm812, %v808, 0
      %v909 = vsel %vm812, %v809, 0
      %911 = vmatprep.subr.mxu0 0.0
      %912 = vmatpush1.msra.mxu0 0.0
      %913 = vmatprep.subr.mxu0 0.0
      %914 = vmatpush1.msra.mxu0 0.0
      %915 = vmatprep.subr.mxu0 0.0
      %916 = vmatpush1.msra.mxu0 0.0
      %917 = vmatprep.subr.mxu0 0.0
      %918 = vmatpush1.msra.mxu0 0.0
      %919 = vmatprep.subr.mxu0 0.0
      %920 = vmatpush1.msra.mxu0 0.0
      %921 = vmatprep.subr.mxu0 0.0
      %922 = vmatpush1.msra.mxu0 0.0
      %923 = vmatprep.subr.mxu0 0.0
      %924 = vmatpush1.msra.mxu0 0.0
      %925 = vmatprep.subr.mxu0 0.0
      %926 = vmatpush1.msra.mxu0 0.0
      %927 = vmatprep.subr.mxu0 0.0
      %928 = vmatpush1.msra.mxu0 0.0
      %929 = vmatprep.subr.mxu0 0.0
      %930 = vmatpush1.msra.mxu0 0.0
      %931 = vmatprep.subr.mxu0 0.0
      %932 = vmatpush1.msra.mxu0 0.0
      %933 = vmatprep.subr.mxu0 0.0
      %934 = vmatpush1.msra.mxu0 0.0
      %935 = vmatprep.subr.mxu0 0.0
      %936 = vmatpush1.msra.mxu0 0.0
      %937 = vmatprep.subr.mxu0 0.0
      %938 = vmatpush1.msra.mxu0 0.0
      %939 = vmatprep.subr.mxu0 0.0
      %940 = vmatpush1.msra.mxu0 %v811
      %941 = vmatprep.subr.mxu0 0.0
      %942 = vmatpush1.msra.mxu0 %v810
      %943 = vmatprep.subr.mxu0 0.0
      %944 = vmatpush2.msra.mxu0 0.0
      %945 = vmatprep.subr.mxu0 0.0
      %946 = vmatpush2.msra.mxu0 0.0
      %947 = vmatprep.subr.mxu0 0.0
      %948 = vmatpush2.msra.mxu0 0.0
      %949 = vmatprep.subr.mxu0 0.0
      %950 = vmatpush2.msra.mxu0 0.0
      %951 = vmatprep.subr.mxu0 0.0
      %952 = vmatpush2.msra.mxu0 0.0
      %953 = vmatprep.subr.mxu0 0.0
      %954 = vmatpush2.msra.mxu0 0.0
      %955 = vmatprep.subr.mxu0 0.0
      %956 = vmatpush2.msra.mxu0 0.0
      %957 = vmatprep.subr.mxu0 0.0
      %958 = vmatpush2.msra.mxu0 0.0
      %959 = vmatprep.subr.mxu0 0.0
      %960 = vmatpush2.msra.mxu0 0.0
      %961 = vmatprep.subr.mxu0 0.0
      %962 = vmatpush2.msra.mxu0 0.0
      %963 = vmatprep.subr.mxu0 0.0
      %964 = vmatpush2.msra.mxu0 0.0
      %965 = vmatprep.subr.mxu0 0.0
      %966 = vmatpush2.msra.mxu0 0.0
      %967 = vmatprep.subr.mxu0 0.0
      %968 = vmatpush2.msra.mxu0 0.0
      %969 = vmatprep.subr.mxu0 0.0
      %970 = vmatpush2.msra.mxu0 0.0
      %971 = vmatprep.subr.mxu0 0.0
      %972 = vmatpush2.msra.mxu0 0.0
      %973 = vmatprep.subr.mxu0 0.0
      %974 = vmatpush2.msra.mxu0 0.0
      %975 = vmatprep.mubr.f32.mxu0 0.0
      %976 = vmatmul.mubr.f32.gmra.mxu0 %v903
      %v977 = vpop.f32.mrf.mxu0
      %v978 = vadd.f32 0.0, %v977
      %v979 = vpop.f32.mrf.mxu0
      %980 = vmatprep.mubr.f32.mxu0 0.0
      %981 = vmatmul.mubr.f32.gmra.mxu0 %v906
      %v982 = vpop.f32.mrf.mxu0
      %v983 = vadd.f32 0.0, %v982
      %v984 = vpop.f32.mrf.mxu0
      %985 = vmatprep.mubr.f32.mxu0 0.0
      %986 = vmatmul.mubr.f32.gmra.mxu0 %v909
      %v987 = vpop.f32.mrf.mxu0
      %v988 = vadd.f32 0.0, %v987
      %v989 = vpop.f32.mrf.mxu0
      %990 = vdwg.mxu0
      %v991 = vld [vmem:[%s674] sm:$0xff]
      %v992 = vld [vmem:[%s674 + $0x8] sm:$0xff]
      %v993 = vld [vmem:[%s674 + $0x10] sm:$0xff]
      %v994 = vld [vmem:[%s6] sm:$0xff]
      %v995 = vld [vmem:[%s6 + $0x8] sm:$0xff]
      %v996 = vld [vmem:[%s6 + $0x10] sm:$0xff]
      %v997 = vld [vmem:[%s6 + $0x18] sm:$0xff]
      %v998 = vld [vmem:[%s6 + $0x20] sm:$0xff]
      %v999 = vld [vmem:[%s6 + $0x28] sm:$0xff]
      %v1000 = vld [vmem:[%s6 + $0x30] sm:$0xff]
      %v1001 = vld [vmem:[%s6 + $0x38] sm:$0xff]
      %v1002 = vld [vmem:[%s6 + $0x40] sm:$0xff]
      %v1003 = vld [vmem:[%s6 + $0x48] sm:$0xff]
      %v1004 = vld [vmem:[%s6 + $0x50] sm:$0xff]
      %v1005 = vld [vmem:[%s6 + $0x58] sm:$0xff]
      %v1006 = vld [vmem:[%s6 + $0x60] sm:$0xff]
      %v1007 = vld [vmem:[%s6 + $0x68] sm:$0xff]
      %v1008 = vld [vmem:[%s6 + $0x70] sm:$0xff]
      %v1009 = vld [vmem:[%s6 + $0x78] sm:$0xff]
      %v1010 = vld [vmem:[%s6 + $0x80] sm:$0xff]
      %v1011 = vld [vmem:[%s6 + $0x88] sm:$0xff]
      %v1012 = vld [vmem:[%s6 + $0x90] sm:$0xff]
      %v1013 = vld [vmem:[%s6 + $0x98] sm:$0xff]
      %v1014 = vld [vmem:[%s6 + $0xa0] sm:$0xff]
      %v1015 = vld [vmem:[%s6 + $0xa8] sm:$0xff]
      %v1016 = vld [vmem:[%s6 + $0xb0] sm:$0xff]
      %v1017 = vld [vmem:[%s6 + $0xb8] sm:$0xff]
      %v1018 = vld [vmem:[%s6 + $0xc0] sm:$0xff]
      %v1019 = vld [vmem:[%s6 + $0xc8] sm:$0xff]
      %v1020 = vld [vmem:[%s6 + $0xd0] sm:$0xff]
      %v1021 = vld [vmem:[%s6 + $0xd8] sm:$0xff]
      %v1022 = vld [vmem:[%s6 + $0xe0] sm:$0xff]
      %v1023 = vld [vmem:[%s6 + $0xe8] sm:$0xff]
      %v1024 = vld [vmem:[%s6 + $0xf0] sm:$0xff]
      %v1025 = vld [vmem:[%s6 + $0xf8] sm:$0xff]
      %v1026 = vld [vmem:[%s6 + $0x100] sm:$0xff]
      %v1027 = vld [vmem:[%s6 + $0x108] sm:$0xff]
      %v1028 = vld [vmem:[%s6 + $0x110] sm:$0xff]
      %v1029 = vld [vmem:[%s6 + $0x118] sm:$0xff]
      %v1030 = vld [vmem:[%s6 + $0x120] sm:$0xff]
      %v1031 = vld [vmem:[%s6 + $0x128] sm:$0xff]
      %v1032 = vld [vmem:[%s6 + $0x130] sm:$0xff]
      %v1033 = vld [vmem:[%s6 + $0x138] sm:$0xff]
      %v1034 = vld [vmem:[%s6 + $0x140] sm:$0xff]
      %v1035 = vld [vmem:[%s6 + $0x148] sm:$0xff]
      %v1036 = vld [vmem:[%s6 + $0x150] sm:$0xff]
      %v1037 = vld [vmem:[%s6 + $0x158] sm:$0xff]
      %v1038 = vld [vmem:[%s6 + $0x160] sm:$0xff]
      %v1039 = vld [vmem:[%s6 + $0x168] sm:$0xff]
      %v1040 = vld [vmem:[%s6 + $0x170] sm:$0xff]
      %v1041 = vld [vmem:[%s6 + $0x178] sm:$0xff]
      %v1042 = vld [vmem:[%s7] sm:$0x1]
      %v1044 = vlaneseq
      %v1045 = vshrl.u32 %v1044, 7
      %v1046 = vsub.s32 0, %v1045
      %v1047 = vrot.slane %v1042, %v1046
      %1049 = vmatprep.subr.mxu0 0.0
      %1050 = vmatpush1.msra.mxu0 %v1009
      %1051 = vmatprep.subr.mxu0 0.0
      %1052 = vmatpush1.msra.mxu0 %v1008
      %1053 = vmatprep.subr.mxu0 0.0
      %1054 = vmatpush1.msra.mxu0 %v1007
      %1055 = vmatprep.subr.mxu0 0.0
      %1056 = vmatpush1.msra.mxu0 %v1006
      %1057 = vmatprep.subr.mxu0 0.0
      %1058 = vmatpush1.msra.mxu0 %v1005
      %1059 = vmatprep.subr.mxu0 0.0
      %1060 = vmatpush1.msra.mxu0 %v1004
      %1061 = vmatprep.subr.mxu0 0.0
      %1062 = vmatpush1.msra.mxu0 %v1003
      %1063 = vmatprep.subr.mxu0 0.0
      %1064 = vmatpush1.msra.mxu0 %v1002
      %1065 = vmatprep.subr.mxu0 0.0
      %1066 = vmatpush1.msra.mxu0 %v1001
      %1067 = vmatprep.subr.mxu0 0.0
      %1068 = vmatpush1.msra.mxu0 %v1000
      %1069 = vmatprep.subr.mxu0 0.0
      %1070 = vmatpush1.msra.mxu0 %v999
      %1071 = vmatprep.subr.mxu0 0.0
      %1072 = vmatpush1.msra.mxu0 %v998
      %1073 = vmatprep.subr.mxu0 0.0
      %1074 = vmatpush1.msra.mxu0 %v997
      %1075 = vmatprep.subr.mxu0 0.0
      %1076 = vmatpush1.msra.mxu0 %v996
      %1077 = vmatprep.subr.mxu0 0.0
      %1078 = vmatpush1.msra.mxu0 %v995
      %1079 = vmatprep.subr.mxu0 0.0
      %1080 = vmatpush1.msra.mxu0 %v994
      %1081 = vmatprep.subr.mxu0 0.0
      %1082 = vmatpush2.msra.mxu0 %v1025
      %1083 = vmatprep.subr.mxu0 0.0
      %1084 = vmatpush2.msra.mxu0 %v1024
      %1085 = vmatprep.subr.mxu0 0.0
      %1086 = vmatpush2.msra.mxu0 %v1023
      %1087 = vmatprep.subr.mxu0 0.0
      %1088 = vmatpush2.msra.mxu0 %v1022
      %1089 = vmatprep.subr.mxu0 0.0
      %1090 = vmatpush2.msra.mxu0 %v1021
      %1091 = vmatprep.subr.mxu0 0.0
      %1092 = vmatpush2.msra.mxu0 %v1020
      %1093 = vmatprep.subr.mxu0 0.0
      %1094 = vmatpush2.msra.mxu0 %v1019
      %1095 = vmatprep.subr.mxu0 0.0
      %1096 = vmatpush2.msra.mxu0 %v1018
      %1097 = vmatprep.subr.mxu0 0.0
      %1098 = vmatpush2.msra.mxu0 %v1017
      %1099 = vmatprep.subr.mxu0 0.0
      %1100 = vmatpush2.msra.mxu0 %v1016
      %1101 = vmatprep.subr.mxu0 0.0
      %1102 = vmatpush2.msra.mxu0 %v1015
      %1103 = vmatprep.subr.mxu0 0.0
      %1104 = vmatpush2.msra.mxu0 %v1014
      %1105 = vmatprep.subr.mxu0 0.0
      %1106 = vmatpush2.msra.mxu0 %v1013
      %1107 = vmatprep.subr.mxu0 0.0
      %1108 = vmatpush2.msra.mxu0 %v1012
      %1109 = vmatprep.subr.mxu0 0.0
      %1110 = vmatpush2.msra.mxu0 %v1011
      %1111 = vmatprep.subr.mxu0 0.0
      %1112 = vmatpush2.msra.mxu0 %v1010
      %1113 = vmatprep.mubr.f32.mxu0 %v889
      %1114 = vmatmul.mubr.f32.gmra.mxu0 %v991
      %v1115 = vpop.f32.mrf.mxu0
      %v1116 = vadd.f32 %v1047, %v1115
      %v1117 = vpop.f32.mrf.mxu0
      %1118 = vmatprep.mubr.f32.mxu0 %v894
      %1119 = vmatmul.mubr.f32.gmra.mxu0 %v992
      %v1120 = vpop.f32.mrf.mxu0
      %v1121 = vadd.f32 %v1047, %v1120
      %v1122 = vpop.f32.mrf.mxu0
      %1123 = vmatprep.mubr.f32.mxu0 %v899
      %1124 = vmatmul.mubr.f32.gmra.mxu0 %v993
      %v1125 = vpop.f32.mrf.mxu0
      %v1126 = vadd.f32 %v1047, %v1125
      %v1127 = vpop.f32.mrf.mxu0
      %1128 = vdwg.mxu0
      %1129 = vmatprep.subr.mxu0 0.0
      %1130 = vmatpush1.msra.mxu0 %v1041
      %1131 = vmatprep.subr.mxu0 0.0
      %1132 = vmatpush1.msra.mxu0 %v1040
      %1133 = vmatprep.subr.mxu0 0.0
      %1134 = vmatpush1.msra.mxu0 %v1039
      %1135 = vmatprep.subr.mxu0 0.0
      %1136 = vmatpush1.msra.mxu0 %v1038
      %1137 = vmatprep.subr.mxu0 0.0
      %1138 = vmatpush1.msra.mxu0 %v1037
      %1139 = vmatprep.subr.mxu0 0.0
      %1140 = vmatpush1.msra.mxu0 %v1036
      %1141 = vmatprep.subr.mxu0 0.0
      %1142 = vmatpush1.msra.mxu0 %v1035
      %1143 = vmatprep.subr.mxu0 0.0
      %1144 = vmatpush1.msra.mxu0 %v1034
      %1145 = vmatprep.subr.mxu0 0.0
      %1146 = vmatpush1.msra.mxu0 %v1033
      %1147 = vmatprep.subr.mxu0 0.0
      %1148 = vmatpush1.msra.mxu0 %v1032
      %1149 = vmatprep.subr.mxu0 0.0
      %1150 = vmatpush1.msra.mxu0 %v1031
      %1151 = vmatprep.subr.mxu0 0.0
      %1152 = vmatpush1.msra.mxu0 %v1030
      %1153 = vmatprep.subr.mxu0 0.0
      %1154 = vmatpush1.msra.mxu0 %v1029
      %1155 = vmatprep.subr.mxu0 0.0
      %1156 = vmatpush1.msra.mxu0 %v1028
      %1157 = vmatprep.subr.mxu0 0.0
      %1158 = vmatpush1.msra.mxu0 %v1027
      %1159 = vmatprep.subr.mxu0 0.0
      %1160 = vmatpush1.msra.mxu0 %v1026
      %1161 = vmatprep.subr.mxu0 0.0
      %1162 = vmatpush2.msra.mxu0 0.0
      %1163 = vmatprep.subr.mxu0 0.0
      %1164 = vmatpush2.msra.mxu0 0.0
      %1165 = vmatprep.subr.mxu0 0.0
      %1166 = vmatpush2.msra.mxu0 0.0
      %1167 = vmatprep.subr.mxu0 0.0
      %1168 = vmatpush2.msra.mxu0 0.0
      %1169 = vmatprep.subr.mxu0 0.0
      %1170 = vmatpush2.msra.mxu0 0.0
      %1171 = vmatprep.subr.mxu0 0.0
      %1172 = vmatpush2.msra.mxu0 0.0
      %1173 = vmatprep.subr.mxu0 0.0
      %1174 = vmatpush2.msra.mxu0 0.0
      %1175 = vmatprep.subr.mxu0 0.0
      %1176 = vmatpush2.msra.mxu0 0.0
      %1177 = vmatprep.subr.mxu0 0.0
      %1178 = vmatpush2.msra.mxu0 0.0
      %1179 = vmatprep.subr.mxu0 0.0
      %1180 = vmatpush2.msra.mxu0 0.0
      %1181 = vmatprep.subr.mxu0 0.0
      %1182 = vmatpush2.msra.mxu0 0.0
      %1183 = vmatprep.subr.mxu0 0.0
      %1184 = vmatpush2.msra.mxu0 0.0
      %1185 = vmatprep.subr.mxu0 0.0
      %1186 = vmatpush2.msra.mxu0 0.0
      %1187 = vmatprep.subr.mxu0 0.0
      %1188 = vmatpush2.msra.mxu0 0.0
      %1189 = vmatprep.subr.mxu0 0.0
      %1190 = vmatpush2.msra.mxu0 0.0
      %1191 = vmatprep.subr.mxu0 0.0
      %1192 = vmatpush2.msra.mxu0 0.0
      %1193 = vmatprep.mubr.f32.mxu0 0.0
      %1194 = vmatmul.mubr.f32.gmra.mxu0 %v978
      %v1195 = vpop.f32.mrf.mxu0
      %v1196 = vadd.f32 %v1116, %v1195
      %v1197 = vpop.f32.mrf.mxu0
      %1198 = vmatprep.mubr.f32.mxu0 0.0
      %1199 = vmatmul.mubr.f32.gmra.mxu0 %v983
      %v1200 = vpop.f32.mrf.mxu0
      %v1201 = vadd.f32 %v1121, %v1200
      %v1202 = vpop.f32.mrf.mxu0
      %1203 = vmatprep.mubr.f32.mxu0 0.0
      %1204 = vmatmul.mubr.f32.gmra.mxu0 %v988
      %v1205 = vpop.f32.mrf.mxu0
      %v1206 = vadd.f32 %v1126, %v1205
      %v1207 = vpop.f32.mrf.mxu0
      %1208 = vdwg.mxu0
      %v1209 = vmax.f32 %v1196, 0.0
      %v1210 = vmax.f32 %v1201, 0.0
      %v1211 = vmax.f32 %v1206, 0.0
      %v1212 = vld [vmem:[#allocation3] sm:$0xff]
      %v1213 = vld [vmem:[#allocation3 + $0x8] sm:$0xff]
      %1214 = vxpose.xlu0.b32.start [1/16] %v771, 128
      %1215 = vxpose.xlu0.b32.cont [2/16] %v772, 128
      %1216 = vxpose.xlu0.b32.cont [3/16] %v773, 128
      %1217 = vxpose.xlu0.b32.cont [4/16] 0.0, 128
      %1218 = vxpose.xlu0.b32.cont [5/16] 0.0, 128
      %1219 = vxpose.xlu0.b32.cont [6/16] 0.0, 128
      %1220 = vxpose.xlu0.b32.cont [7/16] 0.0, 128
      %1221 = vxpose.xlu0.b32.cont [8/16] 0.0, 128
      %1222 = vxpose.xlu0.b32.cont [9/16] 0.0, 128
      %1223 = vxpose.xlu0.b32.cont [10/16] 0.0, 128
      %1224 = vxpose.xlu0.b32.cont [11/16] 0.0, 128
      %1225 = vxpose.xlu0.b32.cont [12/16] 0.0, 128
      %1226 = vxpose.xlu0.b32.cont [13/16] 0.0, 128
      %1227 = vxpose.xlu0.b32.cont [14/16] 0.0, 128
      %1228 = vxpose.xlu0.b32.cont [15/16] 0.0, 128
      %1229 = vxpose.xlu0.b32.end [16/16] 0.0, 128
      %v1230 = vpop.trf.xlu0
      %v1231 = vpop.trf.xlu0
      %v1232 = vpop.trf.xlu0
      %v1233 = vpop.trf.xlu0
      %v1234 = vpop.trf.xlu0
      %v1235 = vpop.trf.xlu0
      %v1236 = vpop.trf.xlu0
      %v1237 = vpop.trf.xlu0
      %v1238 = vpop.trf.xlu0
      %v1239 = vpop.trf.xlu0
      %v1240 = vpop.trf.xlu0
      %v1241 = vpop.trf.xlu0
      %v1242 = vpop.trf.xlu0
      %v1243 = vpop.trf.xlu0
      %v1244 = vpop.trf.xlu0
      %v1245 = vpop.trf.xlu0
      %vm1246 = vcmask 195584
      %v1248 = vsel %vm1246, %v1230, 0
      %v1251 = vsel %vm1246, %v1231, 0
      %1253 = vmatprep.subr.mxu0 0.0
      %1254 = vmatpush1.msra.mxu0 0.0
      %1255 = vmatprep.subr.mxu0 0.0
      %1256 = vmatpush1.msra.mxu0 0.0
      %1257 = vmatprep.subr.mxu0 0.0
      %1258 = vmatpush1.msra.mxu0 0.0
      %1259 = vmatprep.subr.mxu0 0.0
      %1260 = vmatpush1.msra.mxu0 0.0
      %1261 = vmatprep.subr.mxu0 0.0
      %1262 = vmatpush1.msra.mxu0 0.0
      %1263 = vmatprep.subr.mxu0 0.0
      %1264 = vmatpush1.msra.mxu0 0.0
      %1265 = vmatprep.subr.mxu0 0.0
      %1266 = vmatpush1.msra.mxu0 0.0
      %1267 = vmatprep.subr.mxu0 0.0
      %1268 = vmatpush1.msra.mxu0 0.0
      %1269 = vmatprep.subr.mxu0 0.0
      %1270 = vmatpush1.msra.mxu0 0.0
      %1271 = vmatprep.subr.mxu0 0.0
      %1272 = vmatpush1.msra.mxu0 0.0
      %1273 = vmatprep.subr.mxu0 0.0
      %1274 = vmatpush1.msra.mxu0 0.0
      %1275 = vmatprep.subr.mxu0 0.0
      %1276 = vmatpush1.msra.mxu0 0.0
      %1277 = vmatprep.subr.mxu0 0.0
      %1278 = vmatpush1.msra.mxu0 0.0
      %1279 = vmatprep.subr.mxu0 0.0
      %1280 = vmatpush1.msra.mxu0 %v1211
      %1281 = vmatprep.subr.mxu0 0.0
      %1282 = vmatpush1.msra.mxu0 %v1210
      %1283 = vmatprep.subr.mxu0 0.0
      %1284 = vmatpush1.msra.mxu0 %v1209
      %1285 = vmatprep.subr.mxu0 0.0
      %1286 = vmatpush2.msra.mxu0 0.0
      %1287 = vmatprep.subr.mxu0 0.0
      %1288 = vmatpush2.msra.mxu0 0.0
      %1289 = vmatprep.subr.mxu0 0.0
      %1290 = vmatpush2.msra.mxu0 0.0
      %1291 = vmatprep.subr.mxu0 0.0
      %1292 = vmatpush2.msra.mxu0 0.0
      %1293 = vmatprep.subr.mxu0 0.0
      %1294 = vmatpush2.msra.mxu0 0.0
      %1295 = vmatprep.subr.mxu0 0.0
      %1296 = vmatpush2.msra.mxu0 0.0
      %1297 = vmatprep.subr.mxu0 0.0
      %1298 = vmatpush2.msra.mxu0 0.0
      %1299 = vmatprep.subr.mxu0 0.0
      %1300 = vmatpush2.msra.mxu0 0.0
      %1301 = vmatprep.subr.mxu0 0.0
      %1302 = vmatpush2.msra.mxu0 0.0
      %1303 = vmatprep.subr.mxu0 0.0
      %1304 = vmatpush2.msra.mxu0 0.0
      %1305 = vmatprep.subr.mxu0 0.0
      %1306 = vmatpush2.msra.mxu0 0.0
      %1307 = vmatprep.subr.mxu0 0.0
      %1308 = vmatpush2.msra.mxu0 0.0
      %1309 = vmatprep.subr.mxu0 0.0
      %1310 = vmatpush2.msra.mxu0 0.0
      %1311 = vmatprep.subr.mxu0 0.0
      %1312 = vmatpush2.msra.mxu0 0.0
      %1313 = vmatprep.subr.mxu0 0.0
      %1314 = vmatpush2.msra.mxu0 0.0
      %1315 = vmatprep.subr.mxu0 0.0
      %1316 = vmatpush2.msra.mxu0 0.0
      %1317 = vmatprep.mubr.f32.mxu0 0.0
      %1318 = vmatmul.mubr.f32.gmra.mxu0 %v1248
      %v1319 = vpop.f32.mrf.mxu0
      %v1320 = vadd.f32 0.0, %v1319
      %v1321 = vpop.f32.mrf.mxu0
      %1322 = vmatprep.mubr.f32.mxu0 0.0
      %1323 = vmatmul.mubr.f32.gmra.mxu0 %v1251
      %v1324 = vpop.f32.mrf.mxu0
      %v1325 = vadd.f32 0.0, %v1324
      %v1326 = vpop.f32.mrf.mxu0
      %1327 = vdwg.mxu0
      %v1328 = vadd.f32 %v1212, %v1320
      %v1329 = vadd.f32 %v1213, %v1325
      %1330 = vst [vmem:[#allocation3] sm:$0xff] %v1328
      %1331 = vst [vmem:[#allocation3 + $0x8] sm:$0xff] %v1329
      // Predicated region
      $region93: #{dynamics_predictor_forward.5} parent=83 // pred_check
        %p1332 = pneg %p722
      $region94: #{dynamics_predictor_forward.5} parent=83 // pred_check_branch
        %1334 = sbr.rel (%p1332) target = $region96
      $region95: #{dynamics_predictor_forward.5} parent=83 // pred_region
        %v1335 = vld [vmem:[%s665] sm:$0xff]
        %v1336 = vld [vmem:[%s665 + $0x8] sm:$0xff]
        %v1337 = vld [vmem:[#allocation3] sm:$0xff]
        %v1338 = vld [vmem:[#allocation3 + $0x8] sm:$0xff]
        %v1339 = vld [vmem:[%s8] sm:$0xff]
        %v1340 = vld [vmem:[%s8 + $0x8] sm:$0xff]
        %v1341 = vld [vmem:[%s8 + $0x10] sm:$0xff]
        %v1342 = vld [vmem:[%s8 + $0x18] sm:$0xff]
        %v1343 = vld [vmem:[%s8 + $0x20] sm:$0xff]
        %v1344 = vld [vmem:[%s8 + $0x28] sm:$0xff]
        %v1345 = vld [vmem:[%s8 + $0x30] sm:$0xff]
        %v1346 = vld [vmem:[%s8 + $0x38] sm:$0xff]
        %v1347 = vld [vmem:[%s8 + $0x40] sm:$0xff]
        %v1348 = vld [vmem:[%s8 + $0x48] sm:$0xff]
        %v1349 = vld [vmem:[%s8 + $0x50] sm:$0xff]
        %v1350 = vld [vmem:[%s8 + $0x58] sm:$0xff]
        %v1351 = vld [vmem:[%s8 + $0x60] sm:$0xff]
        %v1352 = vld [vmem:[%s8 + $0x68] sm:$0xff]
        %v1353 = vld [vmem:[%s8 + $0x70] sm:$0xff]
        %v1354 = vld [vmem:[%s8 + $0x78] sm:$0xff]
        %v1355 = vld [vmem:[%s8 + $0x80] sm:$0xff]
        %v1356 = vld [vmem:[%s8 + $0x88] sm:$0xff]
        %v1357 = vld [vmem:[%s8 + $0x90] sm:$0xff]
        %v1358 = vld [vmem:[%s8 + $0x98] sm:$0xff]
        %v1359 = vld [vmem:[%s8 + $0xa0] sm:$0xff]
        %v1360 = vld [vmem:[%s8 + $0xa8] sm:$0xff]
        %v1361 = vld [vmem:[%s8 + $0xb0] sm:$0xff]
        %v1362 = vld [vmem:[%s8 + $0xb8] sm:$0xff]
        %v1363 = vld [vmem:[%s8 + $0xc0] sm:$0xff]
        %v1364 = vld [vmem:[%s8 + $0xc8] sm:$0xff]
        %v1365 = vld [vmem:[%s8 + $0xd0] sm:$0xff]
        %v1366 = vld [vmem:[%s8 + $0xd8] sm:$0xff]
        %v1367 = vld [vmem:[%s8 + $0xe0] sm:$0xff]
        %v1368 = vld [vmem:[%s8 + $0xe8] sm:$0xff]
        %v1369 = vld [vmem:[%s8 + $0xf0] sm:$0xff]
        %v1370 = vld [vmem:[%s8 + $0xf8] sm:$0xff]
        %v1371 = vld [vmem:[%s9] sm:$0x1]
        %v1373 = vlaneseq
        %v1374 = vshrl.u32 %v1373, 7
        %v1375 = vsub.s32 0, %v1374
        %v1376 = vrot.slane %v1371, %v1375
        %1378 = vmatprep.subr.mxu0 0.0
        %1379 = vmatpush1.msra.mxu0 %v1354
        %1380 = vmatprep.subr.mxu0 0.0
        %1381 = vmatpush1.msra.mxu0 %v1353
        %1382 = vmatprep.subr.mxu0 0.0
        %1383 = vmatpush1.msra.mxu0 %v1352
        %1384 = vmatprep.subr.mxu0 0.0
        %1385 = vmatpush1.msra.mxu0 %v1351
        %1386 = vmatprep.subr.mxu0 0.0
        %1387 = vmatpush1.msra.mxu0 %v1350
        %1388 = vmatprep.subr.mxu0 0.0
        %1389 = vmatpush1.msra.mxu0 %v1349
        %1390 = vmatprep.subr.mxu0 0.0
        %1391 = vmatpush1.msra.mxu0 %v1348
        %1392 = vmatprep.subr.mxu0 0.0
        %1393 = vmatpush1.msra.mxu0 %v1347
        %1394 = vmatprep.subr.mxu0 0.0
        %1395 = vmatpush1.msra.mxu0 %v1346
        %1396 = vmatprep.subr.mxu0 0.0
        %1397 = vmatpush1.msra.mxu0 %v1345
        %1398 = vmatprep.subr.mxu0 0.0
        %1399 = vmatpush1.msra.mxu0 %v1344
        %1400 = vmatprep.subr.mxu0 0.0
        %1401 = vmatpush1.msra.mxu0 %v1343
        %1402 = vmatprep.subr.mxu0 0.0
        %1403 = vmatpush1.msra.mxu0 %v1342
        %1404 = vmatprep.subr.mxu0 0.0
        %1405 = vmatpush1.msra.mxu0 %v1341
        %1406 = vmatprep.subr.mxu0 0.0
        %1407 = vmatpush1.msra.mxu0 %v1340
        %1408 = vmatprep.subr.mxu0 0.0
        %1409 = vmatpush1.msra.mxu0 %v1339
        %1410 = vmatprep.subr.mxu0 0.0
        %1411 = vmatpush2.msra.mxu0 %v1370
        %1412 = vmatprep.subr.mxu0 0.0
        %1413 = vmatpush2.msra.mxu0 %v1369
        %1414 = vmatprep.subr.mxu0 0.0
        %1415 = vmatpush2.msra.mxu0 %v1368
        %1416 = vmatprep.subr.mxu0 0.0
        %1417 = vmatpush2.msra.mxu0 %v1367
        %1418 = vmatprep.subr.mxu0 0.0
        %1419 = vmatpush2.msra.mxu0 %v1366
        %1420 = vmatprep.subr.mxu0 0.0
        %1421 = vmatpush2.msra.mxu0 %v1365
        %1422 = vmatprep.subr.mxu0 0.0
        %1423 = vmatpush2.msra.mxu0 %v1364
        %1424 = vmatprep.subr.mxu0 0.0
        %1425 = vmatpush2.msra.mxu0 %v1363
        %1426 = vmatprep.subr.mxu0 0.0
        %1427 = vmatpush2.msra.mxu0 %v1362
        %1428 = vmatprep.subr.mxu0 0.0
        %1429 = vmatpush2.msra.mxu0 %v1361
        %1430 = vmatprep.subr.mxu0 0.0
        %1431 = vmatpush2.msra.mxu0 %v1360
        %1432 = vmatprep.subr.mxu0 0.0
        %1433 = vmatpush2.msra.mxu0 %v1359
        %1434 = vmatprep.subr.mxu0 0.0
        %1435 = vmatpush2.msra.mxu0 %v1358
        %1436 = vmatprep.subr.mxu0 0.0
        %1437 = vmatpush2.msra.mxu0 %v1357
        %1438 = vmatprep.subr.mxu0 0.0
        %1439 = vmatpush2.msra.mxu0 %v1356
        %1440 = vmatprep.subr.mxu0 0.0
        %1441 = vmatpush2.msra.mxu0 %v1355
        %1442 = vmatprep.mubr.f32.mxu0 %v1337
        %1443 = vmatmul.mubr.f32.gmra.mxu0 %v1335
        %v1444 = vpop.f32.mrf.mxu0
        %v1445 = vadd.f32 %v1376, %v1444
        %v1446 = vpop.f32.mrf.mxu0
        %1447 = vmatprep.mubr.f32.mxu0 %v1338
        %1448 = vmatmul.mubr.f32.gmra.mxu0 %v1336
        %v1449 = vpop.f32.mrf.mxu0
        %v1450 = vadd.f32 %v1376, %v1449
        %v1451 = vpop.f32.mrf.mxu0
        %1452 = vdwg.mxu0
        %v1453 = vld [vmem:[#allocation2] sm:$0xff]
        %v1454 = vld [vmem:[#allocation2 + $0x8] sm:$0xff]
        %v1455 = vadd.f32 %v1445, %v1453
        %v1456 = vadd.f32 %v1450, %v1454
        %v1457 = vmax.f32 %v1455, 0.0
        %v1458 = vmax.f32 %v1456, 0.0
        %1459 = vst [vmem:[#allocation2] sm:$0xff] %v1457
        %1460 = vst [vmem:[#allocation2 + $0x8] sm:$0xff] %v1458
        %p1461 = scmp.eq.s32.totalorder %s33, 1
        // Predicated region
        $region97: #{dynamics_predictor_forward.5} parent=95 // pred_check
          %p1462 = pneg %p1461
        $region98: #{dynamics_predictor_forward.5} parent=95 // pred_check_branch
          %1464 = sbr.rel (%p1462) target = $region100
        $region99: #{dynamics_predictor_forward.5} parent=95 // pred_region
          %v1465 = vld [vmem:[%s10] sm:$0xff]
          %v1466 = vld [vmem:[%s10 + $0x8] sm:$0xff]
          %v1467 = vld [vmem:[%s10 + $0x10] sm:$0xff]
          %v1468 = vld [vmem:[%s10 + $0x18] sm:$0xff]
          %v1469 = vld [vmem:[%s10 + $0x20] sm:$0xff]
          %v1470 = vld [vmem:[%s10 + $0x28] sm:$0xff]
          %v1471 = vld [vmem:[%s10 + $0x30] sm:$0xff]
          %v1472 = vld [vmem:[%s10 + $0x38] sm:$0xff]
          %v1473 = vld [vmem:[%s10 + $0x40] sm:$0xff]
          %v1474 = vld [vmem:[%s10 + $0x48] sm:$0xff]
          %v1475 = vld [vmem:[%s10 + $0x50] sm:$0xff]
          %v1476 = vld [vmem:[%s10 + $0x58] sm:$0xff]
          %v1477 = vld [vmem:[%s10 + $0x60] sm:$0xff]
          %v1478 = vld [vmem:[%s10 + $0x68] sm:$0xff]
          %v1479 = vld [vmem:[%s10 + $0x70] sm:$0xff]
          %v1480 = vld [vmem:[%s10 + $0x78] sm:$0xff]
          %v1481 = vld [vmem:[%s11] sm:$0x1]
          %v1483 = vlaneseq
          %v1484 = vshrl.u32 %v1483, 7
          %v1485 = vsub.s32 0, %v1484
          %v1486 = vrot.slane %v1481, %v1485
          %1488 = vmatprep.subr.mxu0 0.0
          %1489 = vmatpush1.msra.mxu0 %v1480
          %1490 = vmatprep.subr.mxu0 0.0
          %1491 = vmatpush1.msra.mxu0 %v1479
          %1492 = vmatprep.subr.mxu0 0.0
          %1493 = vmatpush1.msra.mxu0 %v1478
          %1494 = vmatprep.subr.mxu0 0.0
          %1495 = vmatpush1.msra.mxu0 %v1477
          %1496 = vmatprep.subr.mxu0 0.0
          %1497 = vmatpush1.msra.mxu0 %v1476
          %1498 = vmatprep.subr.mxu0 0.0
          %1499 = vmatpush1.msra.mxu0 %v1475
          %1500 = vmatprep.subr.mxu0 0.0
          %1501 = vmatpush1.msra.mxu0 %v1474
          %1502 = vmatprep.subr.mxu0 0.0
          %1503 = vmatpush1.msra.mxu0 %v1473
          %1504 = vmatprep.subr.mxu0 0.0
          %1505 = vmatpush1.msra.mxu0 %v1472
          %1506 = vmatprep.subr.mxu0 0.0
          %1507 = vmatpush1.msra.mxu0 %v1471
          %1508 = vmatprep.subr.mxu0 0.0
          %1509 = vmatpush1.msra.mxu0 %v1470
          %1510 = vmatprep.subr.mxu0 0.0
          %1511 = vmatpush1.msra.mxu0 %v1469
          %1512 = vmatprep.subr.mxu0 0.0
          %1513 = vmatpush1.msra.mxu0 %v1468
          %1514 = vmatprep.subr.mxu0 0.0
          %1515 = vmatpush1.msra.mxu0 %v1467
          %1516 = vmatprep.subr.mxu0 0.0
          %1517 = vmatpush1.msra.mxu0 %v1466
          %1518 = vmatprep.subr.mxu0 0.0
          %1519 = vmatpush1.msra.mxu0 %v1465
          %1520 = vmatprep.subr.mxu0 0.0
          %1521 = vmatpush2.msra.mxu0 0.0
          %1522 = vmatprep.subr.mxu0 0.0
          %1523 = vmatpush2.msra.mxu0 0.0
          %1524 = vmatprep.subr.mxu0 0.0
          %1525 = vmatpush2.msra.mxu0 0.0
          %1526 = vmatprep.subr.mxu0 0.0
          %1527 = vmatpush2.msra.mxu0 0.0
          %1528 = vmatprep.subr.mxu0 0.0
          %1529 = vmatpush2.msra.mxu0 0.0
          %1530 = vmatprep.subr.mxu0 0.0
          %1531 = vmatpush2.msra.mxu0 0.0
          %1532 = vmatprep.subr.mxu0 0.0
          %1533 = vmatpush2.msra.mxu0 0.0
          %1534 = vmatprep.subr.mxu0 0.0
          %1535 = vmatpush2.msra.mxu0 0.0
          %1536 = vmatprep.subr.mxu0 0.0
          %1537 = vmatpush2.msra.mxu0 0.0
          %1538 = vmatprep.subr.mxu0 0.0
          %1539 = vmatpush2.msra.mxu0 0.0
          %1540 = vmatprep.subr.mxu0 0.0
          %1541 = vmatpush2.msra.mxu0 0.0
          %1542 = vmatprep.subr.mxu0 0.0
          %1543 = vmatpush2.msra.mxu0 0.0
          %1544 = vmatprep.subr.mxu0 0.0
          %1545 = vmatpush2.msra.mxu0 0.0
          %1546 = vmatprep.subr.mxu0 0.0
          %1547 = vmatpush2.msra.mxu0 0.0
          %1548 = vmatprep.subr.mxu0 0.0
          %1549 = vmatpush2.msra.mxu0 0.0
          %1550 = vmatprep.subr.mxu0 0.0
          %1551 = vmatpush2.msra.mxu0 0.0
          %1552 = vmatprep.mubr.f32.mxu0 0.0
          %1553 = vmatmul.mubr.f32.gmra.mxu0 %v1457
          %v1554 = vpop.f32.mrf.mxu0
          %v1555 = vadd.f32 %v1486, %v1554
          %v1556 = vpop.f32.mrf.mxu0
          %1557 = vmatprep.mubr.f32.mxu0 0.0
          %1558 = vmatmul.mubr.f32.gmra.mxu0 %v1458
          %v1559 = vpop.f32.mrf.mxu0
          %v1560 = vadd.f32 %v1486, %v1559
          %v1561 = vpop.f32.mrf.mxu0
          %1562 = vdwg.mxu0
          %v1563 = vmax.f32 %v1555, 0.0
          %v1564 = vmax.f32 %v1560, 0.0
          %v1565 = vld [vmem:[%s12] sm:$0xff]
          %v1566 = vld [vmem:[%s12 + $0x8] sm:$0xff]
          %v1567 = vld [vmem:[%s12 + $0x10] sm:$0xff]
          %v1568 = vld [vmem:[%s12 + $0x18] sm:$0xff]
          %v1569 = vld [vmem:[%s12 + $0x20] sm:$0xff]
          %v1570 = vld [vmem:[%s12 + $0x28] sm:$0xff]
          %v1571 = vld [vmem:[%s12 + $0x30] sm:$0xff]
          %v1572 = vld [vmem:[%s12 + $0x38] sm:$0xff]
          %v1573 = vld [vmem:[%s12 + $0x40] sm:$0xff]
          %v1574 = vld [vmem:[%s12 + $0x48] sm:$0xff]
          %v1575 = vld [vmem:[%s12 + $0x50] sm:$0xff]
          %v1576 = vld [vmem:[%s12 + $0x58] sm:$0xff]
          %v1577 = vld [vmem:[%s12 + $0x60] sm:$0xff]
          %v1578 = vld [vmem:[%s12 + $0x68] sm:$0xff]
          %v1579 = vld [vmem:[%s12 + $0x70] sm:$0xff]
          %v1580 = vld [vmem:[%s12 + $0x78] sm:$0xff]
          %v1581 = vld [vmem:[%s13] sm:$0x1]
          %v1583 = vlaneseq
          %v1584 = vshrl.u32 %v1583, 7
          %v1585 = vsub.s32 0, %v1584
          %v1586 = vrot.slane %v1581, %v1585
          %1588 = vmatprep.subr.mxu0 0.0
          %1589 = vmatpush1.msra.mxu0 %v1580
          %1590 = vmatprep.subr.mxu0 0.0
          %1591 = vmatpush1.msra.mxu0 %v1579
          %1592 = vmatprep.subr.mxu0 0.0
          %1593 = vmatpush1.msra.mxu0 %v1578
          %1594 = vmatprep.subr.mxu0 0.0
          %1595 = vmatpush1.msra.mxu0 %v1577
          %1596 = vmatprep.subr.mxu0 0.0
          %1597 = vmatpush1.msra.mxu0 %v1576
          %1598 = vmatprep.subr.mxu0 0.0
          %1599 = vmatpush1.msra.mxu0 %v1575
          %1600 = vmatprep.subr.mxu0 0.0
          %1601 = vmatpush1.msra.mxu0 %v1574
          %1602 = vmatprep.subr.mxu0 0.0
          %1603 = vmatpush1.msra.mxu0 %v1573
          %1604 = vmatprep.subr.mxu0 0.0
          %1605 = vmatpush1.msra.mxu0 %v1572
          %1606 = vmatprep.subr.mxu0 0.0
          %1607 = vmatpush1.msra.mxu0 %v1571
          %1608 = vmatprep.subr.mxu0 0.0
          %1609 = vmatpush1.msra.mxu0 %v1570
          %1610 = vmatprep.subr.mxu0 0.0
          %1611 = vmatpush1.msra.mxu0 %v1569
          %1612 = vmatprep.subr.mxu0 0.0
          %1613 = vmatpush1.msra.mxu0 %v1568
          %1614 = vmatprep.subr.mxu0 0.0
          %1615 = vmatpush1.msra.mxu0 %v1567
          %1616 = vmatprep.subr.mxu0 0.0
          %1617 = vmatpush1.msra.mxu0 %v1566
          %1618 = vmatprep.subr.mxu0 0.0
          %1619 = vmatpush1.msra.mxu0 %v1565
          %1620 = vmatprep.subr.mxu0 0.0
          %1621 = vmatpush2.msra.mxu0 0.0
          %1622 = vmatprep.subr.mxu0 0.0
          %1623 = vmatpush2.msra.mxu0 0.0
          %1624 = vmatprep.subr.mxu0 0.0
          %1625 = vmatpush2.msra.mxu0 0.0
          %1626 = vmatprep.subr.mxu0 0.0
          %1627 = vmatpush2.msra.mxu0 0.0
          %1628 = vmatprep.subr.mxu0 0.0
          %1629 = vmatpush2.msra.mxu0 0.0
          %1630 = vmatprep.subr.mxu0 0.0
          %1631 = vmatpush2.msra.mxu0 0.0
          %1632 = vmatprep.subr.mxu0 0.0
          %1633 = vmatpush2.msra.mxu0 0.0
          %1634 = vmatprep.subr.mxu0 0.0
          %1635 = vmatpush2.msra.mxu0 0.0
          %1636 = vmatprep.subr.mxu0 0.0
          %1637 = vmatpush2.msra.mxu0 0.0
          %1638 = vmatprep.subr.mxu0 0.0
          %1639 = vmatpush2.msra.mxu0 0.0
          %1640 = vmatprep.subr.mxu0 0.0
          %1641 = vmatpush2.msra.mxu0 0.0
          %1642 = vmatprep.subr.mxu0 0.0
          %1643 = vmatpush2.msra.mxu0 0.0
          %1644 = vmatprep.subr.mxu0 0.0
          %1645 = vmatpush2.msra.mxu0 0.0
          %1646 = vmatprep.subr.mxu0 0.0
          %1647 = vmatpush2.msra.mxu0 0.0
          %1648 = vmatprep.subr.mxu0 0.0
          %1649 = vmatpush2.msra.mxu0 0.0
          %1650 = vmatprep.subr.mxu0 0.0
          %1651 = vmatpush2.msra.mxu0 0.0
          %1652 = vmatprep.mubr.f32.mxu0 0.0
          %1653 = vmatmul.mubr.f32.gmra.mxu0 %v1563
          %v1654 = vpop.f32.mrf.mxu0
          %v1655 = vadd.f32 %v1586, %v1654
          %v1656 = vpop.f32.mrf.mxu0
          %1657 = vmatprep.mubr.f32.mxu0 0.0
          %1658 = vmatmul.mubr.f32.gmra.mxu0 %v1564
          %v1659 = vpop.f32.mrf.mxu0
          %v1660 = vadd.f32 %v1586, %v1659
          %v1661 = vpop.f32.mrf.mxu0
          %1662 = vdwg.mxu0
          %v1663 = vmax.f32 %v1655, 0.0
          %v1664 = vmax.f32 %v1660, 0.0
          %v1665 = vld [vmem:[%s14] sm:$0xff]
          %v1666 = vld [vmem:[%s14 + $0x8] sm:$0xff]
          %v1667 = vld [vmem:[%s14 + $0x10] sm:$0xff]
          %v1668 = vld [vmem:[%s14 + $0x18] sm:$0xff]
          %v1669 = vld [vmem:[%s14 + $0x20] sm:$0xff]
          %v1670 = vld [vmem:[%s14 + $0x28] sm:$0xff]
          %v1671 = vld [vmem:[%s14 + $0x30] sm:$0xff]
          %v1672 = vld [vmem:[%s14 + $0x38] sm:$0xff]
          %v1673 = vld [vmem:[%s14 + $0x40] sm:$0xff]
          %v1674 = vld [vmem:[%s14 + $0x48] sm:$0xff]
          %v1675 = vld [vmem:[%s14 + $0x50] sm:$0xff]
          %v1676 = vld [vmem:[%s14 + $0x58] sm:$0xff]
          %v1677 = vld [vmem:[%s14 + $0x60] sm:$0xff]
          %v1678 = vld [vmem:[%s14 + $0x68] sm:$0xff]
          %v1679 = vld [vmem:[%s14 + $0x70] sm:$0xff]
          %v1680 = vld [vmem:[%s14 + $0x78] sm:$0xff]
          %v1681 = vld [vmem:[%s15] sm:$0x1]
          %v1683 = vlaneseq
          %v1684 = vshrl.u32 %v1683, 7
          %v1685 = vsub.s32 0, %v1684
          %v1686 = vrot.slane %v1681, %v1685
          %1688 = vmatprep.subr.mxu0 0.0
          %1689 = vmatpush1.msra.mxu0 %v1680
          %1690 = vmatprep.subr.mxu0 0.0
          %1691 = vmatpush1.msra.mxu0 %v1679
          %1692 = vmatprep.subr.mxu0 0.0
          %1693 = vmatpush1.msra.mxu0 %v1678
          %1694 = vmatprep.subr.mxu0 0.0
          %1695 = vmatpush1.msra.mxu0 %v1677
          %1696 = vmatprep.subr.mxu0 0.0
          %1697 = vmatpush1.msra.mxu0 %v1676
          %1698 = vmatprep.subr.mxu0 0.0
          %1699 = vmatpush1.msra.mxu0 %v1675
          %1700 = vmatprep.subr.mxu0 0.0
          %1701 = vmatpush1.msra.mxu0 %v1674
          %1702 = vmatprep.subr.mxu0 0.0
          %1703 = vmatpush1.msra.mxu0 %v1673
          %1704 = vmatprep.subr.mxu0 0.0
          %1705 = vmatpush1.msra.mxu0 %v1672
          %1706 = vmatprep.subr.mxu0 0.0
          %1707 = vmatpush1.msra.mxu0 %v1671
          %1708 = vmatprep.subr.mxu0 0.0
          %1709 = vmatpush1.msra.mxu0 %v1670
          %1710 = vmatprep.subr.mxu0 0.0
          %1711 = vmatpush1.msra.mxu0 %v1669
          %1712 = vmatprep.subr.mxu0 0.0
          %1713 = vmatpush1.msra.mxu0 %v1668
          %1714 = vmatprep.subr.mxu0 0.0
          %1715 = vmatpush1.msra.mxu0 %v1667
          %1716 = vmatprep.subr.mxu0 0.0
          %1717 = vmatpush1.msra.mxu0 %v1666
          %1718 = vmatprep.subr.mxu0 0.0
          %1719 = vmatpush1.msra.mxu0 %v1665
          %1720 = vmatprep.subr.mxu0 0.0
          %1721 = vmatpush2.msra.mxu0 0.0
          %1722 = vmatprep.subr.mxu0 0.0
          %1723 = vmatpush2.msra.mxu0 0.0
          %1724 = vmatprep.subr.mxu0 0.0
          %1725 = vmatpush2.msra.mxu0 0.0
          %1726 = vmatprep.subr.mxu0 0.0
          %1727 = vmatpush2.msra.mxu0 0.0
          %1728 = vmatprep.subr.mxu0 0.0
          %1729 = vmatpush2.msra.mxu0 0.0
          %1730 = vmatprep.subr.mxu0 0.0
          %1731 = vmatpush2.msra.mxu0 0.0
          %1732 = vmatprep.subr.mxu0 0.0
          %1733 = vmatpush2.msra.mxu0 0.0
          %1734 = vmatprep.subr.mxu0 0.0
          %1735 = vmatpush2.msra.mxu0 0.0
          %1736 = vmatprep.subr.mxu0 0.0
          %1737 = vmatpush2.msra.mxu0 0.0
          %1738 = vmatprep.subr.mxu0 0.0
          %1739 = vmatpush2.msra.mxu0 0.0
          %1740 = vmatprep.subr.mxu0 0.0
          %1741 = vmatpush2.msra.mxu0 0.0
          %1742 = vmatprep.subr.mxu0 0.0
          %1743 = vmatpush2.msra.mxu0 0.0
          %1744 = vmatprep.subr.mxu0 0.0
          %1745 = vmatpush2.msra.mxu0 0.0
          %1746 = vmatprep.subr.mxu0 0.0
          %1747 = vmatpush2.msra.mxu0 0.0
          %1748 = vmatprep.subr.mxu0 0.0
          %1749 = vmatpush2.msra.mxu0 0.0
          %1750 = vmatprep.subr.mxu0 0.0
          %1751 = vmatpush2.msra.mxu0 0.0
          %1752 = vmatprep.mubr.f32.mxu0 0.0
          %1753 = vmatmul.mubr.f32.gmra.mxu0 %v1663
          %v1754 = vpop.f32.mrf.mxu0
          %v1755 = vadd.f32 %v1686, %v1754
          %v1756 = vpop.f32.mrf.mxu0
          %1757 = vmatprep.mubr.f32.mxu0 0.0
          %1758 = vmatmul.mubr.f32.gmra.mxu0 %v1664
          %v1759 = vpop.f32.mrf.mxu0
          %v1760 = vadd.f32 %v1686, %v1759
          %v1761 = vpop.f32.mrf.mxu0
          %1762 = vdwg.mxu0
          %vm1763 = vcmask 64512
          %1764 = vst.msk [vmem:[%s720] sm:$0xff] %vm1763, %v1755
          %1765 = vst.msk [vmem:[%s720 + $0x8] sm:$0xff] %vm1763, %v1760
        $region100: #{dynamics_predictor_forward.5} parent=95 // pred_fallthru
          _
      $region96: #{dynamics_predictor_forward.5} parent=83 // pred_fallthru
        _
      %p1766 = scmp.lt.s32.totalorder %s32, 1
      %s1767 = scalar_select %p1766, %s32, 1
      %s1768 = smul.addr %s1767, 2
      %s1769 = smul.addr %s1768, 8
      %s1770 = scalar_lea.vmem %s16, %s1769
      // Predicated region
      $region101: #{dynamics_predictor_forward.5} parent=83 // pred_check
        %p1771 = pneg %p440
      $region102: #{dynamics_predictor_forward.5} parent=83 // pred_check_branch
        %1773 = sbr.rel (%p1771) target = $region104
      $region103: #{dynamics_predictor_forward.5} parent=83 // pred_region
        _
      $region104: #{dynamics_predictor_forward.5} parent=83 // pred_fallthru
        _
    $region84: #{dynamics_predictor_forward.5} parent=5 // pred_fallthru
      _
    %p1774 = scmp.le.s32.totalorder 2, %s22
    // Predicated region
    $region105: #{dynamics_predictor_forward.5} parent=5 // pred_check
      %p1775 = pneg %p1774
    $region106: #{dynamics_predictor_forward.5} parent=5 // pred_check_branch
      %1777 = sbr.rel (%p1775) target = $region108
    $region107: #{dynamics_predictor_forward.5} parent=5 // pred_region
      %s1778 = ssub.s32 %s22, 2
      // Predicated region
      $region109: #{dynamics_predictor_forward.5} parent=107 // pred_check
        %p1779 = pneg %p446
      $region110: #{dynamics_predictor_forward.5} parent=107 // pred_check_branch
        %1781 = sbr.rel (%p1779) target = $region112
      $region111: #{dynamics_predictor_forward.5} parent=107 // pred_region
        %p1782 = scmp.lt.s32.totalorder %s35, 1
        %s1783 = scalar_select %p1782, %s35, 1
        %s1784 = smul.addr %s1783, 2
        %s1785 = smul.addr %s1784, 8
        %s1786 = scalar_lea.vmem %s16, %s1785
      $region112: #{dynamics_predictor_forward.5} parent=107 // pred_fallthru
        _
    $region108: #{dynamics_predictor_forward.5} parent=5 // pred_fallthru
      _
  $region6: #{dynamics_predictor_forward.5} parent=0 // loop_footer
    %s26 = sadd.s32 1, %s22
  $region7: #{dynamics_predictor_forward.5} parent=0 // loop_footer_branch
    %21 = sbr.rel target = $region3
  $region8: #{dynamics_predictor_forward.5} parent=0 // loop_exit
    _

</llo_original>
